<compile_context>
chip_gen: v5e
topology: v5e:2x2
jax: 0.10.0
libtpu: 0.0.40
codegen_flags: <defaults>
</compile_context>

<pallas_src>
import functools

import jax
import jax.numpy as jnp
from jax import lax
from jax.experimental import pallas as pl
from jax.experimental.pallas import tpu as pltpu


def _fold_bn(gamma, beta, mean, var, eps=1e-5):
    scale = gamma / jnp.sqrt(var + eps)
    bias = beta - mean * scale
    return scale, bias


def _round_up(x, m):
    return -(-int(x) // m) * m


def _vmem_capacity_bytes():
    try:
        cap = int(pltpu.get_tpu_info().vmem_capacity_bytes)
        if cap > 0:
            return cap
    except Exception:
        pass
    return 64 << 20                      # conservative default (v7x-sized VMEM)


def _vmem_bytes_estimate(Cin, Ch, dt, HW):
    """Per-step VMEM footprint, counted on (8,128)-padded f32 tiles."""
    lanes = _round_up(HW, 128)
    sub = lambda r: _round_up(max(int(r), 1), 8)
    b = 4
    main_in = Cin * sub(dt) * lanes * b           # (1,Cin,dt,HW) input block
    halo_in = Cin * sub(8) * lanes * b            # (1,Cin,8,HW) halo block (x2)
    out_blk = 2 * Ch * sub(dt) * lanes * b        # (1,2Ch,dt,HW) output block
    slab = (dt + 2) * sub(Ch) * lanes * b         # x1 halo slab scratch
    consts = (sub(Ch) * _round_up(max(Cin, 1), 128) * b   # w1
              + 2 * sub(Ch) * 128 * b                     # b1, b2
              + 27 * sub(Ch) * 128 * b                    # w2 (27,Ch,1)
              + 9 * 8 * lanes * b)                        # masks
    # inputs and output are double-buffered by the Pallas pipeline
    return 2 * (main_in + 2 * halo_in + out_blk) + slab + consts


def _d_tile_candidates(D):
    # dt must divide D and be either D itself or a multiple of 8 so every
    # BlockSpec keeps its last-two dims (8,128)-friendly or full-extent.
    return [d for d in range(D, 0, -1) if D % d == 0 and (d == D or d % 8 == 0)]


def _pick_d_tile(D, Cin, Ch, HW, budget, requested=None):
    cands = _d_tile_candidates(D)
    if requested is not None:
        fit = [d for d in cands if d <= int(requested)]
        return fit[0] if fit else cands[-1]
    for d in cands:
        if _vmem_bytes_estimate(Cin, Ch, d, HW) <= budget:
            return d
    # TODO(synk): ragged last D tile (prime / indivisible D keeps dt == D here).
    return cands[-1]


def _make_ghost_kernel(Cin, Ch, W, HW, dt, nd, lo_row, hi_row, use_mxu,
                       with_halo):
    """Fused 1x1x1 conv+BN+ReLU -> depthwise 3x3x3+BN+ReLU -> channel concat."""

    def kernel(*refs):
        if with_halo:
            (xm_ref, xlo_ref, xhi_ref, w1_ref, b1_ref, w2_ref, b2_ref,
             mk_ref, o_ref, x1p_ref) = refs
        else:
            (xm_ref, w1_ref, b1_ref, w2_ref, b2_ref,
             mk_ref, o_ref, x1p_ref) = refs
            xlo_ref = xhi_ref = None

        di = pl.program_id(1)
        w1 = w1_ref[...]                    # (Ch, Cin)  BN1 scale folded in
        b1 = b1_ref[...]                    # (Ch, 1)

        if use_mxu:
            def pointwise(xs):              # (Cin, HW) -> (Ch, HW) on the MXU
                y = jnp.dot(w1, xs, preferred_element_type=jnp.float32)
                return jnp.maximum(y + b1, 0.0)
        else:                               # tiny Cin*Ch: channel-vectorized VPU FMAs
            def pointwise(xs):
                y = w1[:, 0:1] * xs[0:1, :]
                for c in range(1, Cin):
                    y = y + w1[:, c:c + 1] * xs[c:c + 1, :]
                return jnp.maximum(y + b1, 0.0)

        # ---------------- primary_conv: 1x1x1 conv + BN + ReLU ----------------
        # x1 of the dt main slices feeds both the first output half and the
        # depthwise slab; the two D-halo slices are recomputed (2/dt overhead).
        for s in range(dt):
            y = pointwise(xm_ref[0, :, s, :])        # (Ch, HW), lane-dense
            x1p_ref[s + 1] = y
            o_ref[0, 0:Ch, s, :] = y                 # x1 half of the concat

        if with_halo:
            x1p_ref[0] = pointwise(xlo_ref[0, :, lo_row, :])
            x1p_ref[dt + 1] = pointwise(xhi_ref[0, :, hi_row, :])

            # out-of-volume D planes are the depthwise conv's zero padding
            @pl.when(di == 0)
            def _():
                x1p_ref[0] = jnp.zeros((Ch, HW), jnp.float32)

            @pl.when(di == nd - 1)
            def _():
                x1p_ref[dt + 1] = jnp.zeros((Ch, HW), jnp.float32)
        else:
            x1p_ref[0] = jnp.zeros((Ch, HW), jnp.float32)
            x1p_ref[dt + 1] = jnp.zeros((Ch, HW), jnp.float32)

        # ---------- cheap_operation: depthwise 3x3x3 conv + BN + ReLU ---------
        # Channel-vectorized: slab is (dt+2, Ch, HW); H/W taps are static lane
        # rolls of the fused H*W axis (XLU) with 0/1 masks killing the
        # wrap-around at volume edges; per-channel weights broadcast as (Ch,1).
        x1p = x1p_ref[...]
        acc = None
        for kh in range(3):
            for kw in range(3):
                delta = (kh - 1) * W + (kw - 1)
                shifted = x1p if delta == 0 else pltpu.roll(
                    x1p, shift=(-delta) % HW, axis=2)
                if kh != 1 or kw != 1:
                    shifted = shifted * mk_ref[kh * 3 + kw]      # (1, HW)
                for kd in range(3):
                    term = shifted[kd:kd + dt] * w2_ref[kd * 9 + kh * 3 + kw]
                    acc = term if acc is None else acc + term
        b2 = b2_ref[...]                    # (Ch, 1)
        for s in range(dt):
            o_ref[0, Ch:2 * Ch, s, :] = jnp.maximum(acc[s] + b2, 0.0)

    return kernel


def ghost_module_forward(x_ncdhw, params, *, d_tile=None):
    """x: (N, Cin, D, H, W) f32 -> concat([x1, x2], axis=1): (N, 2*Ch, D, H, W)."""
    N, Cin, D, H, W = x_ncdhw.shape
    HW = H * W
    Ch = params["w1"].shape[0]

    # Fold inference-mode BatchNorm into the conv weights / per-channel bias.
    s1, b1 = _fold_bn(params["bn1_gamma"], params["bn1_beta"],
                      params["bn1_mean"], params["bn1_var"])
    s2, b2 = _fold_bn(params["bn2_gamma"], params["bn2_beta"],
                      params["bn2_mean"], params["bn2_var"])
    w1_eff = (params["w1"].reshape(Ch, Cin) * s1[:, None]).astype(jnp.float32)
    w2_eff = (params["w2"].reshape(Ch, 27) * s2[:, None]).astype(jnp.float32)
    w2v = w2_eff.T.reshape(27, Ch, 1)        # per-tap (Ch, 1) broadcast weights
    b1c = b1.astype(jnp.float32).reshape(Ch, 1)
    b2c = b2.astype(jnp.float32).reshape(Ch, 1)

    # 0/1 masks that kill the wrap-around of lane rolls at H/W volume edges.
    hh = jnp.arange(HW, dtype=jnp.int32) // W
    ww = jnp.arange(HW, dtype=jnp.int32) % W
    rows = []
    for kh in range(3):
        for kw in range(3):
            dh, dw = kh - 1, kw - 1
            rows.append((hh + dh >= 0) & (hh + dh < H) &
                        (ww + dw >= 0) & (ww + dw < W))
    masks = jnp.stack(rows).astype(jnp.float32).reshape(9, 1, HW)

    # Generation-aware D tile / VMEM cap (v5e/v6e: 128 MiB, v7x: 64 MiB).
    cap = _vmem_capacity_bytes()
    dt = _pick_d_tile(D, Cin, Ch, HW, budget=int(0.5 * cap), requested=d_tile)
    nd = D // dt
    with_halo = nd > 1
    est = _vmem_bytes_estimate(Cin, Ch, dt, HW)
    vmem_limit = int(min(max(2 * est, 16 << 20), int(0.75 * cap)))
    vmem_limit = int(max(vmem_limit, est + (2 << 20)))

    use_mxu = Cin * Ch > 64                  # tiny pointwise conv stays on the VPU

    # NCDHW with H*W fused onto the lane axis (contiguous -> free reshape).
    x2d = x_ncdhw.reshape(N, Cin, D, HW).astype(jnp.float32)

    # D-halo rows are fetched as aligned 8-deep blocks (clamped index_map);
    # the row inside the block is static because dt % 8 == 0 whenever nd > 1.
    if with_halo:
        m8 = dt // 8
        lo_map = lambda n, di: (n, 0, jnp.maximum(di * m8 - 1, 0), 0)
        hi_map = lambda n, di: (n, 0, jnp.minimum((di + 1) * m8, D // 8 - 1), 0)
        lo_row, hi_row = 7, 0
        halo_specs = [pl.BlockSpec((1, Cin, 8, HW), lo_map),
                      pl.BlockSpec((1, Cin, 8, HW), hi_map)]
        halo_args = [x2d, x2d]
    else:
        lo_row = hi_row = 0
        halo_specs, halo_args = [], []

    const_spec = lambda shp: pl.BlockSpec(shp, lambda n, di: (0,) * len(shp))
    in_specs = ([pl.BlockSpec((1, Cin, dt, HW), lambda n, di: (n, 0, di, 0))]
                + halo_specs
                + [const_spec((Ch, Cin)), const_spec((Ch, 1)),
                   const_spec((27, Ch, 1)), const_spec((Ch, 1)),
                   const_spec((9, 1, HW))])
    args = [x2d] + halo_args + [w1_eff, b1c, w2v, b2c, masks]

    kernel = _make_ghost_kernel(Cin, Ch, W, HW, dt, nd, lo_row, hi_row,
                                use_mxu, with_halo)

    out = pl.pallas_call(
        kernel,
        out_shape=jax.ShapeDtypeStruct((N, 2 * Ch, D, HW), jnp.float32),
        grid=(N, nd),
        in_specs=in_specs,
        out_specs=pl.BlockSpec((1, 2 * Ch, dt, HW),
                               lambda n, di: (n, 0, di, 0)),
        scratch_shapes=[pltpu.VMEM((dt + 2, Ch, HW), jnp.float32)],
        compiler_params=pltpu.CompilerParams(
            # split a v7x megacore across samples, not d-tiles
            dimension_semantics=("parallel", "arbitrary"),
            vmem_limit_bytes=vmem_limit),
    )(*args)

    return out.reshape(N, 2 * Ch, D, H, W)


# ---------------------------------------------------------------------------
# Pure-JAX reference (correctness checking only)
# ---------------------------------------------------------------------------
def ghost_module_reference(x, params):
    Ch = params["w1"].shape[0]
    Cin = x.shape[1]
    s1, b1 = _fold_bn(params["bn1_gamma"], params["bn1_beta"],
                      params["bn1_mean"], params["bn1_var"])
    s2, b2 = _fold_bn(params["bn2_gamma"], params["bn2_beta"],
                      params["bn2_mean"], params["bn2_var"])
    y1 = jnp.einsum("ncdhw,oc->nodhw", x, params["w1"].reshape(Ch, Cin))
    y1 = y1 * s1[None, :, None, None, None] + b1[None, :, None, None, None]
    x1 = jnp.maximum(y1, 0.0)
    dn = lax.conv_dimension_numbers(x1.shape, params["w2"].shape,
                                    ("NCDHW", "OIDHW", "NCDHW"))
    y2 = lax.conv_general_dilated(
        x1, params["w2"], window_strides=(1, 1, 1),
        padding=((1, 1), (1, 1), (1, 1)),
        dimension_numbers=dn, feature_group_count=Ch)
    y2 = y2 * s2[None, :, None, None, None] + b2[None, :, None, None, None]
    x2 = jnp.maximum(y2, 0.0)
    return jnp.concatenate([x1, x2], axis=1)


# ---------------------------------------------------------------------------
if __name__ == "__main__":
    key = jax.random.PRNGKey(0)
    N, Cin, D, H, W = 2, 4, 16, 8, 8
    out_channels = 8
    Ch = out_channels // 2

    keys = jax.random.split(key, 8)
    x = jax.random.normal(keys[0], (N, Cin, D, H, W), dtype=jnp.float32)

    params = {
        # Conv3d(in_channels, Ch, kernel_size=1, bias=False): weight (Ch, Cin)
        "w1": jax.random.normal(keys[1], (Ch, Cin), dtype=jnp.float32) * 0.2,
        "bn1_gamma": 1.0 + 0.1 * jax.random.normal(keys[2], (Ch,), dtype=jnp.float32),
        "bn1_beta": 0.1 * jax.random.normal(keys[3], (Ch,), dtype=jnp.float32),
        "bn1_mean": 0.05 * jnp.arange(Ch, dtype=jnp.float32),
        "bn1_var": 1.0 + 0.02 * jnp.arange(Ch, dtype=jnp.float32),
        # Conv3d(Ch, Ch, kernel_size=3, groups=Ch, bias=False): weight (Ch,1,3,3,3)
        "w2": jax.random.normal(keys[4], (Ch, 1, 3, 3, 3), dtype=jnp.float32) * 0.2,
        "bn2_gamma": 1.0 + 0.1 * jax.random.normal(keys[5], (Ch,), dtype=jnp.float32),
        "bn2_beta": 0.1 * jax.random.normal(keys[6], (Ch,), dtype=jnp.float32),
        "bn2_mean": 0.03 * jnp.arange(Ch, dtype=jnp.float32),
        "bn2_var": 1.0 + 0.01 * jnp.arange(Ch, dtype=jnp.float32),
    }

    ref = ghost_module_reference(x, params)

    # Multi-tile path (nd = 2): exercises halo recompute + boundary zeroing.
    fwd_tiled = jax.jit(functools.partial(ghost_module_forward, d_tile=8))
    out = jax.block_until_ready(fwd_tiled(x, params))
    assert out.shape == (N, out_channels, D, H, W), out.shape
    err = float(jnp.abs(out - ref).max())
    assert jnp.allclose(out, ref, atol=1e-4, rtol=1e-4), err

    # Default path (dt = D, single tile per sample, no halo inputs).
    out2 = jax.block_until_ready(jax.jit(ghost_module_forward)(x, params))
    err2 = float(jnp.abs(out2 - ref).max())
    assert jnp.allclose(out2, ref, atol=1e-4, rtol=1e-4), err2

    print("KERNEL_OK")
</pallas_src>

<mosaic_0001>
module attributes {stable_mosaic.version = 11 : i64} {
  func.func @kernel(%arg0: i32, %arg1: i32, %arg2: memref<1x4x8x64xf32, #tpu.memory_space<vmem>>, %arg3: memref<1x4x8x64xf32, #tpu.memory_space<vmem>>, %arg4: memref<1x4x8x64xf32, #tpu.memory_space<vmem>>, %arg5: memref<4x4xf32, #tpu.memory_space<vmem>>, %arg6: memref<4x1xf32, #tpu.memory_space<vmem>>, %arg7: memref<27x4x1xf32, #tpu.memory_space<vmem>>, %arg8: memref<4x1xf32, #tpu.memory_space<vmem>>, %arg9: memref<9x1x64xf32, #tpu.memory_space<vmem>>, %arg10: memref<1x8x8x64xf32, #tpu.memory_space<vmem>>, %arg11: memref<10x4x64xf32, #tpu.memory_space<vmem>>) attributes {dimension_semantics = [#tpu.dimension_semantics<parallel>, #tpu.dimension_semantics<arbitrary>], iteration_bounds = array<i64: 2, 2>, scalar_prefetch = 0 : i64, scratch_operands = 1 : i64, tpu.core_type = #tpu.core_type<tc>, window_params = [{transform_indices = @transform_0, window_bounds = array<i64: 1, 4, 8, 64>}, {transform_indices = @transform_1, window_bounds = array<i64: 1, 4, 8, 64>}, {transform_indices = @transform_2, window_bounds = array<i64: 1, 4, 8, 64>}, {pipeline_mode = #tpu.pipeline_mode<synchronous>, transform_indices = @transform_3, window_bounds = array<i64: 4, 4>}, {pipeline_mode = #tpu.pipeline_mode<synchronous>, transform_indices = @transform_4, window_bounds = array<i64: 4, 1>}, {pipeline_mode = #tpu.pipeline_mode<synchronous>, transform_indices = @transform_5, window_bounds = array<i64: 27, 4, 1>}, {pipeline_mode = #tpu.pipeline_mode<synchronous>, transform_indices = @transform_6, window_bounds = array<i64: 4, 1>}, {pipeline_mode = #tpu.pipeline_mode<synchronous>, transform_indices = @transform_7, window_bounds = array<i64: 9, 1, 64>}, {transform_indices = @transform_8, window_bounds = array<i64: 1, 8, 8, 64>}]} {
    %c0 = arith.constant 0 : index
    %c0_0 = arith.constant 0 : index
    %0 = vector.load %arg5[%c0, %c0_0] : memref<4x4xf32, #tpu.memory_space<vmem>>, vector<4x4xf32>
    %c0_1 = arith.constant 0 : index
    %c0_2 = arith.constant 0 : index
    %1 = vector.load %arg6[%c0_1, %c0_2] : memref<4x1xf32, #tpu.memory_space<vmem>>, vector<4x1xf32>
    %c0_3 = arith.constant 0 : index
    %c0_4 = arith.constant 0 : index
    %c0_5 = arith.constant 0 : index
    %c0_6 = arith.constant 0 : index
    %2 = vector.load %arg2[%c0_3, %c0_4, %c0_5, %c0_6] : memref<1x4x8x64xf32, #tpu.memory_space<vmem>>, vector<1x4x1x64xf32>
    %3 = vector.shape_cast %2 : vector<1x4x1x64xf32> to vector<4x64xf32>
    %4 = vector.extract_strided_slice %0 {offsets = [0, 0], sizes = [4, 1], strides = [1, 1]} : vector<4x4xf32> to vector<4x1xf32>
    %5 = vector.extract_strided_slice %3 {offsets = [0, 0], sizes = [1, 64], strides = [1, 1]} : vector<4x64xf32> to vector<1x64xf32>
    %6 = vector.broadcast %4 : vector<4x1xf32> to vector<4x64xf32>
    %7 = vector.broadcast %5 : vector<1x64xf32> to vector<4x64xf32>
    %8 = arith.mulf %6, %7 : vector<4x64xf32>
    %9 = vector.extract_strided_slice %0 {offsets = [0, 1], sizes = [4, 1], strides = [1, 1]} : vector<4x4xf32> to vector<4x1xf32>
    %10 = vector.extract_strided_slice %3 {offsets = [1, 0], sizes = [1, 64], strides = [1, 1]} : vector<4x64xf32> to vector<1x64xf32>
    %11 = vector.broadcast %9 : vector<4x1xf32> to vector<4x64xf32>
    %12 = vector.broadcast %10 : vector<1x64xf32> to vector<4x64xf32>
    %13 = arith.mulf %11, %12 : vector<4x64xf32>
    %14 = arith.addf %8, %13 : vector<4x64xf32>
    %15 = vector.extract_strided_slice %0 {offsets = [0, 2], sizes = [4, 1], strides = [1, 1]} : vector<4x4xf32> to vector<4x1xf32>
    %16 = vector.extract_strided_slice %3 {offsets = [2, 0], sizes = [1, 64], strides = [1, 1]} : vector<4x64xf32> to vector<1x64xf32>
    %17 = vector.broadcast %15 : vector<4x1xf32> to vector<4x64xf32>
    %18 = vector.broadcast %16 : vector<1x64xf32> to vector<4x64xf32>
    %19 = arith.mulf %17, %18 : vector<4x64xf32>
    %20 = arith.addf %14, %19 : vector<4x64xf32>
    %21 = vector.extract_strided_slice %0 {offsets = [0, 3], sizes = [4, 1], strides = [1, 1]} : vector<4x4xf32> to vector<4x1xf32>
    %22 = vector.extract_strided_slice %3 {offsets = [3, 0], sizes = [1, 64], strides = [1, 1]} : vector<4x64xf32> to vector<1x64xf32>
    %23 = vector.broadcast %21 : vector<4x1xf32> to vector<4x64xf32>
    %24 = vector.broadcast %22 : vector<1x64xf32> to vector<4x64xf32>
    %25 = arith.mulf %23, %24 : vector<4x64xf32>
    %26 = arith.addf %20, %25 : vector<4x64xf32>
    %27 = vector.broadcast %1 : vector<4x1xf32> to vector<4x64xf32>
    %28 = arith.addf %26, %27 : vector<4x64xf32>
    %cst = arith.constant 0.000000e+00 : f32
    %29 = vector.broadcast %cst : f32 to vector<4x64xf32>
    %30 = arith.maximumf %28, %29 : vector<4x64xf32>
    %c1 = arith.constant 1 : index
    %c0_7 = arith.constant 0 : index
    %c0_8 = arith.constant 0 : index
    %31 = vector.load %arg11[%c1, %c0_7, %c0_8] : memref<10x4x64xf32, #tpu.memory_space<vmem>>, vector<1x4x64xf32>
    %32 = vector.shape_cast %31 : vector<1x4x64xf32> to vector<4x64xf32>
    %33 = vector.shape_cast %30 : vector<4x64xf32> to vector<1x4x64xf32>
    tpu.vector_store %arg11[%c1, %c0_7, %c0_8], %33 {strides = array<i32>} : memref<10x4x64xf32, #tpu.memory_space<vmem>>, vector<1x4x64xf32>,
    %c0_9 = arith.constant 0 : index
    %c0_10 = arith.constant 0 : index
    %c0_11 = arith.constant 0 : index
    %c0_12 = arith.constant 0 : index
    %34 = vector.load %arg10[%c0_9, %c0_10, %c0_11, %c0_12] : memref<1x8x8x64xf32, #tpu.memory_space<vmem>>, vector<1x4x1x64xf32>
    %35 = vector.shape_cast %34 : vector<1x4x1x64xf32> to vector<4x64xf32>
    %36 = vector.shape_cast %30 : vector<4x64xf32> to vector<1x4x1x64xf32>
    tpu.vector_store %arg10[%c0_9, %c0_10, %c0_11, %c0_12], %36 {strides = array<i32>} : memref<1x8x8x64xf32, #tpu.memory_space<vmem>>, vector<1x4x1x64xf32>,
    %c0_13 = arith.constant 0 : index
    %c0_14 = arith.constant 0 : index
    %c1_15 = arith.constant 1 : index
    %c0_16 = arith.constant 0 : index
    %37 = vector.load %arg2[%c0_13, %c0_14, %c1_15, %c0_16] : memref<1x4x8x64xf32, #tpu.memory_space<vmem>>, vector<1x4x1x64xf32>
    %38 = vector.shape_cast %37 : vector<1x4x1x64xf32> to vector<4x64xf32>
    %39 = vector.extract_strided_slice %0 {offsets = [0, 0], sizes = [4, 1], strides = [1, 1]} : vector<4x4xf32> to vector<4x1xf32>
    %40 = vector.extract_strided_slice %38 {offsets = [0, 0], sizes = [1, 64], strides = [1, 1]} : vector<4x64xf32> to vector<1x64xf32>
    %41 = vector.broadcast %39 : vector<4x1xf32> to vector<4x64xf32>
    %42 = vector.broadcast %40 : vector<1x64xf32> to vector<4x64xf32>
    %43 = arith.mulf %41, %42 : vector<4x64xf32>
    %44 = vector.extract_strided_slice %0 {offsets = [0, 1], sizes = [4, 1], strides = [1, 1]} : vector<4x4xf32> to vector<4x1xf32>
    %45 = vector.extract_strided_slice %38 {offsets = [1, 0], sizes = [1, 64], strides = [1, 1]} : vector<4x64xf32> to vector<1x64xf32>
    %46 = vector.broadcast %44 : vector<4x1xf32> to vector<4x64xf32>
    %47 = vector.broadcast %45 : vector<1x64xf32> to vector<4x64xf32>
    %48 = arith.mulf %46, %47 : vector<4x64xf32>
    %49 = arith.addf %43, %48 : vector<4x64xf32>
    %50 = vector.extract_strided_slice %0 {offsets = [0, 2], sizes = [4, 1], strides = [1, 1]} : vector<4x4xf32> to vector<4x1xf32>
    %51 = vector.extract_strided_slice %38 {offsets = [2, 0], sizes = [1, 64], strides = [1, 1]} : vector<4x64xf32> to vector<1x64xf32>
    %52 = vector.broadcast %50 : vector<4x1xf32> to vector<4x64xf32>
    %53 = vector.broadcast %51 : vector<1x64xf32> to vector<4x64xf32>
    %54 = arith.mulf %52, %53 : vector<4x64xf32>
    %55 = arith.addf %49, %54 : vector<4x64xf32>
    %56 = vector.extract_strided_slice %0 {offsets = [0, 3], sizes = [4, 1], strides = [1, 1]} : vector<4x4xf32> to vector<4x1xf32>
    %57 = vector.extract_strided_slice %38 {offsets = [3, 0], sizes = [1, 64], strides = [1, 1]} : vector<4x64xf32> to vector<1x64xf32>
    %58 = vector.broadcast %56 : vector<4x1xf32> to vector<4x64xf32>
    %59 = vector.broadcast %57 : vector<1x64xf32> to vector<4x64xf32>
    %60 = arith.mulf %58, %59 : vector<4x64xf32>
    %61 = arith.addf %55, %60 : vector<4x64xf32>
    %62 = vector.broadcast %1 : vector<4x1xf32> to vector<4x64xf32>
    %63 = arith.addf %61, %62 : vector<4x64xf32>
    %cst_17 = arith.constant 0.000000e+00 : f32
    %64 = vector.broadcast %cst_17 : f32 to vector<4x64xf32>
    %65 = arith.maximumf %63, %64 : vector<4x64xf32>
    %c2 = arith.constant 2 : index
    %c0_18 = arith.constant 0 : index
    %c0_19 = arith.constant 0 : index
    %66 = vector.load %arg11[%c2, %c0_18, %c0_19] : memref<10x4x64xf32, #tpu.memory_space<vmem>>, vector<1x4x64xf32>
    %67 = vector.shape_cast %66 : vector<1x4x64xf32> to vector<4x64xf32>
    %68 = vector.shape_cast %65 : vector<4x64xf32> to vector<1x4x64xf32>
    tpu.vector_store %arg11[%c2, %c0_18, %c0_19], %68 {strides = array<i32>} : memref<10x4x64xf32, #tpu.memory_space<vmem>>, vector<1x4x64xf32>,
    %c0_20 = arith.constant 0 : index
    %c0_21 = arith.constant 0 : index
    %c1_22 = arith.constant 1 : index
    %c0_23 = arith.constant 0 : index
    %69 = vector.load %arg10[%c0_20, %c0_21, %c1_22, %c0_23] : memref<1x8x8x64xf32, #tpu.memory_space<vmem>>, vector<1x4x1x64xf32>
    %70 = vector.shape_cast %69 : vector<1x4x1x64xf32> to vector<4x64xf32>
    %71 = vector.shape_cast %65 : vector<4x64xf32> to vector<1x4x1x64xf32>
    tpu.vector_store %arg10[%c0_20, %c0_21, %c1_22, %c0_23], %71 {strides = array<i32>} : memref<1x8x8x64xf32, #tpu.memory_space<vmem>>, vector<1x4x1x64xf32>,
    %c0_24 = arith.constant 0 : index
    %c0_25 = arith.constant 0 : index
    %c2_26 = arith.constant 2 : index
    %c0_27 = arith.constant 0 : index
    %72 = vector.load %arg2[%c0_24, %c0_25, %c2_26, %c0_27] : memref<1x4x8x64xf32, #tpu.memory_space<vmem>>, vector<1x4x1x64xf32>
    %73 = vector.shape_cast %72 : vector<1x4x1x64xf32> to vector<4x64xf32>
    %74 = vector.extract_strided_slice %0 {offsets = [0, 0], sizes = [4, 1], strides = [1, 1]} : vector<4x4xf32> to vector<4x1xf32>
    %75 = vector.extract_strided_slice %73 {offsets = [0, 0], sizes = [1, 64], strides = [1, 1]} : vector<4x64xf32> to vector<1x64xf32>
    %76 = vector.broadcast %74 : vector<4x1xf32> to vector<4x64xf32>
    %77 = vector.broadcast %75 : vector<1x64xf32> to vector<4x64xf32>
    %78 = arith.mulf %76, %77 : vector<4x64xf32>
    %79 = vector.extract_strided_slice %0 {offsets = [0, 1], sizes = [4, 1], strides = [1, 1]} : vector<4x4xf32> to vector<4x1xf32>
    %80 = vector.extract_strided_slice %73 {offsets = [1, 0], sizes = [1, 64], strides = [1, 1]} : vector<4x64xf32> to vector<1x64xf32>
    %81 = vector.broadcast %79 : vector<4x1xf32> to vector<4x64xf32>
    %82 = vector.broadcast %80 : vector<1x64xf32> to vector<4x64xf32>
    %83 = arith.mulf %81, %82 : vector<4x64xf32>
    %84 = arith.addf %78, %83 : vector<4x64xf32>
    %85 = vector.extract_strided_slice %0 {offsets = [0, 2], sizes = [4, 1], strides = [1, 1]} : vector<4x4xf32> to vector<4x1xf32>
    %86 = vector.extract_strided_slice %73 {offsets = [2, 0], sizes = [1, 64], strides = [1, 1]} : vector<4x64xf32> to vector<1x64xf32>
    %87 = vector.broadcast %85 : vector<4x1xf32> to vector<4x64xf32>
    %88 = vector.broadcast %86 : vector<1x64xf32> to vector<4x64xf32>
    %89 = arith.mulf %87, %88 : vector<4x64xf32>
    %90 = arith.addf %84, %89 : vector<4x64xf32>
    %91 = vector.extract_strided_slice %0 {offsets = [0, 3], sizes = [4, 1], strides = [1, 1]} : vector<4x4xf32> to vector<4x1xf32>
    %92 = vector.extract_strided_slice %73 {offsets = [3, 0], sizes = [1, 64], strides = [1, 1]} : vector<4x64xf32> to vector<1x64xf32>
    %93 = vector.broadcast %91 : vector<4x1xf32> to vector<4x64xf32>
    %94 = vector.broadcast %92 : vector<1x64xf32> to vector<4x64xf32>
    %95 = arith.mulf %93, %94 : vector<4x64xf32>
    %96 = arith.addf %90, %95 : vector<4x64xf32>
    %97 = vector.broadcast %1 : vector<4x1xf32> to vector<4x64xf32>
    %98 = arith.addf %96, %97 : vector<4x64xf32>
    %cst_28 = arith.constant 0.000000e+00 : f32
    %99 = vector.broadcast %cst_28 : f32 to vector<4x64xf32>
    %100 = arith.maximumf %98, %99 : vector<4x64xf32>
    %c3 = arith.constant 3 : index
    %c0_29 = arith.constant 0 : index
    %c0_30 = arith.constant 0 : index
    %101 = vector.load %arg11[%c3, %c0_29, %c0_30] : memref<10x4x64xf32, #tpu.memory_space<vmem>>, vector<1x4x64xf32>
    %102 = vector.shape_cast %101 : vector<1x4x64xf32> to vector<4x64xf32>
    %103 = vector.shape_cast %100 : vector<4x64xf32> to vector<1x4x64xf32>
    tpu.vector_store %arg11[%c3, %c0_29, %c0_30], %103 {strides = array<i32>} : memref<10x4x64xf32, #tpu.memory_space<vmem>>, vector<1x4x64xf32>,
    %c0_31 = arith.constant 0 : index
    %c0_32 = arith.constant 0 : index
    %c2_33 = arith.constant 2 : index
    %c0_34 = arith.constant 0 : index
    %104 = vector.load %arg10[%c0_31, %c0_32, %c2_33, %c0_34] : memref<1x8x8x64xf32, #tpu.memory_space<vmem>>, vector<1x4x1x64xf32>
    %105 = vector.shape_cast %104 : vector<1x4x1x64xf32> to vector<4x64xf32>
    %106 = vector.shape_cast %100 : vector<4x64xf32> to vector<1x4x1x64xf32>
    tpu.vector_store %arg10[%c0_31, %c0_32, %c2_33, %c0_34], %106 {strides = array<i32>} : memref<1x8x8x64xf32, #tpu.memory_space<vmem>>, vector<1x4x1x64xf32>,
    %c0_35 = arith.constant 0 : index
    %c0_36 = arith.constant 0 : index
    %c3_37 = arith.constant 3 : index
    %c0_38 = arith.constant 0 : index
    %107 = vector.load %arg2[%c0_35, %c0_36, %c3_37, %c0_38] : memref<1x4x8x64xf32, #tpu.memory_space<vmem>>, vector<1x4x1x64xf32>
    %108 = vector.shape_cast %107 : vector<1x4x1x64xf32> to vector<4x64xf32>
    %109 = vector.extract_strided_slice %0 {offsets = [0, 0], sizes = [4, 1], strides = [1, 1]} : vector<4x4xf32> to vector<4x1xf32>
    %110 = vector.extract_strided_slice %108 {offsets = [0, 0], sizes = [1, 64], strides = [1, 1]} : vector<4x64xf32> to vector<1x64xf32>
    %111 = vector.broadcast %109 : vector<4x1xf32> to vector<4x64xf32>
    %112 = vector.broadcast %110 : vector<1x64xf32> to vector<4x64xf32>
    %113 = arith.mulf %111, %112 : vector<4x64xf32>
    %114 = vector.extract_strided_slice %0 {offsets = [0, 1], sizes = [4, 1], strides = [1, 1]} : vector<4x4xf32> to vector<4x1xf32>
    %115 = vector.extract_strided_slice %108 {offsets = [1, 0], sizes = [1, 64], strides = [1, 1]} : vector<4x64xf32> to vector<1x64xf32>
    %116 = vector.broadcast %114 : vector<4x1xf32> to vector<4x64xf32>
    %117 = vector.broadcast %115 : vector<1x64xf32> to vector<4x64xf32>
    %118 = arith.mulf %116, %117 : vector<4x64xf32>
    %119 = arith.addf %113, %118 : vector<4x64xf32>
    %120 = vector.extract_strided_slice %0 {offsets = [0, 2], sizes = [4, 1], strides = [1, 1]} : vector<4x4xf32> to vector<4x1xf32>
    %121 = vector.extract_strided_slice %108 {offsets = [2, 0], sizes = [1, 64], strides = [1, 1]} : vector<4x64xf32> to vector<1x64xf32>
    %122 = vector.broadcast %120 : vector<4x1xf32> to vector<4x64xf32>
    %123 = vector.broadcast %121 : vector<1x64xf32> to vector<4x64xf32>
    %124 = arith.mulf %122, %123 : vector<4x64xf32>
    %125 = arith.addf %119, %124 : vector<4x64xf32>
    %126 = vector.extract_strided_slice %0 {offsets = [0, 3], sizes = [4, 1], strides = [1, 1]} : vector<4x4xf32> to vector<4x1xf32>
    %127 = vector.extract_strided_slice %108 {offsets = [3, 0], sizes = [1, 64], strides = [1, 1]} : vector<4x64xf32> to vector<1x64xf32>
    %128 = vector.broadcast %126 : vector<4x1xf32> to vector<4x64xf32>
    %129 = vector.broadcast %127 : vector<1x64xf32> to vector<4x64xf32>
    %130 = arith.mulf %128, %129 : vector<4x64xf32>
    %131 = arith.addf %125, %130 : vector<4x64xf32>
    %132 = vector.broadcast %1 : vector<4x1xf32> to vector<4x64xf32>
    %133 = arith.addf %131, %132 : vector<4x64xf32>
    %cst_39 = arith.constant 0.000000e+00 : f32
    %134 = vector.broadcast %cst_39 : f32 to vector<4x64xf32>
    %135 = arith.maximumf %133, %134 : vector<4x64xf32>
    %c4 = arith.constant 4 : index
    %c0_40 = arith.constant 0 : index
    %c0_41 = arith.constant 0 : index
    %136 = vector.load %arg11[%c4, %c0_40, %c0_41] : memref<10x4x64xf32, #tpu.memory_space<vmem>>, vector<1x4x64xf32>
    %137 = vector.shape_cast %136 : vector<1x4x64xf32> to vector<4x64xf32>
    %138 = vector.shape_cast %135 : vector<4x64xf32> to vector<1x4x64xf32>
    tpu.vector_store %arg11[%c4, %c0_40, %c0_41], %138 {strides = array<i32>} : memref<10x4x64xf32, #tpu.memory_space<vmem>>, vector<1x4x64xf32>,
    %c0_42 = arith.constant 0 : index
    %c0_43 = arith.constant 0 : index
    %c3_44 = arith.constant 3 : index
    %c0_45 = arith.constant 0 : index
    %139 = vector.load %arg10[%c0_42, %c0_43, %c3_44, %c0_45] : memref<1x8x8x64xf32, #tpu.memory_space<vmem>>, vector<1x4x1x64xf32>
    %140 = vector.shape_cast %139 : vector<1x4x1x64xf32> to vector<4x64xf32>
    %141 = vector.shape_cast %135 : vector<4x64xf32> to vector<1x4x1x64xf32>
    tpu.vector_store %arg10[%c0_42, %c0_43, %c3_44, %c0_45], %141 {strides = array<i32>} : memref<1x8x8x64xf32, #tpu.memory_space<vmem>>, vector<1x4x1x64xf32>,
    %c0_46 = arith.constant 0 : index
    %c0_47 = arith.constant 0 : index
    %c4_48 = arith.constant 4 : index
    %c0_49 = arith.constant 0 : index
    %142 = vector.load %arg2[%c0_46, %c0_47, %c4_48, %c0_49] : memref<1x4x8x64xf32, #tpu.memory_space<vmem>>, vector<1x4x1x64xf32>
    %143 = vector.shape_cast %142 : vector<1x4x1x64xf32> to vector<4x64xf32>
    %144 = vector.extract_strided_slice %0 {offsets = [0, 0], sizes = [4, 1], strides = [1, 1]} : vector<4x4xf32> to vector<4x1xf32>
    %145 = vector.extract_strided_slice %143 {offsets = [0, 0], sizes = [1, 64], strides = [1, 1]} : vector<4x64xf32> to vector<1x64xf32>
    %146 = vector.broadcast %144 : vector<4x1xf32> to vector<4x64xf32>
    %147 = vector.broadcast %145 : vector<1x64xf32> to vector<4x64xf32>
    %148 = arith.mulf %146, %147 : vector<4x64xf32>
    %149 = vector.extract_strided_slice %0 {offsets = [0, 1], sizes = [4, 1], strides = [1, 1]} : vector<4x4xf32> to vector<4x1xf32>
    %150 = vector.extract_strided_slice %143 {offsets = [1, 0], sizes = [1, 64], strides = [1, 1]} : vector<4x64xf32> to vector<1x64xf32>
    %151 = vector.broadcast %149 : vector<4x1xf32> to vector<4x64xf32>
    %152 = vector.broadcast %150 : vector<1x64xf32> to vector<4x64xf32>
    %153 = arith.mulf %151, %152 : vector<4x64xf32>
    %154 = arith.addf %148, %153 : vector<4x64xf32>
    %155 = vector.extract_strided_slice %0 {offsets = [0, 2], sizes = [4, 1], strides = [1, 1]} : vector<4x4xf32> to vector<4x1xf32>
    %156 = vector.extract_strided_slice %143 {offsets = [2, 0], sizes = [1, 64], strides = [1, 1]} : vector<4x64xf32> to vector<1x64xf32>
    %157 = vector.broadcast %155 : vector<4x1xf32> to vector<4x64xf32>
    %158 = vector.broadcast %156 : vector<1x64xf32> to vector<4x64xf32>
    %159 = arith.mulf %157, %158 : vector<4x64xf32>
    %160 = arith.addf %154, %159 : vector<4x64xf32>
    %161 = vector.extract_strided_slice %0 {offsets = [0, 3], sizes = [4, 1], strides = [1, 1]} : vector<4x4xf32> to vector<4x1xf32>
    %162 = vector.extract_strided_slice %143 {offsets = [3, 0], sizes = [1, 64], strides = [1, 1]} : vector<4x64xf32> to vector<1x64xf32>
    %163 = vector.broadcast %161 : vector<4x1xf32> to vector<4x64xf32>
    %164 = vector.broadcast %162 : vector<1x64xf32> to vector<4x64xf32>
    %165 = arith.mulf %163, %164 : vector<4x64xf32>
    %166 = arith.addf %160, %165 : vector<4x64xf32>
    %167 = vector.broadcast %1 : vector<4x1xf32> to vector<4x64xf32>
    %168 = arith.addf %166, %167 : vector<4x64xf32>
    %cst_50 = arith.constant 0.000000e+00 : f32
    %169 = vector.broadcast %cst_50 : f32 to vector<4x64xf32>
    %170 = arith.maximumf %168, %169 : vector<4x64xf32>
    %c5 = arith.constant 5 : index
    %c0_51 = arith.constant 0 : index
    %c0_52 = arith.constant 0 : index
    %171 = vector.load %arg11[%c5, %c0_51, %c0_52] : memref<10x4x64xf32, #tpu.memory_space<vmem>>, vector<1x4x64xf32>
    %172 = vector.shape_cast %171 : vector<1x4x64xf32> to vector<4x64xf32>
    %173 = vector.shape_cast %170 : vector<4x64xf32> to vector<1x4x64xf32>
    tpu.vector_store %arg11[%c5, %c0_51, %c0_52], %173 {strides = array<i32>} : memref<10x4x64xf32, #tpu.memory_space<vmem>>, vector<1x4x64xf32>,
    %c0_53 = arith.constant 0 : index
    %c0_54 = arith.constant 0 : index
    %c4_55 = arith.constant 4 : index
    %c0_56 = arith.constant 0 : index
    %174 = vector.load %arg10[%c0_53, %c0_54, %c4_55, %c0_56] : memref<1x8x8x64xf32, #tpu.memory_space<vmem>>, vector<1x4x1x64xf32>
    %175 = vector.shape_cast %174 : vector<1x4x1x64xf32> to vector<4x64xf32>
    %176 = vector.shape_cast %170 : vector<4x64xf32> to vector<1x4x1x64xf32>
    tpu.vector_store %arg10[%c0_53, %c0_54, %c4_55, %c0_56], %176 {strides = array<i32>} : memref<1x8x8x64xf32, #tpu.memory_space<vmem>>, vector<1x4x1x64xf32>,
    %c0_57 = arith.constant 0 : index
    %c0_58 = arith.constant 0 : index
    %c5_59 = arith.constant 5 : index
    %c0_60 = arith.constant 0 : index
    %177 = vector.load %arg2[%c0_57, %c0_58, %c5_59, %c0_60] : memref<1x4x8x64xf32, #tpu.memory_space<vmem>>, vector<1x4x1x64xf32>
    %178 = vector.shape_cast %177 : vector<1x4x1x64xf32> to vector<4x64xf32>
    %179 = vector.extract_strided_slice %0 {offsets = [0, 0], sizes = [4, 1], strides = [1, 1]} : vector<4x4xf32> to vector<4x1xf32>
    %180 = vector.extract_strided_slice %178 {offsets = [0, 0], sizes = [1, 64], strides = [1, 1]} : vector<4x64xf32> to vector<1x64xf32>
    %181 = vector.broadcast %179 : vector<4x1xf32> to vector<4x64xf32>
    %182 = vector.broadcast %180 : vector<1x64xf32> to vector<4x64xf32>
    %183 = arith.mulf %181, %182 : vector<4x64xf32>
    %184 = vector.extract_strided_slice %0 {offsets = [0, 1], sizes = [4, 1], strides = [1, 1]} : vector<4x4xf32> to vector<4x1xf32>
    %185 = vector.extract_strided_slice %178 {offsets = [1, 0], sizes = [1, 64], strides = [1, 1]} : vector<4x64xf32> to vector<1x64xf32>
    %186 = vector.broadcast %184 : vector<4x1xf32> to vector<4x64xf32>
    %187 = vector.broadcast %185 : vector<1x64xf32> to vector<4x64xf32>
    %188 = arith.mulf %186, %187 : vector<4x64xf32>
    %189 = arith.addf %183, %188 : vector<4x64xf32>
    %190 = vector.extract_strided_slice %0 {offsets = [0, 2], sizes = [4, 1], strides = [1, 1]} : vector<4x4xf32> to vector<4x1xf32>
    %191 = vector.extract_strided_slice %178 {offsets = [2, 0], sizes = [1, 64], strides = [1, 1]} : vector<4x64xf32> to vector<1x64xf32>
    %192 = vector.broadcast %190 : vector<4x1xf32> to vector<4x64xf32>
    %193 = vector.broadcast %191 : vector<1x64xf32> to vector<4x64xf32>
    %194 = arith.mulf %192, %193 : vector<4x64xf32>
    %195 = arith.addf %189, %194 : vector<4x64xf32>
    %196 = vector.extract_strided_slice %0 {offsets = [0, 3], sizes = [4, 1], strides = [1, 1]} : vector<4x4xf32> to vector<4x1xf32>
    %197 = vector.extract_strided_slice %178 {offsets = [3, 0], sizes = [1, 64], strides = [1, 1]} : vector<4x64xf32> to vector<1x64xf32>
    %198 = vector.broadcast %196 : vector<4x1xf32> to vector<4x64xf32>
    %199 = vector.broadcast %197 : vector<1x64xf32> to vector<4x64xf32>
    %200 = arith.mulf %198, %199 : vector<4x64xf32>
    %201 = arith.addf %195, %200 : vector<4x64xf32>
    %202 = vector.broadcast %1 : vector<4x1xf32> to vector<4x64xf32>
    %203 = arith.addf %201, %202 : vector<4x64xf32>
    %cst_61 = arith.constant 0.000000e+00 : f32
    %204 = vector.broadcast %cst_61 : f32 to vector<4x64xf32>
    %205 = arith.maximumf %203, %204 : vector<4x64xf32>
    %c6 = arith.constant 6 : index
    %c0_62 = arith.constant 0 : index
    %c0_63 = arith.constant 0 : index
    %206 = vector.load %arg11[%c6, %c0_62, %c0_63] : memref<10x4x64xf32, #tpu.memory_space<vmem>>, vector<1x4x64xf32>
    %207 = vector.shape_cast %206 : vector<1x4x64xf32> to vector<4x64xf32>
    %208 = vector.shape_cast %205 : vector<4x64xf32> to vector<1x4x64xf32>
    tpu.vector_store %arg11[%c6, %c0_62, %c0_63], %208 {strides = array<i32>} : memref<10x4x64xf32, #tpu.memory_space<vmem>>, vector<1x4x64xf32>,
    %c0_64 = arith.constant 0 : index
    %c0_65 = arith.constant 0 : index
    %c5_66 = arith.constant 5 : index
    %c0_67 = arith.constant 0 : index
    %209 = vector.load %arg10[%c0_64, %c0_65, %c5_66, %c0_67] : memref<1x8x8x64xf32, #tpu.memory_space<vmem>>, vector<1x4x1x64xf32>
    %210 = vector.shape_cast %209 : vector<1x4x1x64xf32> to vector<4x64xf32>
    %211 = vector.shape_cast %205 : vector<4x64xf32> to vector<1x4x1x64xf32>
    tpu.vector_store %arg10[%c0_64, %c0_65, %c5_66, %c0_67], %211 {strides = array<i32>} : memref<1x8x8x64xf32, #tpu.memory_space<vmem>>, vector<1x4x1x64xf32>,
    %c0_68 = arith.constant 0 : index
    %c0_69 = arith.constant 0 : index
    %c6_70 = arith.constant 6 : index
    %c0_71 = arith.constant 0 : index
    %212 = vector.load %arg2[%c0_68, %c0_69, %c6_70, %c0_71] : memref<1x4x8x64xf32, #tpu.memory_space<vmem>>, vector<1x4x1x64xf32>
    %213 = vector.shape_cast %212 : vector<1x4x1x64xf32> to vector<4x64xf32>
    %214 = vector.extract_strided_slice %0 {offsets = [0, 0], sizes = [4, 1], strides = [1, 1]} : vector<4x4xf32> to vector<4x1xf32>
    %215 = vector.extract_strided_slice %213 {offsets = [0, 0], sizes = [1, 64], strides = [1, 1]} : vector<4x64xf32> to vector<1x64xf32>
    %216 = vector.broadcast %214 : vector<4x1xf32> to vector<4x64xf32>
    %217 = vector.broadcast %215 : vector<1x64xf32> to vector<4x64xf32>
    %218 = arith.mulf %216, %217 : vector<4x64xf32>
    %219 = vector.extract_strided_slice %0 {offsets = [0, 1], sizes = [4, 1], strides = [1, 1]} : vector<4x4xf32> to vector<4x1xf32>
    %220 = vector.extract_strided_slice %213 {offsets = [1, 0], sizes = [1, 64], strides = [1, 1]} : vector<4x64xf32> to vector<1x64xf32>
    %221 = vector.broadcast %219 : vector<4x1xf32> to vector<4x64xf32>
    %222 = vector.broadcast %220 : vector<1x64xf32> to vector<4x64xf32>
    %223 = arith.mulf %221, %222 : vector<4x64xf32>
    %224 = arith.addf %218, %223 : vector<4x64xf32>
    %225 = vector.extract_strided_slice %0 {offsets = [0, 2], sizes = [4, 1], strides = [1, 1]} : vector<4x4xf32> to vector<4x1xf32>
    %226 = vector.extract_strided_slice %213 {offsets = [2, 0], sizes = [1, 64], strides = [1, 1]} : vector<4x64xf32> to vector<1x64xf32>
    %227 = vector.broadcast %225 : vector<4x1xf32> to vector<4x64xf32>
    %228 = vector.broadcast %226 : vector<1x64xf32> to vector<4x64xf32>
    %229 = arith.mulf %227, %228 : vector<4x64xf32>
    %230 = arith.addf %224, %229 : vector<4x64xf32>
    %231 = vector.extract_strided_slice %0 {offsets = [0, 3], sizes = [4, 1], strides = [1, 1]} : vector<4x4xf32> to vector<4x1xf32>
    %232 = vector.extract_strided_slice %213 {offsets = [3, 0], sizes = [1, 64], strides = [1, 1]} : vector<4x64xf32> to vector<1x64xf32>
    %233 = vector.broadcast %231 : vector<4x1xf32> to vector<4x64xf32>
    %234 = vector.broadcast %232 : vector<1x64xf32> to vector<4x64xf32>
    %235 = arith.mulf %233, %234 : vector<4x64xf32>
    %236 = arith.addf %230, %235 : vector<4x64xf32>
    %237 = vector.broadcast %1 : vector<4x1xf32> to vector<4x64xf32>
    %238 = arith.addf %236, %237 : vector<4x64xf32>
    %cst_72 = arith.constant 0.000000e+00 : f32
    %239 = vector.broadcast %cst_72 : f32 to vector<4x64xf32>
    %240 = arith.maximumf %238, %239 : vector<4x64xf32>
    %c7 = arith.constant 7 : index
    %c0_73 = arith.constant 0 : index
    %c0_74 = arith.constant 0 : index
    %241 = vector.load %arg11[%c7, %c0_73, %c0_74] : memref<10x4x64xf32, #tpu.memory_space<vmem>>, vector<1x4x64xf32>
    %242 = vector.shape_cast %241 : vector<1x4x64xf32> to vector<4x64xf32>
    %243 = vector.shape_cast %240 : vector<4x64xf32> to vector<1x4x64xf32>
    tpu.vector_store %arg11[%c7, %c0_73, %c0_74], %243 {strides = array<i32>} : memref<10x4x64xf32, #tpu.memory_space<vmem>>, vector<1x4x64xf32>,
    %c0_75 = arith.constant 0 : index
    %c0_76 = arith.constant 0 : index
    %c6_77 = arith.constant 6 : index
    %c0_78 = arith.constant 0 : index
    %244 = vector.load %arg10[%c0_75, %c0_76, %c6_77, %c0_78] : memref<1x8x8x64xf32, #tpu.memory_space<vmem>>, vector<1x4x1x64xf32>
    %245 = vector.shape_cast %244 : vector<1x4x1x64xf32> to vector<4x64xf32>
    %246 = vector.shape_cast %240 : vector<4x64xf32> to vector<1x4x1x64xf32>
    tpu.vector_store %arg10[%c0_75, %c0_76, %c6_77, %c0_78], %246 {strides = array<i32>} : memref<1x8x8x64xf32, #tpu.memory_space<vmem>>, vector<1x4x1x64xf32>,
    %c0_79 = arith.constant 0 : index
    %c0_80 = arith.constant 0 : index
    %c7_81 = arith.constant 7 : index
    %c0_82 = arith.constant 0 : index
    %247 = vector.load %arg2[%c0_79, %c0_80, %c7_81, %c0_82] : memref<1x4x8x64xf32, #tpu.memory_space<vmem>>, vector<1x4x1x64xf32>
    %248 = vector.shape_cast %247 : vector<1x4x1x64xf32> to vector<4x64xf32>
    %249 = vector.extract_strided_slice %0 {offsets = [0, 0], sizes = [4, 1], strides = [1, 1]} : vector<4x4xf32> to vector<4x1xf32>
    %250 = vector.extract_strided_slice %248 {offsets = [0, 0], sizes = [1, 64], strides = [1, 1]} : vector<4x64xf32> to vector<1x64xf32>
    %251 = vector.broadcast %249 : vector<4x1xf32> to vector<4x64xf32>
    %252 = vector.broadcast %250 : vector<1x64xf32> to vector<4x64xf32>
    %253 = arith.mulf %251, %252 : vector<4x64xf32>
    %254 = vector.extract_strided_slice %0 {offsets = [0, 1], sizes = [4, 1], strides = [1, 1]} : vector<4x4xf32> to vector<4x1xf32>
    %255 = vector.extract_strided_slice %248 {offsets = [1, 0], sizes = [1, 64], strides = [1, 1]} : vector<4x64xf32> to vector<1x64xf32>
    %256 = vector.broadcast %254 : vector<4x1xf32> to vector<4x64xf32>
    %257 = vector.broadcast %255 : vector<1x64xf32> to vector<4x64xf32>
    %258 = arith.mulf %256, %257 : vector<4x64xf32>
    %259 = arith.addf %253, %258 : vector<4x64xf32>
    %260 = vector.extract_strided_slice %0 {offsets = [0, 2], sizes = [4, 1], strides = [1, 1]} : vector<4x4xf32> to vector<4x1xf32>
    %261 = vector.extract_strided_slice %248 {offsets = [2, 0], sizes = [1, 64], strides = [1, 1]} : vector<4x64xf32> to vector<1x64xf32>
    %262 = vector.broadcast %260 : vector<4x1xf32> to vector<4x64xf32>
    %263 = vector.broadcast %261 : vector<1x64xf32> to vector<4x64xf32>
    %264 = arith.mulf %262, %263 : vector<4x64xf32>
    %265 = arith.addf %259, %264 : vector<4x64xf32>
    %266 = vector.extract_strided_slice %0 {offsets = [0, 3], sizes = [4, 1], strides = [1, 1]} : vector<4x4xf32> to vector<4x1xf32>
    %267 = vector.extract_strided_slice %248 {offsets = [3, 0], sizes = [1, 64], strides = [1, 1]} : vector<4x64xf32> to vector<1x64xf32>
    %268 = vector.broadcast %266 : vector<4x1xf32> to vector<4x64xf32>
    %269 = vector.broadcast %267 : vector<1x64xf32> to vector<4x64xf32>
    %270 = arith.mulf %268, %269 : vector<4x64xf32>
    %271 = arith.addf %265, %270 : vector<4x64xf32>
    %272 = vector.broadcast %1 : vector<4x1xf32> to vector<4x64xf32>
    %273 = arith.addf %271, %272 : vector<4x64xf32>
    %cst_83 = arith.constant 0.000000e+00 : f32
    %274 = vector.broadcast %cst_83 : f32 to vector<4x64xf32>
    %275 = arith.maximumf %273, %274 : vector<4x64xf32>
    %c8 = arith.constant 8 : index
    %c0_84 = arith.constant 0 : index
    %c0_85 = arith.constant 0 : index
    %276 = vector.load %arg11[%c8, %c0_84, %c0_85] : memref<10x4x64xf32, #tpu.memory_space<vmem>>, vector<1x4x64xf32>
    %277 = vector.shape_cast %276 : vector<1x4x64xf32> to vector<4x64xf32>
    %278 = vector.shape_cast %275 : vector<4x64xf32> to vector<1x4x64xf32>
    tpu.vector_store %arg11[%c8, %c0_84, %c0_85], %278 {strides = array<i32>} : memref<10x4x64xf32, #tpu.memory_space<vmem>>, vector<1x4x64xf32>,
    %c0_86 = arith.constant 0 : index
    %c0_87 = arith.constant 0 : index
    %c7_88 = arith.constant 7 : index
    %c0_89 = arith.constant 0 : index
    %279 = vector.load %arg10[%c0_86, %c0_87, %c7_88, %c0_89] : memref<1x8x8x64xf32, #tpu.memory_space<vmem>>, vector<1x4x1x64xf32>
    %280 = vector.shape_cast %279 : vector<1x4x1x64xf32> to vector<4x64xf32>
    %281 = vector.shape_cast %275 : vector<4x64xf32> to vector<1x4x1x64xf32>
    tpu.vector_store %arg10[%c0_86, %c0_87, %c7_88, %c0_89], %281 {strides = array<i32>} : memref<1x8x8x64xf32, #tpu.memory_space<vmem>>, vector<1x4x1x64xf32>,
    %c0_90 = arith.constant 0 : index
    %c0_91 = arith.constant 0 : index
    %c7_92 = arith.constant 7 : index
    %c0_93 = arith.constant 0 : index
    %282 = vector.load %arg3[%c0_90, %c0_91, %c7_92, %c0_93] : memref<1x4x8x64xf32, #tpu.memory_space<vmem>>, vector<1x4x1x64xf32>
    %283 = vector.shape_cast %282 : vector<1x4x1x64xf32> to vector<4x64xf32>
    %284 = vector.extract_strided_slice %0 {offsets = [0, 0], sizes = [4, 1], strides = [1, 1]} : vector<4x4xf32> to vector<4x1xf32>
    %285 = vector.extract_strided_slice %283 {offsets = [0, 0], sizes = [1, 64], strides = [1, 1]} : vector<4x64xf32> to vector<1x64xf32>
    %286 = vector.broadcast %284 : vector<4x1xf32> to vector<4x64xf32>
    %287 = vector.broadcast %285 : vector<1x64xf32> to vector<4x64xf32>
    %288 = arith.mulf %286, %287 : vector<4x64xf32>
    %289 = vector.extract_strided_slice %0 {offsets = [0, 1], sizes = [4, 1], strides = [1, 1]} : vector<4x4xf32> to vector<4x1xf32>
    %290 = vector.extract_strided_slice %283 {offsets = [1, 0], sizes = [1, 64], strides = [1, 1]} : vector<4x64xf32> to vector<1x64xf32>
    %291 = vector.broadcast %289 : vector<4x1xf32> to vector<4x64xf32>
    %292 = vector.broadcast %290 : vector<1x64xf32> to vector<4x64xf32>
    %293 = arith.mulf %291, %292 : vector<4x64xf32>
    %294 = arith.addf %288, %293 : vector<4x64xf32>
    %295 = vector.extract_strided_slice %0 {offsets = [0, 2], sizes = [4, 1], strides = [1, 1]} : vector<4x4xf32> to vector<4x1xf32>
    %296 = vector.extract_strided_slice %283 {offsets = [2, 0], sizes = [1, 64], strides = [1, 1]} : vector<4x64xf32> to vector<1x64xf32>
    %297 = vector.broadcast %295 : vector<4x1xf32> to vector<4x64xf32>
    %298 = vector.broadcast %296 : vector<1x64xf32> to vector<4x64xf32>
    %299 = arith.mulf %297, %298 : vector<4x64xf32>
    %300 = arith.addf %294, %299 : vector<4x64xf32>
    %301 = vector.extract_strided_slice %0 {offsets = [0, 3], sizes = [4, 1], strides = [1, 1]} : vector<4x4xf32> to vector<4x1xf32>
    %302 = vector.extract_strided_slice %283 {offsets = [3, 0], sizes = [1, 64], strides = [1, 1]} : vector<4x64xf32> to vector<1x64xf32>
    %303 = vector.broadcast %301 : vector<4x1xf32> to vector<4x64xf32>
    %304 = vector.broadcast %302 : vector<1x64xf32> to vector<4x64xf32>
    %305 = arith.mulf %303, %304 : vector<4x64xf32>
    %306 = arith.addf %300, %305 : vector<4x64xf32>
    %307 = vector.broadcast %1 : vector<4x1xf32> to vector<4x64xf32>
    %308 = arith.addf %306, %307 : vector<4x64xf32>
    %cst_94 = arith.constant 0.000000e+00 : f32
    %309 = vector.broadcast %cst_94 : f32 to vector<4x64xf32>
    %310 = arith.maximumf %308, %309 : vector<4x64xf32>
    %c0_95 = arith.constant 0 : index
    %c0_96 = arith.constant 0 : index
    %c0_97 = arith.constant 0 : index
    %311 = vector.load %arg11[%c0_95, %c0_96, %c0_97] : memref<10x4x64xf32, #tpu.memory_space<vmem>>, vector<1x4x64xf32>
    %312 = vector.shape_cast %311 : vector<1x4x64xf32> to vector<4x64xf32>
    %313 = vector.shape_cast %310 : vector<4x64xf32> to vector<1x4x64xf32>
    tpu.vector_store %arg11[%c0_95, %c0_96, %c0_97], %313 {strides = array<i32>} : memref<10x4x64xf32, #tpu.memory_space<vmem>>, vector<1x4x64xf32>,
    %c0_98 = arith.constant 0 : index
    %c0_99 = arith.constant 0 : index
    %c0_100 = arith.constant 0 : index
    %c0_101 = arith.constant 0 : index
    %314 = vector.load %arg4[%c0_98, %c0_99, %c0_100, %c0_101] : memref<1x4x8x64xf32, #tpu.memory_space<vmem>>, vector<1x4x1x64xf32>
    %315 = vector.shape_cast %314 : vector<1x4x1x64xf32> to vector<4x64xf32>
    %316 = vector.extract_strided_slice %0 {offsets = [0, 0], sizes = [4, 1], strides = [1, 1]} : vector<4x4xf32> to vector<4x1xf32>
    %317 = vector.extract_strided_slice %315 {offsets = [0, 0], sizes = [1, 64], strides = [1, 1]} : vector<4x64xf32> to vector<1x64xf32>
    %318 = vector.broadcast %316 : vector<4x1xf32> to vector<4x64xf32>
    %319 = vector.broadcast %317 : vector<1x64xf32> to vector<4x64xf32>
    %320 = arith.mulf %318, %319 : vector<4x64xf32>
    %321 = vector.extract_strided_slice %0 {offsets = [0, 1], sizes = [4, 1], strides = [1, 1]} : vector<4x4xf32> to vector<4x1xf32>
    %322 = vector.extract_strided_slice %315 {offsets = [1, 0], sizes = [1, 64], strides = [1, 1]} : vector<4x64xf32> to vector<1x64xf32>
    %323 = vector.broadcast %321 : vector<4x1xf32> to vector<4x64xf32>
    %324 = vector.broadcast %322 : vector<1x64xf32> to vector<4x64xf32>
    %325 = arith.mulf %323, %324 : vector<4x64xf32>
    %326 = arith.addf %320, %325 : vector<4x64xf32>
    %327 = vector.extract_strided_slice %0 {offsets = [0, 2], sizes = [4, 1], strides = [1, 1]} : vector<4x4xf32> to vector<4x1xf32>
    %328 = vector.extract_strided_slice %315 {offsets = [2, 0], sizes = [1, 64], strides = [1, 1]} : vector<4x64xf32> to vector<1x64xf32>
    %329 = vector.broadcast %327 : vector<4x1xf32> to vector<4x64xf32>
    %330 = vector.broadcast %328 : vector<1x64xf32> to vector<4x64xf32>
    %331 = arith.mulf %329, %330 : vector<4x64xf32>
    %332 = arith.addf %326, %331 : vector<4x64xf32>
    %333 = vector.extract_strided_slice %0 {offsets = [0, 3], sizes = [4, 1], strides = [1, 1]} : vector<4x4xf32> to vector<4x1xf32>
    %334 = vector.extract_strided_slice %315 {offsets = [3, 0], sizes = [1, 64], strides = [1, 1]} : vector<4x64xf32> to vector<1x64xf32>
    %335 = vector.broadcast %333 : vector<4x1xf32> to vector<4x64xf32>
    %336 = vector.broadcast %334 : vector<1x64xf32> to vector<4x64xf32>
    %337 = arith.mulf %335, %336 : vector<4x64xf32>
    %338 = arith.addf %332, %337 : vector<4x64xf32>
    %339 = vector.broadcast %1 : vector<4x1xf32> to vector<4x64xf32>
    %340 = arith.addf %338, %339 : vector<4x64xf32>
    %cst_102 = arith.constant 0.000000e+00 : f32
    %341 = vector.broadcast %cst_102 : f32 to vector<4x64xf32>
    %342 = arith.maximumf %340, %341 : vector<4x64xf32>
    %c9 = arith.constant 9 : index
    %c0_103 = arith.constant 0 : index
    %c0_104 = arith.constant 0 : index
    %343 = vector.load %arg11[%c9, %c0_103, %c0_104] : memref<10x4x64xf32, #tpu.memory_space<vmem>>, vector<1x4x64xf32>
    %344 = vector.shape_cast %343 : vector<1x4x64xf32> to vector<4x64xf32>
    %345 = vector.shape_cast %342 : vector<4x64xf32> to vector<1x4x64xf32>
    tpu.vector_store %arg11[%c9, %c0_103, %c0_104], %345 {strides = array<i32>} : memref<10x4x64xf32, #tpu.memory_space<vmem>>, vector<1x4x64xf32>,
    %c0_i32 = arith.constant 0 : i32
    %346 = arith.cmpi eq, %arg1, %c0_i32 : i32
    %347 = arith.extui %346 : i1 to i32
    %c0_i32_105 = arith.constant 0 : i32
    %348 = arith.cmpi ne, %347, %c0_i32_105 : i32
    scf.if %348 {
      %cst_241 = arith.constant 0.000000e+00 : f32
      %662 = vector.broadcast %cst_241 : f32 to vector<4x64xf32>
      %c0_242 = arith.constant 0 : index
      %c0_243 = arith.constant 0 : index
      %c0_244 = arith.constant 0 : index
      %663 = vector.load %arg11[%c0_242, %c0_243, %c0_244] : memref<10x4x64xf32, #tpu.memory_space<vmem>>, vector<1x4x64xf32>
      %664 = vector.shape_cast %663 : vector<1x4x64xf32> to vector<4x64xf32>
      %665 = vector.shape_cast %662 : vector<4x64xf32> to vector<1x4x64xf32>
      tpu.vector_store %arg11[%c0_242, %c0_243, %c0_244], %665 {strides = array<i32>} : memref<10x4x64xf32, #tpu.memory_space<vmem>>, vector<1x4x64xf32>,
    } else {
    }
    %c1_i32 = arith.constant 1 : i32
    %349 = arith.cmpi eq, %arg1, %c1_i32 : i32
    %350 = arith.extui %349 : i1 to i32
    %c0_i32_106 = arith.constant 0 : i32
    %351 = arith.cmpi ne, %350, %c0_i32_106 : i32
    scf.if %351 {
      %cst_241 = arith.constant 0.000000e+00 : f32
      %662 = vector.broadcast %cst_241 : f32 to vector<4x64xf32>
      %c9_242 = arith.constant 9 : index
      %c0_243 = arith.constant 0 : index
      %c0_244 = arith.constant 0 : index
      %663 = vector.load %arg11[%c9_242, %c0_243, %c0_244] : memref<10x4x64xf32, #tpu.memory_space<vmem>>, vector<1x4x64xf32>
      %664 = vector.shape_cast %663 : vector<1x4x64xf32> to vector<4x64xf32>
      %665 = vector.shape_cast %662 : vector<4x64xf32> to vector<1x4x64xf32>
      tpu.vector_store %arg11[%c9_242, %c0_243, %c0_244], %665 {strides = array<i32>} : memref<10x4x64xf32, #tpu.memory_space<vmem>>, vector<1x4x64xf32>,
    } else {
    }
    %c0_107 = arith.constant 0 : index
    %c0_108 = arith.constant 0 : index
    %c0_109 = arith.constant 0 : index
    %352 = vector.load %arg11[%c0_107, %c0_108, %c0_109] : memref<10x4x64xf32, #tpu.memory_space<vmem>>, vector<10x4x64xf32>
    %c9_i32 = arith.constant 9 : i32
    %353 = tpu.dynamic_rotate %352 by %c9_i32 dim 2 : vector<10x4x64xf32>, i32 -> vector<10x4x64xf32>
    %c0_110 = arith.constant 0 : index
    %c0_111 = arith.constant 0 : index
    %c0_112 = arith.constant 0 : index
    %354 = vector.load %arg9[%c0_110, %c0_111, %c0_112] : memref<9x1x64xf32, #tpu.memory_space<vmem>>, vector<1x1x64xf32>
    %355 = vector.shape_cast %354 : vector<1x1x64xf32> to vector<1x64xf32>
    %356 = vector.shape_cast %355 : vector<1x64xf32> to vector<1x1x64xf32>
    %357 = vector.broadcast %356 : vector<1x1x64xf32> to vector<10x4x64xf32>
    %358 = arith.mulf %353, %357 : vector<10x4x64xf32>
    %359 = vector.extract_strided_slice %358 {offsets = [0, 0, 0], sizes = [8, 4, 64], strides = [1, 1, 1]} : vector<10x4x64xf32> to vector<8x4x64xf32>
    %c0_113 = arith.constant 0 : index
    %c0_114 = arith.constant 0 : index
    %c0_115 = arith.constant 0 : index
    %360 = vector.load %arg7[%c0_113, %c0_114, %c0_115] : memref<27x4x1xf32, #tpu.memory_space<vmem>>, vector<1x4x1xf32>
    %361 = vector.shape_cast %360 : vector<1x4x1xf32> to vector<4x1xf32>
    %362 = vector.shape_cast %361 : vector<4x1xf32> to vector<1x4x1xf32>
    %363 = vector.broadcast %362 : vector<1x4x1xf32> to vector<8x4x64xf32>
    %364 = arith.mulf %359, %363 : vector<8x4x64xf32>
    %365 = vector.extract_strided_slice %358 {offsets = [1, 0, 0], sizes = [8, 4, 64], strides = [1, 1, 1]} : vector<10x4x64xf32> to vector<8x4x64xf32>
    %c9_116 = arith.constant 9 : index
    %c0_117 = arith.constant 0 : index
    %c0_118 = arith.constant 0 : index
    %366 = vector.load %arg7[%c9_116, %c0_117, %c0_118] : memref<27x4x1xf32, #tpu.memory_space<vmem>>, vector<1x4x1xf32>
    %367 = vector.shape_cast %366 : vector<1x4x1xf32> to vector<4x1xf32>
    %368 = vector.shape_cast %367 : vector<4x1xf32> to vector<1x4x1xf32>
    %369 = vector.broadcast %368 : vector<1x4x1xf32> to vector<8x4x64xf32>
    %370 = arith.mulf %365, %369 : vector<8x4x64xf32>
    %371 = arith.addf %364, %370 : vector<8x4x64xf32>
    %372 = vector.extract_strided_slice %358 {offsets = [2, 0, 0], sizes = [8, 4, 64], strides = [1, 1, 1]} : vector<10x4x64xf32> to vector<8x4x64xf32>
    %c18 = arith.constant 18 : index
    %c0_119 = arith.constant 0 : index
    %c0_120 = arith.constant 0 : index
    %373 = vector.load %arg7[%c18, %c0_119, %c0_120] : memref<27x4x1xf32, #tpu.memory_space<vmem>>, vector<1x4x1xf32>
    %374 = vector.shape_cast %373 : vector<1x4x1xf32> to vector<4x1xf32>
    %375 = vector.shape_cast %374 : vector<4x1xf32> to vector<1x4x1xf32>
    %376 = vector.broadcast %375 : vector<1x4x1xf32> to vector<8x4x64xf32>
    %377 = arith.mulf %372, %376 : vector<8x4x64xf32>
    %378 = arith.addf %371, %377 : vector<8x4x64xf32>
    %c8_i32 = arith.constant 8 : i32
    %379 = tpu.dynamic_rotate %352 by %c8_i32 dim 2 : vector<10x4x64xf32>, i32 -> vector<10x4x64xf32>
    %c1_121 = arith.constant 1 : index
    %c0_122 = arith.constant 0 : index
    %c0_123 = arith.constant 0 : index
    %380 = vector.load %arg9[%c1_121, %c0_122, %c0_123] : memref<9x1x64xf32, #tpu.memory_space<vmem>>, vector<1x1x64xf32>
    %381 = vector.shape_cast %380 : vector<1x1x64xf32> to vector<1x64xf32>
    %382 = vector.shape_cast %381 : vector<1x64xf32> to vector<1x1x64xf32>
    %383 = vector.broadcast %382 : vector<1x1x64xf32> to vector<10x4x64xf32>
    %384 = arith.mulf %379, %383 : vector<10x4x64xf32>
    %385 = vector.extract_strided_slice %384 {offsets = [0, 0, 0], sizes = [8, 4, 64], strides = [1, 1, 1]} : vector<10x4x64xf32> to vector<8x4x64xf32>
    %c1_124 = arith.constant 1 : index
    %c0_125 = arith.constant 0 : index
    %c0_126 = arith.constant 0 : index
    %386 = vector.load %arg7[%c1_124, %c0_125, %c0_126] : memref<27x4x1xf32, #tpu.memory_space<vmem>>, vector<1x4x1xf32>
    %387 = vector.shape_cast %386 : vector<1x4x1xf32> to vector<4x1xf32>
    %388 = vector.shape_cast %387 : vector<4x1xf32> to vector<1x4x1xf32>
    %389 = vector.broadcast %388 : vector<1x4x1xf32> to vector<8x4x64xf32>
    %390 = arith.mulf %385, %389 : vector<8x4x64xf32>
    %391 = arith.addf %378, %390 : vector<8x4x64xf32>
    %392 = vector.extract_strided_slice %384 {offsets = [1, 0, 0], sizes = [8, 4, 64], strides = [1, 1, 1]} : vector<10x4x64xf32> to vector<8x4x64xf32>
    %c10 = arith.constant 10 : index
    %c0_127 = arith.constant 0 : index
    %c0_128 = arith.constant 0 : index
    %393 = vector.load %arg7[%c10, %c0_127, %c0_128] : memref<27x4x1xf32, #tpu.memory_space<vmem>>, vector<1x4x1xf32>
    %394 = vector.shape_cast %393 : vector<1x4x1xf32> to vector<4x1xf32>
    %395 = vector.shape_cast %394 : vector<4x1xf32> to vector<1x4x1xf32>
    %396 = vector.broadcast %395 : vector<1x4x1xf32> to vector<8x4x64xf32>
    %397 = arith.mulf %392, %396 : vector<8x4x64xf32>
    %398 = arith.addf %391, %397 : vector<8x4x64xf32>
    %399 = vector.extract_strided_slice %384 {offsets = [2, 0, 0], sizes = [8, 4, 64], strides = [1, 1, 1]} : vector<10x4x64xf32> to vector<8x4x64xf32>
    %c19 = arith.constant 19 : index
    %c0_129 = arith.constant 0 : index
    %c0_130 = arith.constant 0 : index
    %400 = vector.load %arg7[%c19, %c0_129, %c0_130] : memref<27x4x1xf32, #tpu.memory_space<vmem>>, vector<1x4x1xf32>
    %401 = vector.shape_cast %400 : vector<1x4x1xf32> to vector<4x1xf32>
    %402 = vector.shape_cast %401 : vector<4x1xf32> to vector<1x4x1xf32>
    %403 = vector.broadcast %402 : vector<1x4x1xf32> to vector<8x4x64xf32>
    %404 = arith.mulf %399, %403 : vector<8x4x64xf32>
    %405 = arith.addf %398, %404 : vector<8x4x64xf32>
    %c7_i32 = arith.constant 7 : i32
    %406 = tpu.dynamic_rotate %352 by %c7_i32 dim 2 : vector<10x4x64xf32>, i32 -> vector<10x4x64xf32>
    %c2_131 = arith.constant 2 : index
    %c0_132 = arith.constant 0 : index
    %c0_133 = arith.constant 0 : index
    %407 = vector.load %arg9[%c2_131, %c0_132, %c0_133] : memref<9x1x64xf32, #tpu.memory_space<vmem>>, vector<1x1x64xf32>
    %408 = vector.shape_cast %407 : vector<1x1x64xf32> to vector<1x64xf32>
    %409 = vector.shape_cast %408 : vector<1x64xf32> to vector<1x1x64xf32>
    %410 = vector.broadcast %409 : vector<1x1x64xf32> to vector<10x4x64xf32>
    %411 = arith.mulf %406, %410 : vector<10x4x64xf32>
    %412 = vector.extract_strided_slice %411 {offsets = [0, 0, 0], sizes = [8, 4, 64], strides = [1, 1, 1]} : vector<10x4x64xf32> to vector<8x4x64xf32>
    %c2_134 = arith.constant 2 : index
    %c0_135 = arith.constant 0 : index
    %c0_136 = arith.constant 0 : index
    %413 = vector.load %arg7[%c2_134, %c0_135, %c0_136] : memref<27x4x1xf32, #tpu.memory_space<vmem>>, vector<1x4x1xf32>
    %414 = vector.shape_cast %413 : vector<1x4x1xf32> to vector<4x1xf32>
    %415 = vector.shape_cast %414 : vector<4x1xf32> to vector<1x4x1xf32>
    %416 = vector.broadcast %415 : vector<1x4x1xf32> to vector<8x4x64xf32>
    %417 = arith.mulf %412, %416 : vector<8x4x64xf32>
    %418 = arith.addf %405, %417 : vector<8x4x64xf32>
    %419 = vector.extract_strided_slice %411 {offsets = [1, 0, 0], sizes = [8, 4, 64], strides = [1, 1, 1]} : vector<10x4x64xf32> to vector<8x4x64xf32>
    %c11 = arith.constant 11 : index
    %c0_137 = arith.constant 0 : index
    %c0_138 = arith.constant 0 : index
    %420 = vector.load %arg7[%c11, %c0_137, %c0_138] : memref<27x4x1xf32, #tpu.memory_space<vmem>>, vector<1x4x1xf32>
    %421 = vector.shape_cast %420 : vector<1x4x1xf32> to vector<4x1xf32>
    %422 = vector.shape_cast %421 : vector<4x1xf32> to vector<1x4x1xf32>
    %423 = vector.broadcast %422 : vector<1x4x1xf32> to vector<8x4x64xf32>
    %424 = arith.mulf %419, %423 : vector<8x4x64xf32>
    %425 = arith.addf %418, %424 : vector<8x4x64xf32>
    %426 = vector.extract_strided_slice %411 {offsets = [2, 0, 0], sizes = [8, 4, 64], strides = [1, 1, 1]} : vector<10x4x64xf32> to vector<8x4x64xf32>
    %c20 = arith.constant 20 : index
    %c0_139 = arith.constant 0 : index
    %c0_140 = arith.constant 0 : index
    %427 = vector.load %arg7[%c20, %c0_139, %c0_140] : memref<27x4x1xf32, #tpu.memory_space<vmem>>, vector<1x4x1xf32>
    %428 = vector.shape_cast %427 : vector<1x4x1xf32> to vector<4x1xf32>
    %429 = vector.shape_cast %428 : vector<4x1xf32> to vector<1x4x1xf32>
    %430 = vector.broadcast %429 : vector<1x4x1xf32> to vector<8x4x64xf32>
    %431 = arith.mulf %426, %430 : vector<8x4x64xf32>
    %432 = arith.addf %425, %431 : vector<8x4x64xf32>
    %c1_i32_141 = arith.constant 1 : i32
    %433 = tpu.dynamic_rotate %352 by %c1_i32_141 dim 2 : vector<10x4x64xf32>, i32 -> vector<10x4x64xf32>
    %c3_142 = arith.constant 3 : index
    %c0_143 = arith.constant 0 : index
    %c0_144 = arith.constant 0 : index
    %434 = vector.load %arg9[%c3_142, %c0_143, %c0_144] : memref<9x1x64xf32, #tpu.memory_space<vmem>>, vector<1x1x64xf32>
    %435 = vector.shape_cast %434 : vector<1x1x64xf32> to vector<1x64xf32>
    %436 = vector.shape_cast %435 : vector<1x64xf32> to vector<1x1x64xf32>
    %437 = vector.broadcast %436 : vector<1x1x64xf32> to vector<10x4x64xf32>
    %438 = arith.mulf %433, %437 : vector<10x4x64xf32>
    %439 = vector.extract_strided_slice %438 {offsets = [0, 0, 0], sizes = [8, 4, 64], strides = [1, 1, 1]} : vector<10x4x64xf32> to vector<8x4x64xf32>
    %c3_145 = arith.constant 3 : index
    %c0_146 = arith.constant 0 : index
    %c0_147 = arith.constant 0 : index
    %440 = vector.load %arg7[%c3_145, %c0_146, %c0_147] : memref<27x4x1xf32, #tpu.memory_space<vmem>>, vector<1x4x1xf32>
    %441 = vector.shape_cast %440 : vector<1x4x1xf32> to vector<4x1xf32>
    %442 = vector.shape_cast %441 : vector<4x1xf32> to vector<1x4x1xf32>
    %443 = vector.broadcast %442 : vector<1x4x1xf32> to vector<8x4x64xf32>
    %444 = arith.mulf %439, %443 : vector<8x4x64xf32>
    %445 = arith.addf %432, %444 : vector<8x4x64xf32>
    %446 = vector.extract_strided_slice %438 {offsets = [1, 0, 0], sizes = [8, 4, 64], strides = [1, 1, 1]} : vector<10x4x64xf32> to vector<8x4x64xf32>
    %c12 = arith.constant 12 : index
    %c0_148 = arith.constant 0 : index
    %c0_149 = arith.constant 0 : index
    %447 = vector.load %arg7[%c12, %c0_148, %c0_149] : memref<27x4x1xf32, #tpu.memory_space<vmem>>, vector<1x4x1xf32>
    %448 = vector.shape_cast %447 : vector<1x4x1xf32> to vector<4x1xf32>
    %449 = vector.shape_cast %448 : vector<4x1xf32> to vector<1x4x1xf32>
    %450 = vector.broadcast %449 : vector<1x4x1xf32> to vector<8x4x64xf32>
    %451 = arith.mulf %446, %450 : vector<8x4x64xf32>
    %452 = arith.addf %445, %451 : vector<8x4x64xf32>
    %453 = vector.extract_strided_slice %438 {offsets = [2, 0, 0], sizes = [8, 4, 64], strides = [1, 1, 1]} : vector<10x4x64xf32> to vector<8x4x64xf32>
    %c21 = arith.constant 21 : index
    %c0_150 = arith.constant 0 : index
    %c0_151 = arith.constant 0 : index
    %454 = vector.load %arg7[%c21, %c0_150, %c0_151] : memref<27x4x1xf32, #tpu.memory_space<vmem>>, vector<1x4x1xf32>
    %455 = vector.shape_cast %454 : vector<1x4x1xf32> to vector<4x1xf32>
    %456 = vector.shape_cast %455 : vector<4x1xf32> to vector<1x4x1xf32>
    %457 = vector.broadcast %456 : vector<1x4x1xf32> to vector<8x4x64xf32>
    %458 = arith.mulf %453, %457 : vector<8x4x64xf32>
    %459 = arith.addf %452, %458 : vector<8x4x64xf32>
    %460 = vector.extract_strided_slice %352 {offsets = [0, 0, 0], sizes = [8, 4, 64], strides = [1, 1, 1]} : vector<10x4x64xf32> to vector<8x4x64xf32>
    %c4_152 = arith.constant 4 : index
    %c0_153 = arith.constant 0 : index
    %c0_154 = arith.constant 0 : index
    %461 = vector.load %arg7[%c4_152, %c0_153, %c0_154] : memref<27x4x1xf32, #tpu.memory_space<vmem>>, vector<1x4x1xf32>
    %462 = vector.shape_cast %461 : vector<1x4x1xf32> to vector<4x1xf32>
    %463 = vector.shape_cast %462 : vector<4x1xf32> to vector<1x4x1xf32>
    %464 = vector.broadcast %463 : vector<1x4x1xf32> to vector<8x4x64xf32>
    %465 = arith.mulf %460, %464 : vector<8x4x64xf32>
    %466 = arith.addf %459, %465 : vector<8x4x64xf32>
    %467 = vector.extract_strided_slice %352 {offsets = [1, 0, 0], sizes = [8, 4, 64], strides = [1, 1, 1]} : vector<10x4x64xf32> to vector<8x4x64xf32>
    %c13 = arith.constant 13 : index
    %c0_155 = arith.constant 0 : index
    %c0_156 = arith.constant 0 : index
    %468 = vector.load %arg7[%c13, %c0_155, %c0_156] : memref<27x4x1xf32, #tpu.memory_space<vmem>>, vector<1x4x1xf32>
    %469 = vector.shape_cast %468 : vector<1x4x1xf32> to vector<4x1xf32>
    %470 = vector.shape_cast %469 : vector<4x1xf32> to vector<1x4x1xf32>
    %471 = vector.broadcast %470 : vector<1x4x1xf32> to vector<8x4x64xf32>
    %472 = arith.mulf %467, %471 : vector<8x4x64xf32>
    %473 = arith.addf %466, %472 : vector<8x4x64xf32>
    %474 = vector.extract_strided_slice %352 {offsets = [2, 0, 0], sizes = [8, 4, 64], strides = [1, 1, 1]} : vector<10x4x64xf32> to vector<8x4x64xf32>
    %c22 = arith.constant 22 : index
    %c0_157 = arith.constant 0 : index
    %c0_158 = arith.constant 0 : index
    %475 = vector.load %arg7[%c22, %c0_157, %c0_158] : memref<27x4x1xf32, #tpu.memory_space<vmem>>, vector<1x4x1xf32>
    %476 = vector.shape_cast %475 : vector<1x4x1xf32> to vector<4x1xf32>
    %477 = vector.shape_cast %476 : vector<4x1xf32> to vector<1x4x1xf32>
    %478 = vector.broadcast %477 : vector<1x4x1xf32> to vector<8x4x64xf32>
    %479 = arith.mulf %474, %478 : vector<8x4x64xf32>
    %480 = arith.addf %473, %479 : vector<8x4x64xf32>
    %c63_i32 = arith.constant 63 : i32
    %481 = tpu.dynamic_rotate %352 by %c63_i32 dim 2 : vector<10x4x64xf32>, i32 -> vector<10x4x64xf32>
    %c5_159 = arith.constant 5 : index
    %c0_160 = arith.constant 0 : index
    %c0_161 = arith.constant 0 : index
    %482 = vector.load %arg9[%c5_159, %c0_160, %c0_161] : memref<9x1x64xf32, #tpu.memory_space<vmem>>, vector<1x1x64xf32>
    %483 = vector.shape_cast %482 : vector<1x1x64xf32> to vector<1x64xf32>
    %484 = vector.shape_cast %483 : vector<1x64xf32> to vector<1x1x64xf32>
    %485 = vector.broadcast %484 : vector<1x1x64xf32> to vector<10x4x64xf32>
    %486 = arith.mulf %481, %485 : vector<10x4x64xf32>
    %487 = vector.extract_strided_slice %486 {offsets = [0, 0, 0], sizes = [8, 4, 64], strides = [1, 1, 1]} : vector<10x4x64xf32> to vector<8x4x64xf32>
    %c5_162 = arith.constant 5 : index
    %c0_163 = arith.constant 0 : index
    %c0_164 = arith.constant 0 : index
    %488 = vector.load %arg7[%c5_162, %c0_163, %c0_164] : memref<27x4x1xf32, #tpu.memory_space<vmem>>, vector<1x4x1xf32>
    %489 = vector.shape_cast %488 : vector<1x4x1xf32> to vector<4x1xf32>
    %490 = vector.shape_cast %489 : vector<4x1xf32> to vector<1x4x1xf32>
    %491 = vector.broadcast %490 : vector<1x4x1xf32> to vector<8x4x64xf32>
    %492 = arith.mulf %487, %491 : vector<8x4x64xf32>
    %493 = arith.addf %480, %492 : vector<8x4x64xf32>
    %494 = vector.extract_strided_slice %486 {offsets = [1, 0, 0], sizes = [8, 4, 64], strides = [1, 1, 1]} : vector<10x4x64xf32> to vector<8x4x64xf32>
    %c14 = arith.constant 14 : index
    %c0_165 = arith.constant 0 : index
    %c0_166 = arith.constant 0 : index
    %495 = vector.load %arg7[%c14, %c0_165, %c0_166] : memref<27x4x1xf32, #tpu.memory_space<vmem>>, vector<1x4x1xf32>
    %496 = vector.shape_cast %495 : vector<1x4x1xf32> to vector<4x1xf32>
    %497 = vector.shape_cast %496 : vector<4x1xf32> to vector<1x4x1xf32>
    %498 = vector.broadcast %497 : vector<1x4x1xf32> to vector<8x4x64xf32>
    %499 = arith.mulf %494, %498 : vector<8x4x64xf32>
    %500 = arith.addf %493, %499 : vector<8x4x64xf32>
    %501 = vector.extract_strided_slice %486 {offsets = [2, 0, 0], sizes = [8, 4, 64], strides = [1, 1, 1]} : vector<10x4x64xf32> to vector<8x4x64xf32>
    %c23 = arith.constant 23 : index
    %c0_167 = arith.constant 0 : index
    %c0_168 = arith.constant 0 : index
    %502 = vector.load %arg7[%c23, %c0_167, %c0_168] : memref<27x4x1xf32, #tpu.memory_space<vmem>>, vector<1x4x1xf32>
    %503 = vector.shape_cast %502 : vector<1x4x1xf32> to vector<4x1xf32>
    %504 = vector.shape_cast %503 : vector<4x1xf32> to vector<1x4x1xf32>
    %505 = vector.broadcast %504 : vector<1x4x1xf32> to vector<8x4x64xf32>
    %506 = arith.mulf %501, %505 : vector<8x4x64xf32>
    %507 = arith.addf %500, %506 : vector<8x4x64xf32>
    %c57_i32 = arith.constant 57 : i32
    %508 = tpu.dynamic_rotate %352 by %c57_i32 dim 2 : vector<10x4x64xf32>, i32 -> vector<10x4x64xf32>
    %c6_169 = arith.constant 6 : index
    %c0_170 = arith.constant 0 : index
    %c0_171 = arith.constant 0 : index
    %509 = vector.load %arg9[%c6_169, %c0_170, %c0_171] : memref<9x1x64xf32, #tpu.memory_space<vmem>>, vector<1x1x64xf32>
    %510 = vector.shape_cast %509 : vector<1x1x64xf32> to vector<1x64xf32>
    %511 = vector.shape_cast %510 : vector<1x64xf32> to vector<1x1x64xf32>
    %512 = vector.broadcast %511 : vector<1x1x64xf32> to vector<10x4x64xf32>
    %513 = arith.mulf %508, %512 : vector<10x4x64xf32>
    %514 = vector.extract_strided_slice %513 {offsets = [0, 0, 0], sizes = [8, 4, 64], strides = [1, 1, 1]} : vector<10x4x64xf32> to vector<8x4x64xf32>
    %c6_172 = arith.constant 6 : index
    %c0_173 = arith.constant 0 : index
    %c0_174 = arith.constant 0 : index
    %515 = vector.load %arg7[%c6_172, %c0_173, %c0_174] : memref<27x4x1xf32, #tpu.memory_space<vmem>>, vector<1x4x1xf32>
    %516 = vector.shape_cast %515 : vector<1x4x1xf32> to vector<4x1xf32>
    %517 = vector.shape_cast %516 : vector<4x1xf32> to vector<1x4x1xf32>
    %518 = vector.broadcast %517 : vector<1x4x1xf32> to vector<8x4x64xf32>
    %519 = arith.mulf %514, %518 : vector<8x4x64xf32>
    %520 = arith.addf %507, %519 : vector<8x4x64xf32>
    %521 = vector.extract_strided_slice %513 {offsets = [1, 0, 0], sizes = [8, 4, 64], strides = [1, 1, 1]} : vector<10x4x64xf32> to vector<8x4x64xf32>
    %c15 = arith.constant 15 : index
    %c0_175 = arith.constant 0 : index
    %c0_176 = arith.constant 0 : index
    %522 = vector.load %arg7[%c15, %c0_175, %c0_176] : memref<27x4x1xf32, #tpu.memory_space<vmem>>, vector<1x4x1xf32>
    %523 = vector.shape_cast %522 : vector<1x4x1xf32> to vector<4x1xf32>
    %524 = vector.shape_cast %523 : vector<4x1xf32> to vector<1x4x1xf32>
    %525 = vector.broadcast %524 : vector<1x4x1xf32> to vector<8x4x64xf32>
    %526 = arith.mulf %521, %525 : vector<8x4x64xf32>
    %527 = arith.addf %520, %526 : vector<8x4x64xf32>
    %528 = vector.extract_strided_slice %513 {offsets = [2, 0, 0], sizes = [8, 4, 64], strides = [1, 1, 1]} : vector<10x4x64xf32> to vector<8x4x64xf32>
    %c24 = arith.constant 24 : index
    %c0_177 = arith.constant 0 : index
    %c0_178 = arith.constant 0 : index
    %529 = vector.load %arg7[%c24, %c0_177, %c0_178] : memref<27x4x1xf32, #tpu.memory_space<vmem>>, vector<1x4x1xf32>
    %530 = vector.shape_cast %529 : vector<1x4x1xf32> to vector<4x1xf32>
    %531 = vector.shape_cast %530 : vector<4x1xf32> to vector<1x4x1xf32>
    %532 = vector.broadcast %531 : vector<1x4x1xf32> to vector<8x4x64xf32>
    %533 = arith.mulf %528, %532 : vector<8x4x64xf32>
    %534 = arith.addf %527, %533 : vector<8x4x64xf32>
    %c56_i32 = arith.constant 56 : i32
    %535 = tpu.dynamic_rotate %352 by %c56_i32 dim 2 : vector<10x4x64xf32>, i32 -> vector<10x4x64xf32>
    %c7_179 = arith.constant 7 : index
    %c0_180 = arith.constant 0 : index
    %c0_181 = arith.constant 0 : index
    %536 = vector.load %arg9[%c7_179, %c0_180, %c0_181] : memref<9x1x64xf32, #tpu.memory_space<vmem>>, vector<1x1x64xf32>
    %537 = vector.shape_cast %536 : vector<1x1x64xf32> to vector<1x64xf32>
    %538 = vector.shape_cast %537 : vector<1x64xf32> to vector<1x1x64xf32>
    %539 = vector.broadcast %538 : vector<1x1x64xf32> to vector<10x4x64xf32>
    %540 = arith.mulf %535, %539 : vector<10x4x64xf32>
    %541 = vector.extract_strided_slice %540 {offsets = [0, 0, 0], sizes = [8, 4, 64], strides = [1, 1, 1]} : vector<10x4x64xf32> to vector<8x4x64xf32>
    %c7_182 = arith.constant 7 : index
    %c0_183 = arith.constant 0 : index
    %c0_184 = arith.constant 0 : index
    %542 = vector.load %arg7[%c7_182, %c0_183, %c0_184] : memref<27x4x1xf32, #tpu.memory_space<vmem>>, vector<1x4x1xf32>
    %543 = vector.shape_cast %542 : vector<1x4x1xf32> to vector<4x1xf32>
    %544 = vector.shape_cast %543 : vector<4x1xf32> to vector<1x4x1xf32>
    %545 = vector.broadcast %544 : vector<1x4x1xf32> to vector<8x4x64xf32>
    %546 = arith.mulf %541, %545 : vector<8x4x64xf32>
    %547 = arith.addf %534, %546 : vector<8x4x64xf32>
    %548 = vector.extract_strided_slice %540 {offsets = [1, 0, 0], sizes = [8, 4, 64], strides = [1, 1, 1]} : vector<10x4x64xf32> to vector<8x4x64xf32>
    %c16 = arith.constant 16 : index
    %c0_185 = arith.constant 0 : index
    %c0_186 = arith.constant 0 : index
    %549 = vector.load %arg7[%c16, %c0_185, %c0_186] : memref<27x4x1xf32, #tpu.memory_space<vmem>>, vector<1x4x1xf32>
    %550 = vector.shape_cast %549 : vector<1x4x1xf32> to vector<4x1xf32>
    %551 = vector.shape_cast %550 : vector<4x1xf32> to vector<1x4x1xf32>
    %552 = vector.broadcast %551 : vector<1x4x1xf32> to vector<8x4x64xf32>
    %553 = arith.mulf %548, %552 : vector<8x4x64xf32>
    %554 = arith.addf %547, %553 : vector<8x4x64xf32>
    %555 = vector.extract_strided_slice %540 {offsets = [2, 0, 0], sizes = [8, 4, 64], strides = [1, 1, 1]} : vector<10x4x64xf32> to vector<8x4x64xf32>
    %c25 = arith.constant 25 : index
    %c0_187 = arith.constant 0 : index
    %c0_188 = arith.constant 0 : index
    %556 = vector.load %arg7[%c25, %c0_187, %c0_188] : memref<27x4x1xf32, #tpu.memory_space<vmem>>, vector<1x4x1xf32>
    %557 = vector.shape_cast %556 : vector<1x4x1xf32> to vector<4x1xf32>
    %558 = vector.shape_cast %557 : vector<4x1xf32> to vector<1x4x1xf32>
    %559 = vector.broadcast %558 : vector<1x4x1xf32> to vector<8x4x64xf32>
    %560 = arith.mulf %555, %559 : vector<8x4x64xf32>
    %561 = arith.addf %554, %560 : vector<8x4x64xf32>
    %c55_i32 = arith.constant 55 : i32
    %562 = tpu.dynamic_rotate %352 by %c55_i32 dim 2 : vector<10x4x64xf32>, i32 -> vector<10x4x64xf32>
    %c8_189 = arith.constant 8 : index
    %c0_190 = arith.constant 0 : index
    %c0_191 = arith.constant 0 : index
    %563 = vector.load %arg9[%c8_189, %c0_190, %c0_191] : memref<9x1x64xf32, #tpu.memory_space<vmem>>, vector<1x1x64xf32>
    %564 = vector.shape_cast %563 : vector<1x1x64xf32> to vector<1x64xf32>
    %565 = vector.shape_cast %564 : vector<1x64xf32> to vector<1x1x64xf32>
    %566 = vector.broadcast %565 : vector<1x1x64xf32> to vector<10x4x64xf32>
    %567 = arith.mulf %562, %566 : vector<10x4x64xf32>
    %568 = vector.extract_strided_slice %567 {offsets = [0, 0, 0], sizes = [8, 4, 64], strides = [1, 1, 1]} : vector<10x4x64xf32> to vector<8x4x64xf32>
    %c8_192 = arith.constant 8 : index
    %c0_193 = arith.constant 0 : index
    %c0_194 = arith.constant 0 : index
    %569 = vector.load %arg7[%c8_192, %c0_193, %c0_194] : memref<27x4x1xf32, #tpu.memory_space<vmem>>, vector<1x4x1xf32>
    %570 = vector.shape_cast %569 : vector<1x4x1xf32> to vector<4x1xf32>
    %571 = vector.shape_cast %570 : vector<4x1xf32> to vector<1x4x1xf32>
    %572 = vector.broadcast %571 : vector<1x4x1xf32> to vector<8x4x64xf32>
    %573 = arith.mulf %568, %572 : vector<8x4x64xf32>
    %574 = arith.addf %561, %573 : vector<8x4x64xf32>
    %575 = vector.extract_strided_slice %567 {offsets = [1, 0, 0], sizes = [8, 4, 64], strides = [1, 1, 1]} : vector<10x4x64xf32> to vector<8x4x64xf32>
    %c17 = arith.constant 17 : index
    %c0_195 = arith.constant 0 : index
    %c0_196 = arith.constant 0 : index
    %576 = vector.load %arg7[%c17, %c0_195, %c0_196] : memref<27x4x1xf32, #tpu.memory_space<vmem>>, vector<1x4x1xf32>
    %577 = vector.shape_cast %576 : vector<1x4x1xf32> to vector<4x1xf32>
    %578 = vector.shape_cast %577 : vector<4x1xf32> to vector<1x4x1xf32>
    %579 = vector.broadcast %578 : vector<1x4x1xf32> to vector<8x4x64xf32>
    %580 = arith.mulf %575, %579 : vector<8x4x64xf32>
    %581 = arith.addf %574, %580 : vector<8x4x64xf32>
    %582 = vector.extract_strided_slice %567 {offsets = [2, 0, 0], sizes = [8, 4, 64], strides = [1, 1, 1]} : vector<10x4x64xf32> to vector<8x4x64xf32>
    %c26 = arith.constant 26 : index
    %c0_197 = arith.constant 0 : index
    %c0_198 = arith.constant 0 : index
    %583 = vector.load %arg7[%c26, %c0_197, %c0_198] : memref<27x4x1xf32, #tpu.memory_space<vmem>>, vector<1x4x1xf32>
    %584 = vector.shape_cast %583 : vector<1x4x1xf32> to vector<4x1xf32>
    %585 = vector.shape_cast %584 : vector<4x1xf32> to vector<1x4x1xf32>
    %586 = vector.broadcast %585 : vector<1x4x1xf32> to vector<8x4x64xf32>
    %587 = arith.mulf %582, %586 : vector<8x4x64xf32>
    %588 = arith.addf %581, %587 : vector<8x4x64xf32>
    %c0_199 = arith.constant 0 : index
    %c0_200 = arith.constant 0 : index
    %589 = vector.load %arg8[%c0_199, %c0_200] : memref<4x1xf32, #tpu.memory_space<vmem>>, vector<4x1xf32>
    %590 = vector.extract_strided_slice %588 {offsets = [0, 0, 0], sizes = [1, 4, 64], strides = [1, 1, 1]} : vector<8x4x64xf32> to vector<1x4x64xf32>
    %591 = vector.shape_cast %590 : vector<1x4x64xf32> to vector<4x64xf32>
    %592 = vector.broadcast %589 : vector<4x1xf32> to vector<4x64xf32>
    %593 = arith.addf %591, %592 : vector<4x64xf32>
    %cst_201 = arith.constant 0.000000e+00 : f32
    %594 = vector.broadcast %cst_201 : f32 to vector<4x64xf32>
    %595 = arith.maximumf %593, %594 : vector<4x64xf32>
    %c0_202 = arith.constant 0 : index
    %c4_203 = arith.constant 4 : index
    %c0_204 = arith.constant 0 : index
    %c0_205 = arith.constant 0 : index
    %596 = vector.load %arg10[%c0_202, %c4_203, %c0_204, %c0_205] : memref<1x8x8x64xf32, #tpu.memory_space<vmem>>, vector<1x4x1x64xf32>
    %597 = vector.shape_cast %596 : vector<1x4x1x64xf32> to vector<4x64xf32>
    %598 = vector.shape_cast %595 : vector<4x64xf32> to vector<1x4x1x64xf32>
    tpu.vector_store %arg10[%c0_202, %c4_203, %c0_204, %c0_205], %598 {strides = array<i32>} : memref<1x8x8x64xf32, #tpu.memory_space<vmem>>, vector<1x4x1x64xf32>,
    %599 = vector.extract_strided_slice %588 {offsets = [1, 0, 0], sizes = [1, 4, 64], strides = [1, 1, 1]} : vector<8x4x64xf32> to vector<1x4x64xf32>
    %600 = vector.shape_cast %599 : vector<1x4x64xf32> to vector<4x64xf32>
    %601 = vector.broadcast %589 : vector<4x1xf32> to vector<4x64xf32>
    %602 = arith.addf %600, %601 : vector<4x64xf32>
    %cst_206 = arith.constant 0.000000e+00 : f32
    %603 = vector.broadcast %cst_206 : f32 to vector<4x64xf32>
    %604 = arith.maximumf %602, %603 : vector<4x64xf32>
    %c0_207 = arith.constant 0 : index
    %c4_208 = arith.constant 4 : index
    %c1_209 = arith.constant 1 : index
    %c0_210 = arith.constant 0 : index
    %605 = vector.load %arg10[%c0_207, %c4_208, %c1_209, %c0_210] : memref<1x8x8x64xf32, #tpu.memory_space<vmem>>, vector<1x4x1x64xf32>
    %606 = vector.shape_cast %605 : vector<1x4x1x64xf32> to vector<4x64xf32>
    %607 = vector.shape_cast %604 : vector<4x64xf32> to vector<1x4x1x64xf32>
    tpu.vector_store %arg10[%c0_207, %c4_208, %c1_209, %c0_210], %607 {strides = array<i32>} : memref<1x8x8x64xf32, #tpu.memory_space<vmem>>, vector<1x4x1x64xf32>,
    %608 = vector.extract_strided_slice %588 {offsets = [2, 0, 0], sizes = [1, 4, 64], strides = [1, 1, 1]} : vector<8x4x64xf32> to vector<1x4x64xf32>
    %609 = vector.shape_cast %608 : vector<1x4x64xf32> to vector<4x64xf32>
    %610 = vector.broadcast %589 : vector<4x1xf32> to vector<4x64xf32>
    %611 = arith.addf %609, %610 : vector<4x64xf32>
    %cst_211 = arith.constant 0.000000e+00 : f32
    %612 = vector.broadcast %cst_211 : f32 to vector<4x64xf32>
    %613 = arith.maximumf %611, %612 : vector<4x64xf32>
    %c0_212 = arith.constant 0 : index
    %c4_213 = arith.constant 4 : index
    %c2_214 = arith.constant 2 : index
    %c0_215 = arith.constant 0 : index
    %614 = vector.load %arg10[%c0_212, %c4_213, %c2_214, %c0_215] : memref<1x8x8x64xf32, #tpu.memory_space<vmem>>, vector<1x4x1x64xf32>
    %615 = vector.shape_cast %614 : vector<1x4x1x64xf32> to vector<4x64xf32>
    %616 = vector.shape_cast %613 : vector<4x64xf32> to vector<1x4x1x64xf32>
    tpu.vector_store %arg10[%c0_212, %c4_213, %c2_214, %c0_215], %616 {strides = array<i32>} : memref<1x8x8x64xf32, #tpu.memory_space<vmem>>, vector<1x4x1x64xf32>,
    %617 = vector.extract_strided_slice %588 {offsets = [3, 0, 0], sizes = [1, 4, 64], strides = [1, 1, 1]} : vector<8x4x64xf32> to vector<1x4x64xf32>
    %618 = vector.shape_cast %617 : vector<1x4x64xf32> to vector<4x64xf32>
    %619 = vector.broadcast %589 : vector<4x1xf32> to vector<4x64xf32>
    %620 = arith.addf %618, %619 : vector<4x64xf32>
    %cst_216 = arith.constant 0.000000e+00 : f32
    %621 = vector.broadcast %cst_216 : f32 to vector<4x64xf32>
    %622 = arith.maximumf %620, %621 : vector<4x64xf32>
    %c0_217 = arith.constant 0 : index
    %c4_218 = arith.constant 4 : index
    %c3_219 = arith.constant 3 : index
    %c0_220 = arith.constant 0 : index
    %623 = vector.load %arg10[%c0_217, %c4_218, %c3_219, %c0_220] : memref<1x8x8x64xf32, #tpu.memory_space<vmem>>, vector<1x4x1x64xf32>
    %624 = vector.shape_cast %623 : vector<1x4x1x64xf32> to vector<4x64xf32>
    %625 = vector.shape_cast %622 : vector<4x64xf32> to vector<1x4x1x64xf32>
    tpu.vector_store %arg10[%c0_217, %c4_218, %c3_219, %c0_220], %625 {strides = array<i32>} : memref<1x8x8x64xf32, #tpu.memory_space<vmem>>, vector<1x4x1x64xf32>,
    %626 = vector.extract_strided_slice %588 {offsets = [4, 0, 0], sizes = [1, 4, 64], strides = [1, 1, 1]} : vector<8x4x64xf32> to vector<1x4x64xf32>
    %627 = vector.shape_cast %626 : vector<1x4x64xf32> to vector<4x64xf32>
    %628 = vector.broadcast %589 : vector<4x1xf32> to vector<4x64xf32>
    %629 = arith.addf %627, %628 : vector<4x64xf32>
    %cst_221 = arith.constant 0.000000e+00 : f32
    %630 = vector.broadcast %cst_221 : f32 to vector<4x64xf32>
    %631 = arith.maximumf %629, %630 : vector<4x64xf32>
    %c0_222 = arith.constant 0 : index
    %c4_223 = arith.constant 4 : index
    %c4_224 = arith.constant 4 : index
    %c0_225 = arith.constant 0 : index
    %632 = vector.load %arg10[%c0_222, %c4_223, %c4_224, %c0_225] : memref<1x8x8x64xf32, #tpu.memory_space<vmem>>, vector<1x4x1x64xf32>
    %633 = vector.shape_cast %632 : vector<1x4x1x64xf32> to vector<4x64xf32>
    %634 = vector.shape_cast %631 : vector<4x64xf32> to vector<1x4x1x64xf32>
    tpu.vector_store %arg10[%c0_222, %c4_223, %c4_224, %c0_225], %634 {strides = array<i32>} : memref<1x8x8x64xf32, #tpu.memory_space<vmem>>, vector<1x4x1x64xf32>,
    %635 = vector.extract_strided_slice %588 {offsets = [5, 0, 0], sizes = [1, 4, 64], strides = [1, 1, 1]} : vector<8x4x64xf32> to vector<1x4x64xf32>
    %636 = vector.shape_cast %635 : vector<1x4x64xf32> to vector<4x64xf32>
    %637 = vector.broadcast %589 : vector<4x1xf32> to vector<4x64xf32>
    %638 = arith.addf %636, %637 : vector<4x64xf32>
    %cst_226 = arith.constant 0.000000e+00 : f32
    %639 = vector.broadcast %cst_226 : f32 to vector<4x64xf32>
    %640 = arith.maximumf %638, %639 : vector<4x64xf32>
    %c0_227 = arith.constant 0 : index
    %c4_228 = arith.constant 4 : index
    %c5_229 = arith.constant 5 : index
    %c0_230 = arith.constant 0 : index
    %641 = vector.load %arg10[%c0_227, %c4_228, %c5_229, %c0_230] : memref<1x8x8x64xf32, #tpu.memory_space<vmem>>, vector<1x4x1x64xf32>
    %642 = vector.shape_cast %641 : vector<1x4x1x64xf32> to vector<4x64xf32>
    %643 = vector.shape_cast %640 : vector<4x64xf32> to vector<1x4x1x64xf32>
    tpu.vector_store %arg10[%c0_227, %c4_228, %c5_229, %c0_230], %643 {strides = array<i32>} : memref<1x8x8x64xf32, #tpu.memory_space<vmem>>, vector<1x4x1x64xf32>,
    %644 = vector.extract_strided_slice %588 {offsets = [6, 0, 0], sizes = [1, 4, 64], strides = [1, 1, 1]} : vector<8x4x64xf32> to vector<1x4x64xf32>
    %645 = vector.shape_cast %644 : vector<1x4x64xf32> to vector<4x64xf32>
    %646 = vector.broadcast %589 : vector<4x1xf32> to vector<4x64xf32>
    %647 = arith.addf %645, %646 : vector<4x64xf32>
    %cst_231 = arith.constant 0.000000e+00 : f32
    %648 = vector.broadcast %cst_231 : f32 to vector<4x64xf32>
    %649 = arith.maximumf %647, %648 : vector<4x64xf32>
    %c0_232 = arith.constant 0 : index
    %c4_233 = arith.constant 4 : index
    %c6_234 = arith.constant 6 : index
    %c0_235 = arith.constant 0 : index
    %650 = vector.load %arg10[%c0_232, %c4_233, %c6_234, %c0_235] : memref<1x8x8x64xf32, #tpu.memory_space<vmem>>, vector<1x4x1x64xf32>
    %651 = vector.shape_cast %650 : vector<1x4x1x64xf32> to vector<4x64xf32>
    %652 = vector.shape_cast %649 : vector<4x64xf32> to vector<1x4x1x64xf32>
    tpu.vector_store %arg10[%c0_232, %c4_233, %c6_234, %c0_235], %652 {strides = array<i32>} : memref<1x8x8x64xf32, #tpu.memory_space<vmem>>, vector<1x4x1x64xf32>,
    %653 = vector.extract_strided_slice %588 {offsets = [7, 0, 0], sizes = [1, 4, 64], strides = [1, 1, 1]} : vector<8x4x64xf32> to vector<1x4x64xf32>
    %654 = vector.shape_cast %653 : vector<1x4x64xf32> to vector<4x64xf32>
    %655 = vector.broadcast %589 : vector<4x1xf32> to vector<4x64xf32>
    %656 = arith.addf %654, %655 : vector<4x64xf32>
    %cst_236 = arith.constant 0.000000e+00 : f32
    %657 = vector.broadcast %cst_236 : f32 to vector<4x64xf32>
    %658 = arith.maximumf %656, %657 : vector<4x64xf32>
    %c0_237 = arith.constant 0 : index
    %c4_238 = arith.constant 4 : index
    %c7_239 = arith.constant 7 : index
    %c0_240 = arith.constant 0 : index
    %659 = vector.load %arg10[%c0_237, %c4_238, %c7_239, %c0_240] : memref<1x8x8x64xf32, #tpu.memory_space<vmem>>, vector<1x4x1x64xf32>
    %660 = vector.shape_cast %659 : vector<1x4x1x64xf32> to vector<4x64xf32>
    %661 = vector.shape_cast %658 : vector<4x64xf32> to vector<1x4x1x64xf32>
    tpu.vector_store %arg10[%c0_237, %c4_238, %c7_239, %c0_240], %661 {strides = array<i32>} : memref<1x8x8x64xf32, #tpu.memory_space<vmem>>, vector<1x4x1x64xf32>,
    return
  }
  func.func @transform_0(%arg0: i32, %arg1: i32) -> (i32, i32, i32, i32) {
    %c0_i32 = arith.constant 0 : i32
    %c0_i32_0 = arith.constant 0 : i32
    %c0_i32_1 = arith.constant 0 : i32
    return %arg0, %c0_i32, %arg1, %c0_i32_0 : i32, i32, i32, i32
  }
  func.func @transform_1(%arg0: i32, %arg1: i32) -> (i32, i32, i32, i32) {
    %c1_i32 = arith.constant 1 : i32
    %0 = arith.muli %arg1, %c1_i32 : i32
    %c1_i32_0 = arith.constant 1 : i32
    %1 = arith.subi %0, %c1_i32_0 : i32
    %c0_i32 = arith.constant 0 : i32
    %2 = arith.maxsi %1, %c0_i32 : i32
    %c0_i32_1 = arith.constant 0 : i32
    %c0_i32_2 = arith.constant 0 : i32
    %c0_i32_3 = arith.constant 0 : i32
    return %arg0, %c0_i32_1, %2, %c0_i32_2 : i32, i32, i32, i32
  }
  func.func @transform_2(%arg0: i32, %arg1: i32) -> (i32, i32, i32, i32) {
    %c1_i32 = arith.constant 1 : i32
    %0 = arith.addi %arg1, %c1_i32 : i32
    %c1_i32_0 = arith.constant 1 : i32
    %1 = arith.muli %0, %c1_i32_0 : i32
    %c1_i32_1 = arith.constant 1 : i32
    %2 = arith.minsi %1, %c1_i32_1 : i32
    %c0_i32 = arith.constant 0 : i32
    %c0_i32_2 = arith.constant 0 : i32
    %c0_i32_3 = arith.constant 0 : i32
    return %arg0, %c0_i32, %2, %c0_i32_2 : i32, i32, i32, i32
  }
  func.func @transform_3(%arg0: i32, %arg1: i32) -> (i32, i32) {
    %c0_i32 = arith.constant 0 : i32
    %c0_i32_0 = arith.constant 0 : i32
    %c0_i32_1 = arith.constant 0 : i32
    return %c0_i32, %c0_i32_0 : i32, i32
  }
  func.func @transform_4(%arg0: i32, %arg1: i32) -> (i32, i32) {
    %c0_i32 = arith.constant 0 : i32
    %c0_i32_0 = arith.constant 0 : i32
    %c0_i32_1 = arith.constant 0 : i32
    return %c0_i32, %c0_i32_0 : i32, i32
  }
  func.func @transform_5(%arg0: i32, %arg1: i32) -> (i32, i32, i32) {
    %c0_i32 = arith.constant 0 : i32
    %c0_i32_0 = arith.constant 0 : i32
    %c0_i32_1 = arith.constant 0 : i32
    %c0_i32_2 = arith.constant 0 : i32
    return %c0_i32, %c0_i32_0, %c0_i32_1 : i32, i32, i32
  }
  func.func @transform_6(%arg0: i32, %arg1: i32) -> (i32, i32) {
    %c0_i32 = arith.constant 0 : i32
    %c0_i32_0 = arith.constant 0 : i32
    %c0_i32_1 = arith.constant 0 : i32
    return %c0_i32, %c0_i32_0 : i32, i32
  }
  func.func @transform_7(%arg0: i32, %arg1: i32) -> (i32, i32, i32) {
    %c0_i32 = arith.constant 0 : i32
    %c0_i32_0 = arith.constant 0 : i32
    %c0_i32_1 = arith.constant 0 : i32
    %c0_i32_2 = arith.constant 0 : i32
    return %c0_i32, %c0_i32_0, %c0_i32_1 : i32, i32, i32
  }
  func.func @transform_8(%arg0: i32, %arg1: i32) -> (i32, i32, i32, i32) {
    %c0_i32 = arith.constant 0 : i32
    %c0_i32_0 = arith.constant 0 : i32
    %c0_i32_1 = arith.constant 0 : i32
    return %arg0, %c0_i32, %arg1, %c0_i32_0 : i32, i32, i32, i32
  }
}

</mosaic_0001>

<llo_original>
// kernel: ghost_module_forward.1
$region0: #{ghost_module_forward.1}
  #allocation0 [shape = 'u32[]', space=smem, size = 0x4, offset = 0x4, fixed_abs, tag = 'smem constant byte address 0x4 - core index']
  #allocation1 [shape = 'u32[72,128]{1,0:T(1,128)}', space=vmem, size = 0x9000, scoped, tag = 'internal scratch']
  #allocation2 [shape = 'f32[10,4,64]{2,1,0:T(4,128)}', space=vmem, size = 0x5000, scoped, tag = 'scratch operand']
  %s0 = inlined_call_operand.vmem [shape: f32[2,4,16,64], index: 0, kind: input, shape index: {}, may-alias: {0,1,2}]
  %s1 = inlined_call_operand.vmem [shape: f32[2,4,16,64], index: 1, kind: input, shape index: {}, may-alias: {0,1,2}]
  %s2 = inlined_call_operand.vmem [shape: f32[2,4,16,64], index: 2, kind: input, shape index: {}, may-alias: {0,1,2}]
  %s3 = inlined_call_operand.vmem [shape: f32[4,4], index: 3, kind: input, shape index: {}]
  %s4 = inlined_call_operand.vmem [shape: f32[4,1], index: 4, kind: input, shape index: {}]
  %s5 = inlined_call_operand.vmem [shape: f32[27,4,1], index: 5, kind: input, shape index: {}]
  %s6 = inlined_call_operand.vmem [shape: f32[4,1], index: 6, kind: input, shape index: {}]
  %s7 = inlined_call_operand.vmem [shape: f32[9,1,64], index: 7, kind: input, shape index: {}]
  %s8 = inlined_call_operand.vmem [shape: f32[2,8,16,64], index: 8, kind: output, shape index: {}]
  %s9 = sld [smem:[#allocation0]]
  $region221: #{ghost_module_forward.1} parent=0
    _
  %s11 = ssub.s32 1, %s9
  %s12 = scalar_select 0, %s11, %s9
  $region1: #{ghost_module_forward.1} parent=0
    #allocation3 [shape = 'u8[32768]{0}', space=vmem, size = 0x8000, scoped, tag = 'input window, operand 0']
    #allocation4 [shape = 'u8[32768]{0}', space=vmem, size = 0x8000, scoped, tag = 'input window, operand 1']
    #allocation5 [shape = 'u8[32768]{0}', space=vmem, size = 0x8000, scoped, tag = 'input window, operand 2']
    #allocation6 [shape = 'u8[65536]{0}', space=vmem, size = 0x10000, scoped, tag = 'output window, operand 0']
    loop: start=0, step=1, limit=6
    $region2: #{ghost_module_forward.1} parent=1 // loop_pre_header
      _
    $region3: #{ghost_module_forward.1} parent=1 // loop_header
      %s14 = sphi 0, %s18
      %p15 = scmp.ge.s32.totalorder %s14, 6
      %s21 = sphi 0, %s33
      %s22 = sphi 0, %s29
      %s23 = sphi 0, %s21
      %s24 = sphi 0, %s22
      %s25 = sphi 0, %s23
      %s26 = sphi 0, %s24
      %s38 = sphi 0, %s40
      %s41 = sphi 0, %s38
      %s42 = sphi 0, %s41
      %s58 = sphi 0, %s42
      %s72 = sphi 0, %s74
      %s75 = sphi 0, %s72
      %s76 = sphi 0, %s75
      %s92 = sphi 0, %s76
      %s106 = sphi 0, %s108
      %s109 = sphi 0, %s106
      %s110 = sphi 0, %s109
      %s126 = sphi 0, %s110
      %s130 = sphi 0, %s130
      %s132 = sphi 0, %s130
      %s133 = sphi 0, %s132
      %s147 = sphi 0, %s133
      %s151 = sphi 0, %s151
      %s153 = sphi 0, %s151
      %s154 = sphi 0, %s153
      %s168 = sphi 0, %s154
      %s172 = sphi 0, %s172
      %s174 = sphi 0, %s172
      %s175 = sphi 0, %s174
      %s189 = sphi 0, %s175
      %s193 = sphi 0, %s193
      %s195 = sphi 0, %s193
      %s196 = sphi 0, %s195
      %s210 = sphi 0, %s196
      %s214 = sphi 0, %s214
      %s216 = sphi 0, %s214
      %s217 = sphi 0, %s216
      %s231 = sphi 0, %s217
      %s239 = sphi 0, %s241
      %s242 = sphi 0, %s239
      %s243 = sphi 0, %s242
      %s259 = sphi 0, %s243
    $region4: #{ghost_module_forward.1} parent=1 // loop_header_branch
      %17 = sbr.rel (%p15) target = $region8
    $region5: #{ghost_module_forward.1} parent=1 // loop_body
      %s19 = ssub.s32 %s14, 1
      %s20 = ssub.s32 %s14, 2
      %s27 = sadd.s32 1, %s22
      %p28 = scmp.ge.s32.totalorder %s27, 2
      %s29 = scalar_select %p28, 0, %s27
      %s30 = sadd.s32 1, %s21
      %s31 = scalar_select %p28, %s30, %s21
      %p32 = scmp.ge.s32.totalorder %s31, 2
      %s33 = scalar_select %p32, 0, %s31
      %s34 = ssub.s32 %s21, %s33
      %s35 = ssub.s32 %s22, %s29
      %s36 = sor.u32 %s34, %s35
      %p37 = scmp.eq.s32.totalorder %s36, 0
      %s39 = sadd.s32 %s38, 1
      %s40 = scalar_select %p37, %s38, %s39
      %p43 = pneg %p37
      %p44 = scmp.eq.s32.totalorder %s14, 3
      %p45 = por %p43, %p44
      %p46 = scmp.ne.s32.totalorder %s38, %s41
      %p47 = scmp.eq.s32.totalorder %s14, 0
      %p48 = por %p46, %p47
      %p49 = scmp.ne.s32.totalorder %s38, %s41
      %p50 = scmp.eq.s32.totalorder %s19, 3
      %p51 = por %p49, %p50
      %p52 = scmp.ne.s32.totalorder %s41, %s42
      %p53 = scmp.eq.s32.totalorder %s19, 0
      %p54 = por %p52, %p53
      %p55 = scmp.ne.s32.totalorder %s41, %s42
      %p56 = scmp.eq.s32.totalorder %s20, 3
      %p57 = por %p55, %p56
      %p59 = scmp.ne.s32.totalorder %s42, %s58
      %p60 = scmp.eq.s32.totalorder %s20, 0
      %p61 = por %p59, %p60
      %s62 = ssub.s32 %s22, 1
      %p63 = scmp.gt.s32.totalorder %s62, 0
      %s64 = scalar_select %p63, %s62, 0
      %s65 = ssub.s32 %s29, 1
      %p66 = scmp.gt.s32.totalorder %s65, 0
      %s67 = scalar_select %p66, %s65, 0
      %s68 = ssub.s32 %s21, %s33
      %s69 = ssub.s32 %s64, %s67
      %s70 = sor.u32 %s68, %s69
      %p71 = scmp.eq.s32.totalorder %s70, 0
      %s73 = sadd.s32 %s72, 1
      %s74 = scalar_select %p71, %s72, %s73
      %p77 = pneg %p71
      %p78 = scmp.eq.s32.totalorder %s14, 3
      %p79 = por %p77, %p78
      %p80 = scmp.ne.s32.totalorder %s72, %s75
      %p81 = scmp.eq.s32.totalorder %s14, 0
      %p82 = por %p80, %p81
      %p83 = scmp.ne.s32.totalorder %s72, %s75
      %p84 = scmp.eq.s32.totalorder %s19, 3
      %p85 = por %p83, %p84
      %p86 = scmp.ne.s32.totalorder %s75, %s76
      %p87 = scmp.eq.s32.totalorder %s19, 0
      %p88 = por %p86, %p87
      %p89 = scmp.ne.s32.totalorder %s75, %s76
      %p90 = scmp.eq.s32.totalorder %s20, 3
      %p91 = por %p89, %p90
      %p93 = scmp.ne.s32.totalorder %s76, %s92
      %p94 = scmp.eq.s32.totalorder %s20, 0
      %p95 = por %p93, %p94
      %s96 = sadd.s32 %s22, 1
      %p97 = scmp.lt.s32.totalorder %s96, 1
      %s98 = scalar_select %p97, %s96, 1
      %s99 = sadd.s32 %s29, 1
      %p100 = scmp.lt.s32.totalorder %s99, 1
      %s101 = scalar_select %p100, %s99, 1
      %s102 = ssub.s32 %s21, %s33
      %s103 = ssub.s32 %s98, %s101
      %s104 = sor.u32 %s102, %s103
      %p105 = scmp.eq.s32.totalorder %s104, 0
      %s107 = sadd.s32 %s106, 1
      %s108 = scalar_select %p105, %s106, %s107
      %p111 = pneg %p105
      %p112 = scmp.eq.s32.totalorder %s14, 3
      %p113 = por %p111, %p112
      %p114 = scmp.ne.s32.totalorder %s106, %s109
      %p115 = scmp.eq.s32.totalorder %s14, 0
      %p116 = por %p114, %p115
      %p117 = scmp.ne.s32.totalorder %s106, %s109
      %p118 = scmp.eq.s32.totalorder %s19, 3
      %p119 = por %p117, %p118
      %p120 = scmp.ne.s32.totalorder %s109, %s110
      %p121 = scmp.eq.s32.totalorder %s19, 0
      %p122 = por %p120, %p121
      %p123 = scmp.ne.s32.totalorder %s109, %s110
      %p124 = scmp.eq.s32.totalorder %s20, 3
      %p125 = por %p123, %p124
      %p127 = scmp.ne.s32.totalorder %s110, %s126
      %p128 = scmp.eq.s32.totalorder %s20, 0
      %p129 = por %p127, %p128
      %s131 = sadd.s32 %s130, 1
      %p134 = scmp.eq.s32.totalorder %s14, 3
      %p135 = scmp.ne.s32.totalorder %s130, %s132
      %p136 = scmp.eq.s32.totalorder %s14, 0
      %p137 = por %p135, %p136
      %p138 = scmp.ne.s32.totalorder %s130, %s132
      %p139 = scmp.eq.s32.totalorder %s19, 3
      %p140 = por %p138, %p139
      %p141 = scmp.ne.s32.totalorder %s132, %s133
      %p142 = scmp.eq.s32.totalorder %s19, 0
      %p143 = por %p141, %p142
      %p144 = scmp.ne.s32.totalorder %s132, %s133
      %p145 = scmp.eq.s32.totalorder %s20, 3
      %p146 = por %p144, %p145
      %p148 = scmp.ne.s32.totalorder %s133, %s147
      %p149 = scmp.eq.s32.totalorder %s20, 0
      %p150 = por %p148, %p149
      %s152 = sadd.s32 %s151, 1
      %p155 = scmp.eq.s32.totalorder %s14, 3
      %p156 = scmp.ne.s32.totalorder %s151, %s153
      %p157 = scmp.eq.s32.totalorder %s14, 0
      %p158 = por %p156, %p157
      %p159 = scmp.ne.s32.totalorder %s151, %s153
      %p160 = scmp.eq.s32.totalorder %s19, 3
      %p161 = por %p159, %p160
      %p162 = scmp.ne.s32.totalorder %s153, %s154
      %p163 = scmp.eq.s32.totalorder %s19, 0
      %p164 = por %p162, %p163
      %p165 = scmp.ne.s32.totalorder %s153, %s154
      %p166 = scmp.eq.s32.totalorder %s20, 3
      %p167 = por %p165, %p166
      %p169 = scmp.ne.s32.totalorder %s154, %s168
      %p170 = scmp.eq.s32.totalorder %s20, 0
      %p171 = por %p169, %p170
      %s173 = sadd.s32 %s172, 1
      %p176 = scmp.eq.s32.totalorder %s14, 3
      %p177 = scmp.ne.s32.totalorder %s172, %s174
      %p178 = scmp.eq.s32.totalorder %s14, 0
      %p179 = por %p177, %p178
      %p180 = scmp.ne.s32.totalorder %s172, %s174
      %p181 = scmp.eq.s32.totalorder %s19, 3
      %p182 = por %p180, %p181
      %p183 = scmp.ne.s32.totalorder %s174, %s175
      %p184 = scmp.eq.s32.totalorder %s19, 0
      %p185 = por %p183, %p184
      %p186 = scmp.ne.s32.totalorder %s174, %s175
      %p187 = scmp.eq.s32.totalorder %s20, 3
      %p188 = por %p186, %p187
      %p190 = scmp.ne.s32.totalorder %s175, %s189
      %p191 = scmp.eq.s32.totalorder %s20, 0
      %p192 = por %p190, %p191
      %s194 = sadd.s32 %s193, 1
      %p197 = scmp.eq.s32.totalorder %s14, 3
      %p198 = scmp.ne.s32.totalorder %s193, %s195
      %p199 = scmp.eq.s32.totalorder %s14, 0
      %p200 = por %p198, %p199
      %p201 = scmp.ne.s32.totalorder %s193, %s195
      %p202 = scmp.eq.s32.totalorder %s19, 3
      %p203 = por %p201, %p202
      %p204 = scmp.ne.s32.totalorder %s195, %s196
      %p205 = scmp.eq.s32.totalorder %s19, 0
      %p206 = por %p204, %p205
      %p207 = scmp.ne.s32.totalorder %s195, %s196
      %p208 = scmp.eq.s32.totalorder %s20, 3
      %p209 = por %p207, %p208
      %p211 = scmp.ne.s32.totalorder %s196, %s210
      %p212 = scmp.eq.s32.totalorder %s20, 0
      %p213 = por %p211, %p212
      %s215 = sadd.s32 %s214, 1
      %p218 = scmp.eq.s32.totalorder %s14, 3
      %p219 = scmp.ne.s32.totalorder %s214, %s216
      %p220 = scmp.eq.s32.totalorder %s14, 0
      %p221 = por %p219, %p220
      %p222 = scmp.ne.s32.totalorder %s214, %s216
      %p223 = scmp.eq.s32.totalorder %s19, 3
      %p224 = por %p222, %p223
      %p225 = scmp.ne.s32.totalorder %s216, %s217
      %p226 = scmp.eq.s32.totalorder %s19, 0
      %p227 = por %p225, %p226
      %p228 = scmp.ne.s32.totalorder %s216, %s217
      %p229 = scmp.eq.s32.totalorder %s20, 3
      %p230 = por %p228, %p229
      %p232 = scmp.ne.s32.totalorder %s217, %s231
      %p233 = scmp.eq.s32.totalorder %s20, 0
      %p234 = por %p232, %p233
      %s235 = ssub.s32 %s21, %s33
      %s236 = ssub.s32 %s22, %s29
      %s237 = sor.u32 %s235, %s236
      %p238 = scmp.eq.s32.totalorder %s237, 0
      %s240 = sadd.s32 %s239, 1
      %s241 = scalar_select %p238, %s239, %s240
      %p244 = pneg %p238
      %p245 = scmp.eq.s32.totalorder %s14, 3
      %p246 = por %p244, %p245
      %p247 = scmp.ne.s32.totalorder %s239, %s242
      %p248 = scmp.eq.s32.totalorder %s14, 0
      %p249 = por %p247, %p248
      %p250 = scmp.ne.s32.totalorder %s239, %s242
      %p251 = scmp.eq.s32.totalorder %s19, 3
      %p252 = por %p250, %p251
      %p253 = scmp.ne.s32.totalorder %s242, %s243
      %p254 = scmp.eq.s32.totalorder %s19, 0
      %p255 = por %p253, %p254
      %p256 = scmp.ne.s32.totalorder %s242, %s243
      %p257 = scmp.eq.s32.totalorder %s20, 3
      %p258 = por %p256, %p257
      %p260 = scmp.ne.s32.totalorder %s243, %s259
      %p261 = scmp.eq.s32.totalorder %s20, 0
      %p262 = por %p260, %p261
      %p263 = scmp.le.s32.totalorder 1, %s14
      %p264 = scmp.lt.s32.totalorder %s14, 5
      %p265 = pnand %p263, %p264
      %p266 = pneg %p265
      // Predicated region
      $region9: #{ghost_module_forward.1} parent=5 // pred_check
        _
      $region10: #{ghost_module_forward.1} parent=5 // pred_check_branch
        %268 = sbr.rel (%p265) target = $region12
      $region11: #{ghost_module_forward.1} parent=5 // pred_region
        %s269 = ssub.s32 %s14, 1
        // Predicated region
        $region13: #{ghost_module_forward.1} parent=11 // pred_check
          %p270 = pneg %p143
        $region14: #{ghost_module_forward.1} parent=11 // pred_check_branch
          %272 = sbr.rel (%p270) target = $region16
        $region15: #{ghost_module_forward.1} parent=11 // pred_region
          _
        $region16: #{ghost_module_forward.1} parent=11 // pred_fallthru
          _
        // Predicated region
        $region17: #{ghost_module_forward.1} parent=11 // pred_check
          %p273 = pneg %p164
        $region18: #{ghost_module_forward.1} parent=11 // pred_check_branch
          %275 = sbr.rel (%p273) target = $region20
        $region19: #{ghost_module_forward.1} parent=11 // pred_region
          _
        $region20: #{ghost_module_forward.1} parent=11 // pred_fallthru
          _
        // Predicated region
        $region21: #{ghost_module_forward.1} parent=11 // pred_check
          %p276 = pneg %p185
        $region22: #{ghost_module_forward.1} parent=11 // pred_check_branch
          %278 = sbr.rel (%p276) target = $region24
        $region23: #{ghost_module_forward.1} parent=11 // pred_region
          _
        $region24: #{ghost_module_forward.1} parent=11 // pred_fallthru
          _
        // Predicated region
        $region25: #{ghost_module_forward.1} parent=11 // pred_check
          %p279 = pneg %p206
        $region26: #{ghost_module_forward.1} parent=11 // pred_check_branch
          %281 = sbr.rel (%p279) target = $region28
        $region27: #{ghost_module_forward.1} parent=11 // pred_region
          _
        $region28: #{ghost_module_forward.1} parent=11 // pred_fallthru
          _
        // Predicated region
        $region29: #{ghost_module_forward.1} parent=11 // pred_check
          %p282 = pneg %p227
        $region30: #{ghost_module_forward.1} parent=11 // pred_check_branch
          %284 = sbr.rel (%p282) target = $region32
        $region31: #{ghost_module_forward.1} parent=11 // pred_region
          _
        $region32: #{ghost_module_forward.1} parent=11 // pred_fallthru
          _
      $region12: #{ghost_module_forward.1} parent=5 // pred_fallthru
        _
      %p285 = scmp.lt.s32.totalorder %s14, 4
      // Predicated region
      $region33: #{ghost_module_forward.1} parent=5 // pred_check
        %p286 = pneg %p285
      $region34: #{ghost_module_forward.1} parent=5 // pred_check_branch
        %288 = sbr.rel (%p286) target = $region36
      $region35: #{ghost_module_forward.1} parent=5 // pred_region
        // Predicated region
        $region37: #{ghost_module_forward.1} parent=35 // pred_check
          %p289 = pneg %p48
        $region38: #{ghost_module_forward.1} parent=35 // pred_check_branch
          %291 = sbr.rel (%p289) target = $region40
        $region39: #{ghost_module_forward.1} parent=35 // pred_region
          %s292 = sand.u32 %s38, 1
          %s293 = sand.u32 %s38, 1
          %s294 = smul.addr %s293, 32
          %s295 = scalar_lea.vmem [#allocation3], %s294
          %s296 = smul.addr %s21, 8
          %s297 = sadd.s32 %s22, %s296
          %s298 = smul.addr %s297, 8
          %s299 = scalar_lea.vmem %s0, %s298
          // Predicated region
          $region41: #{ghost_module_forward.1} parent=39 // pred_check
            _
          $region42: #{ghost_module_forward.1} parent=39 // pred_check_branch
            %301 = sbr.rel (0) target = $region44
          $region43: #{ghost_module_forward.1} parent=39 // pred_region
            // Predicated region
            $region45: #{ghost_module_forward.1} parent=43 // pred_check
              _
            $region46: #{ghost_module_forward.1} parent=43 // pred_check_branch
              %303 = sbr.rel (0) target = $region48
            $region47: #{ghost_module_forward.1} parent=43 // pred_region
              // Predicated region
              $region60: #{ghost_module_forward.1} parent=47 // pred_check
                _
              $region61: #{ghost_module_forward.1} parent=47 // pred_check_branch
                %325 = sbr.rel (0) target = $region63
              $region62: #{ghost_module_forward.1} parent=47 // pred_region
                loop: start=0, step=1, limit=1
                $region64: #{ghost_module_forward.1} parent=62 // loop_pre_header
                  _
                $region65: #{ghost_module_forward.1} parent=62 // loop_header
                  %s327 = sphi 0, %s331
                  %p328 = scmp.ge.s32.totalorder %s327, 1
                  %s332 = sphi %s299, %s299
                  %s333 = sphi %s295, %s295
                $region66: #{ghost_module_forward.1} parent=62 // loop_header_branch
                  %330 = sbr.rel (%p328) target = $region70
                $region67: #{ghost_module_forward.1} parent=62 // loop_body
                  %v334 = vld [vmem:[%s332] sm:$0xff]
                  %335 = vst [vmem:[%s333] sm:$0xff] %v334
                  %v336 = vld [vmem:[%s332 + $0x10] sm:$0xff]
                  %337 = vst [vmem:[%s333 + $0x8] sm:$0xff] %v336
                  %v338 = vld [vmem:[%s332 + $0x20] sm:$0xff]
                  %339 = vst [vmem:[%s333 + $0x10] sm:$0xff] %v338
                  %v340 = vld [vmem:[%s332 + $0x30] sm:$0xff]
                  %341 = vst [vmem:[%s333 + $0x18] sm:$0xff] %v340
                $region68: #{ghost_module_forward.1} parent=62 // loop_footer
                  %s331 = sadd.s32 1, %s327
                $region69: #{ghost_module_forward.1} parent=62 // loop_footer_branch
                  %326 = sbr.rel target = $region65
                $region70: #{ghost_module_forward.1} parent=62 // loop_exit
                  _
              $region63: #{ghost_module_forward.1} parent=47 // pred_fallthru
                _
              // Predicated region
              $region71: #{ghost_module_forward.1} parent=47 // pred_check
                _
              $region72: #{ghost_module_forward.1} parent=47 // pred_check_branch
                %343 = sbr.rel target = $region74
              $region73: #{ghost_module_forward.1} parent=47 // pred_region
                _
              $region74: #{ghost_module_forward.1} parent=47 // pred_fallthru
                _
            $region48: #{ghost_module_forward.1} parent=43 // pred_fallthru
              _
            // Predicated region
            $region49: #{ghost_module_forward.1} parent=43 // pred_check
              _
            $region50: #{ghost_module_forward.1} parent=43 // pred_check_branch
              %305 = sbr.rel target = $region52
            $region51: #{ghost_module_forward.1} parent=43 // pred_region
              %s307 = ssub.s32 256, 1
              loop: start=0, step=1, limit=1
              $region53: #{ghost_module_forward.1} parent=51 // loop_pre_header
                _
              $region54: #{ghost_module_forward.1} parent=51 // loop_header
                %s309 = sphi 0, %s313
                %p310 = scmp.ge.s32.totalorder %s309, 1
                %s314 = sphi %s299, %s299
                %s315 = sphi %s295, %s295
              $region55: #{ghost_module_forward.1} parent=51 // loop_header_branch
                %312 = sbr.rel (%p310) target = $region59
              $region56: #{ghost_module_forward.1} parent=51 // loop_body
                %v316 = vld [vmem:[%s314] sm:%s307]
                %317 = vst [vmem:[%s315] sm:%s307] %v316
                %v318 = vld [vmem:[%s314 + $0x10] sm:%s307]
                %319 = vst [vmem:[%s315 + $0x8] sm:%s307] %v318
                %v320 = vld [vmem:[%s314 + $0x20] sm:%s307]
                %321 = vst [vmem:[%s315 + $0x10] sm:%s307] %v320
                %v322 = vld [vmem:[%s314 + $0x30] sm:%s307]
                %323 = vst [vmem:[%s315 + $0x18] sm:%s307] %v322
              $region57: #{ghost_module_forward.1} parent=51 // loop_footer
                %s313 = sadd.s32 1, %s309
              $region58: #{ghost_module_forward.1} parent=51 // loop_footer_branch
                %308 = sbr.rel target = $region54
              $region59: #{ghost_module_forward.1} parent=51 // loop_exit
                _
            $region52: #{ghost_module_forward.1} parent=43 // pred_fallthru
              _
          $region44: #{ghost_module_forward.1} parent=39 // pred_fallthru
            _
          %344 = vnop
        $region40: #{ghost_module_forward.1} parent=35 // pred_fallthru
          _
        // Predicated region
        $region75: #{ghost_module_forward.1} parent=35 // pred_check
          %p345 = pneg %p82
        $region76: #{ghost_module_forward.1} parent=35 // pred_check_branch
          %347 = sbr.rel (%p345) target = $region78
        $region77: #{ghost_module_forward.1} parent=35 // pred_region
          %s348 = sand.u32 %s72, 1
          %s349 = sand.u32 %s72, 1
          %s350 = smul.addr %s349, 32
          %s351 = scalar_lea.vmem [#allocation4], %s350
          %s352 = ssub.s32 %s22, 1
          %p353 = scmp.gt.s32.totalorder %s352, 0
          %s354 = scalar_select %p353, %s352, 0
          %s355 = smul.addr %s21, 8
          %s356 = sadd.s32 %s354, %s355
          %s357 = smul.addr %s356, 8
          %s358 = scalar_lea.vmem %s1, %s357
          // Predicated region
          $region79: #{ghost_module_forward.1} parent=77 // pred_check
            _
          $region80: #{ghost_module_forward.1} parent=77 // pred_check_branch
            %360 = sbr.rel (0) target = $region82
          $region81: #{ghost_module_forward.1} parent=77 // pred_region
            // Predicated region
            $region83: #{ghost_module_forward.1} parent=81 // pred_check
              _
            $region84: #{ghost_module_forward.1} parent=81 // pred_check_branch
              %362 = sbr.rel (0) target = $region86
            $region85: #{ghost_module_forward.1} parent=81 // pred_region
              // Predicated region
              $region98: #{ghost_module_forward.1} parent=85 // pred_check
                _
              $region99: #{ghost_module_forward.1} parent=85 // pred_check_branch
                %384 = sbr.rel (0) target = $region101
              $region100: #{ghost_module_forward.1} parent=85 // pred_region
                loop: start=0, step=1, limit=1
                $region102: #{ghost_module_forward.1} parent=100 // loop_pre_header
                  _
                $region103: #{ghost_module_forward.1} parent=100 // loop_header
                  %s386 = sphi 0, %s390
                  %p387 = scmp.ge.s32.totalorder %s386, 1
                  %s391 = sphi %s358, %s358
                  %s392 = sphi %s351, %s351
                $region104: #{ghost_module_forward.1} parent=100 // loop_header_branch
                  %389 = sbr.rel (%p387) target = $region108
                $region105: #{ghost_module_forward.1} parent=100 // loop_body
                  %v393 = vld [vmem:[%s391] sm:$0xff]
                  %394 = vst [vmem:[%s392] sm:$0xff] %v393
                  %v395 = vld [vmem:[%s391 + $0x10] sm:$0xff]
                  %396 = vst [vmem:[%s392 + $0x8] sm:$0xff] %v395
                  %v397 = vld [vmem:[%s391 + $0x20] sm:$0xff]
                  %398 = vst [vmem:[%s392 + $0x10] sm:$0xff] %v397
                  %v399 = vld [vmem:[%s391 + $0x30] sm:$0xff]
                  %400 = vst [vmem:[%s392 + $0x18] sm:$0xff] %v399
                $region106: #{ghost_module_forward.1} parent=100 // loop_footer
                  %s390 = sadd.s32 1, %s386
                $region107: #{ghost_module_forward.1} parent=100 // loop_footer_branch
                  %385 = sbr.rel target = $region103
                $region108: #{ghost_module_forward.1} parent=100 // loop_exit
                  _
              $region101: #{ghost_module_forward.1} parent=85 // pred_fallthru
                _
              // Predicated region
              $region109: #{ghost_module_forward.1} parent=85 // pred_check
                _
              $region110: #{ghost_module_forward.1} parent=85 // pred_check_branch
                %402 = sbr.rel target = $region112
              $region111: #{ghost_module_forward.1} parent=85 // pred_region
                _
              $region112: #{ghost_module_forward.1} parent=85 // pred_fallthru
                _
            $region86: #{ghost_module_forward.1} parent=81 // pred_fallthru
              _
            // Predicated region
            $region87: #{ghost_module_forward.1} parent=81 // pred_check
              _
            $region88: #{ghost_module_forward.1} parent=81 // pred_check_branch
              %364 = sbr.rel target = $region90
            $region89: #{ghost_module_forward.1} parent=81 // pred_region
              %s366 = ssub.s32 256, 1
              loop: start=0, step=1, limit=1
              $region91: #{ghost_module_forward.1} parent=89 // loop_pre_header
                _
              $region92: #{ghost_module_forward.1} parent=89 // loop_header
                %s368 = sphi 0, %s372
                %p369 = scmp.ge.s32.totalorder %s368, 1
                %s373 = sphi %s358, %s358
                %s374 = sphi %s351, %s351
              $region93: #{ghost_module_forward.1} parent=89 // loop_header_branch
                %371 = sbr.rel (%p369) target = $region97
              $region94: #{ghost_module_forward.1} parent=89 // loop_body
                %v375 = vld [vmem:[%s373] sm:%s366]
                %376 = vst [vmem:[%s374] sm:%s366] %v375
                %v377 = vld [vmem:[%s373 + $0x10] sm:%s366]
                %378 = vst [vmem:[%s374 + $0x8] sm:%s366] %v377
                %v379 = vld [vmem:[%s373 + $0x20] sm:%s366]
                %380 = vst [vmem:[%s374 + $0x10] sm:%s366] %v379
                %v381 = vld [vmem:[%s373 + $0x30] sm:%s366]
                %382 = vst [vmem:[%s374 + $0x18] sm:%s366] %v381
              $region95: #{ghost_module_forward.1} parent=89 // loop_footer
                %s372 = sadd.s32 1, %s368
              $region96: #{ghost_module_forward.1} parent=89 // loop_footer_branch
                %367 = sbr.rel target = $region92
              $region97: #{ghost_module_forward.1} parent=89 // loop_exit
                _
            $region90: #{ghost_module_forward.1} parent=81 // pred_fallthru
              _
          $region82: #{ghost_module_forward.1} parent=77 // pred_fallthru
            _
          %403 = vnop
        $region78: #{ghost_module_forward.1} parent=35 // pred_fallthru
          _
        // Predicated region
        $region113: #{ghost_module_forward.1} parent=35 // pred_check
          %p404 = pneg %p116
        $region114: #{ghost_module_forward.1} parent=35 // pred_check_branch
          %406 = sbr.rel (%p404) target = $region116
        $region115: #{ghost_module_forward.1} parent=35 // pred_region
          %s407 = sand.u32 %s106, 1
          %s408 = sand.u32 %s106, 1
          %s409 = smul.addr %s408, 32
          %s410 = scalar_lea.vmem [#allocation5], %s409
          %s411 = sadd.s32 %s22, 1
          %p412 = scmp.lt.s32.totalorder %s411, 1
          %s413 = scalar_select %p412, %s411, 1
          %s414 = smul.addr %s21, 8
          %s415 = sadd.s32 %s413, %s414
          %s416 = smul.addr %s415, 8
          %s417 = scalar_lea.vmem %s2, %s416
          // Predicated region
          $region117: #{ghost_module_forward.1} parent=115 // pred_check
            _
          $region118: #{ghost_module_forward.1} parent=115 // pred_check_branch
            %419 = sbr.rel (0) target = $region120
          $region119: #{ghost_module_forward.1} parent=115 // pred_region
            // Predicated region
            $region121: #{ghost_module_forward.1} parent=119 // pred_check
              _
            $region122: #{ghost_module_forward.1} parent=119 // pred_check_branch
              %421 = sbr.rel (0) target = $region124
            $region123: #{ghost_module_forward.1} parent=119 // pred_region
              // Predicated region
              $region136: #{ghost_module_forward.1} parent=123 // pred_check
                _
              $region137: #{ghost_module_forward.1} parent=123 // pred_check_branch
                %443 = sbr.rel (0) target = $region139
              $region138: #{ghost_module_forward.1} parent=123 // pred_region
                loop: start=0, step=1, limit=1
                $region140: #{ghost_module_forward.1} parent=138 // loop_pre_header
                  _
                $region141: #{ghost_module_forward.1} parent=138 // loop_header
                  %s445 = sphi 0, %s449
                  %p446 = scmp.ge.s32.totalorder %s445, 1
                  %s450 = sphi %s417, %s417
                  %s451 = sphi %s410, %s410
                $region142: #{ghost_module_forward.1} parent=138 // loop_header_branch
                  %448 = sbr.rel (%p446) target = $region146
                $region143: #{ghost_module_forward.1} parent=138 // loop_body
                  %v452 = vld [vmem:[%s450] sm:$0xff]
                  %453 = vst [vmem:[%s451] sm:$0xff] %v452
                  %v454 = vld [vmem:[%s450 + $0x10] sm:$0xff]
                  %455 = vst [vmem:[%s451 + $0x8] sm:$0xff] %v454
                  %v456 = vld [vmem:[%s450 + $0x20] sm:$0xff]
                  %457 = vst [vmem:[%s451 + $0x10] sm:$0xff] %v456
                  %v458 = vld [vmem:[%s450 + $0x30] sm:$0xff]
                  %459 = vst [vmem:[%s451 + $0x18] sm:$0xff] %v458
                $region144: #{ghost_module_forward.1} parent=138 // loop_footer
                  %s449 = sadd.s32 1, %s445
                $region145: #{ghost_module_forward.1} parent=138 // loop_footer_branch
                  %444 = sbr.rel target = $region141
                $region146: #{ghost_module_forward.1} parent=138 // loop_exit
                  _
              $region139: #{ghost_module_forward.1} parent=123 // pred_fallthru
                _
              // Predicated region
              $region147: #{ghost_module_forward.1} parent=123 // pred_check
                _
              $region148: #{ghost_module_forward.1} parent=123 // pred_check_branch
                %461 = sbr.rel target = $region150
              $region149: #{ghost_module_forward.1} parent=123 // pred_region
                _
              $region150: #{ghost_module_forward.1} parent=123 // pred_fallthru
                _
            $region124: #{ghost_module_forward.1} parent=119 // pred_fallthru
              _
            // Predicated region
            $region125: #{ghost_module_forward.1} parent=119 // pred_check
              _
            $region126: #{ghost_module_forward.1} parent=119 // pred_check_branch
              %423 = sbr.rel target = $region128
            $region127: #{ghost_module_forward.1} parent=119 // pred_region
              %s425 = ssub.s32 256, 1
              loop: start=0, step=1, limit=1
              $region129: #{ghost_module_forward.1} parent=127 // loop_pre_header
                _
              $region130: #{ghost_module_forward.1} parent=127 // loop_header
                %s427 = sphi 0, %s431
                %p428 = scmp.ge.s32.totalorder %s427, 1
                %s432 = sphi %s417, %s417
                %s433 = sphi %s410, %s410
              $region131: #{ghost_module_forward.1} parent=127 // loop_header_branch
                %430 = sbr.rel (%p428) target = $region135
              $region132: #{ghost_module_forward.1} parent=127 // loop_body
                %v434 = vld [vmem:[%s432] sm:%s425]
                %435 = vst [vmem:[%s433] sm:%s425] %v434
                %v436 = vld [vmem:[%s432 + $0x10] sm:%s425]
                %437 = vst [vmem:[%s433 + $0x8] sm:%s425] %v436
                %v438 = vld [vmem:[%s432 + $0x20] sm:%s425]
                %439 = vst [vmem:[%s433 + $0x10] sm:%s425] %v438
                %v440 = vld [vmem:[%s432 + $0x30] sm:%s425]
                %441 = vst [vmem:[%s433 + $0x18] sm:%s425] %v440
              $region133: #{ghost_module_forward.1} parent=127 // loop_footer
                %s431 = sadd.s32 1, %s427
              $region134: #{ghost_module_forward.1} parent=127 // loop_footer_branch
                %426 = sbr.rel target = $region130
              $region135: #{ghost_module_forward.1} parent=127 // loop_exit
                _
            $region128: #{ghost_module_forward.1} parent=119 // pred_fallthru
              _
          $region120: #{ghost_module_forward.1} parent=115 // pred_fallthru
            _
          %462 = vnop
        $region116: #{ghost_module_forward.1} parent=35 // pred_fallthru
          _
      $region36: #{ghost_module_forward.1} parent=5 // pred_fallthru
        _
      %p463 = scmp.le.s32.totalorder 1, %s14
      %p464 = scmp.lt.s32.totalorder %s14, 5
      %p465 = pnand %p463, %p464
      %p466 = pneg %p465
      // Predicated region
      $region151: #{ghost_module_forward.1} parent=5 // pred_check
        _
      $region152: #{ghost_module_forward.1} parent=5 // pred_check_branch
        %468 = sbr.rel (%p465) target = $region154
      $region153: #{ghost_module_forward.1} parent=5 // pred_region
        %s469 = ssub.s32 %s14, 1
        %s470 = sand.u32 %s41, 1
        %s471 = sand.u32 %s41, 1
        %s472 = smul.addr %s471, 32
        %s473 = scalar_lea.vmem [#allocation3], %s472
        // Predicated region
        $region155: #{ghost_module_forward.1} parent=153 // pred_check
          %p474 = pneg %p54
        $region156: #{ghost_module_forward.1} parent=153 // pred_check_branch
          %476 = sbr.rel (%p474) target = $region158
        $region157: #{ghost_module_forward.1} parent=153 // pred_region
          _
        $region158: #{ghost_module_forward.1} parent=153 // pred_fallthru
          _
        %s477 = sand.u32 %s75, 1
        %s478 = sand.u32 %s75, 1
        %s479 = smul.addr %s478, 32
        %s480 = scalar_lea.vmem [#allocation4], %s479
        // Predicated region
        $region159: #{ghost_module_forward.1} parent=153 // pred_check
          %p481 = pneg %p88
        $region160: #{ghost_module_forward.1} parent=153 // pred_check_branch
          %483 = sbr.rel (%p481) target = $region162
        $region161: #{ghost_module_forward.1} parent=153 // pred_region
          _
        $region162: #{ghost_module_forward.1} parent=153 // pred_fallthru
          _
        %s484 = sand.u32 %s109, 1
        %s485 = sand.u32 %s109, 1
        %s486 = smul.addr %s485, 32
        %s487 = scalar_lea.vmem [#allocation5], %s486
        // Predicated region
        $region163: #{ghost_module_forward.1} parent=153 // pred_check
          %p488 = pneg %p122
        $region164: #{ghost_module_forward.1} parent=153 // pred_check_branch
          %490 = sbr.rel (%p488) target = $region166
        $region165: #{ghost_module_forward.1} parent=153 // pred_region
          _
        $region166: #{ghost_module_forward.1} parent=153 // pred_fallthru
          _
        %s491 = sand.u32 %s41, 1
        %s492 = sand.u32 %s41, 1
        %s493 = smul.addr %s492, 32
        %s494 = scalar_lea.vmem [#allocation3], %s493
        %p495 = pneg %p54
        %p496 = pneg %p51
        %s497 = sand.u32 %s75, 1
        %s498 = sand.u32 %s75, 1
        %s499 = smul.addr %s498, 32
        %s500 = scalar_lea.vmem [#allocation4], %s499
        %p501 = pneg %p88
        %p502 = pneg %p85
        %s503 = sand.u32 %s109, 1
        %s504 = sand.u32 %s109, 1
        %s505 = smul.addr %s504, 32
        %s506 = scalar_lea.vmem [#allocation5], %s505
        %p507 = pneg %p122
        %p508 = pneg %p119
        %p509 = pneg %p143
        %p510 = pneg %p140
        %p511 = pneg %p164
        %p512 = pneg %p161
        %p513 = pneg %p185
        %p514 = pneg %p182
        %p515 = pneg %p206
        %p516 = pneg %p203
        %p517 = pneg %p227
        %p518 = pneg %p224
        %p519 = pneg %p255
        %p520 = pneg %p252
        %s521 = sand.u32 %s242, 1
        %s522 = sand.u32 %s242, 1
        %s523 = smul.addr %s522, 64
        %s524 = scalar_lea.vmem [#allocation6], %s523
        %s525 = ssub.s32 %s24, 1
        %p526 = scmp.gt.s32.totalorder %s525, 0
        %s527 = scalar_select %p526, %s525, 0
        %s528 = sadd.s32 %s24, 1
        %p529 = scmp.lt.s32.totalorder %s528, 1
        %s530 = scalar_select %p529, %s528, 1
        %v531 = vld [vmem:[%s3] sm:$0xf]
        %v532 = vld [vmem:[%s4] sm:$0xf]
        %v533 = vld [vmem:[%s473] sm:$0x1]
        %v534 = vld [vmem:[%s473 + $0x8] sm:$0x1]
        %v535 = vld [vmem:[%s473 + $0x10] sm:$0x1]
        %v536 = vld [vmem:[%s473 + $0x18] sm:$0x1]
        %538 = vset.pattern.permute.xlu0 0
        %539 = vperm.xlu0 %538, %v531
        %v540 = vpop.permute.xlu0 %539
        %v542 = vperm.slane %v533, 0
        %v543 = vmul.f32 %v540, %v542
        %544 = vset.pattern.permute.xlu0 1
        %545 = vperm.xlu0 %544, %v531
        %v546 = vpop.permute.xlu0 %545
        %v548 = vperm.slane %v534, 0
        %v549 = vmul.f32 %v546, %v548
        %v550 = vadd.f32 %v543, %v549
        %551 = vset.pattern.permute.xlu0 2
        %552 = vperm.xlu0 %551, %v531
        %v553 = vpop.permute.xlu0 %552
        %v555 = vperm.slane %v535, 0
        %v556 = vmul.f32 %v553, %v555
        %v557 = vadd.f32 %v550, %v556
        %558 = vset.pattern.permute.xlu0 3
        %559 = vperm.xlu0 %558, %v531
        %v560 = vpop.permute.xlu0 %559
        %v562 = vperm.slane %v536, 0
        %v563 = vmul.f32 %v560, %v562
        %v564 = vadd.f32 %v557, %v563
        %566 = vset.pattern.permute.xlu0 0
        %567 = vperm.xlu0 %566, %v532
        %v568 = vpop.permute.xlu0 %567
        %v570 = vadd.f32 %v564, %v568
        %v571 = vmax.f32 %v570, 0.0
        %s572 = scalar_lea.vmem [#allocation2], 4
        %vm573 = vcmask 519168
        %574 = vst.msk [vmem:[%s572] sm:$0xf] %vm573, %v571
        %v576 = vrot.slane %v571, 1
        %v577 = vrot.slane %v571, 2
        %v578 = vrot.slane %v571, 3
        %vm582 = vcmask 516096
        %583 = vst.msk [vmem:[%s524] sm:$0x1] %vm582, %v571
        %584 = vst.msk [vmem:[%s524 + $0x8] sm:$0x1] %vm582, %v576
        %585 = vst.msk [vmem:[%s524 + $0x10] sm:$0x1] %vm582, %v577
        %586 = vst.msk [vmem:[%s524 + $0x18] sm:$0x1] %vm582, %v578
        %v587 = vld [vmem:[%s473 + $0x1] sm:$0x1]
        %v588 = vld [vmem:[%s473 + $0x9] sm:$0x1]
        %v589 = vld [vmem:[%s473 + $0x11] sm:$0x1]
        %v590 = vld [vmem:[%s473 + $0x19] sm:$0x1]
        %v591 = vperm.slane %v587, 0
        %v592 = vmul.f32 %v540, %v591
        %v593 = vperm.slane %v588, 0
        %v594 = vmul.f32 %v546, %v593
        %v595 = vadd.f32 %v592, %v594
        %v596 = vperm.slane %v589, 0
        %v597 = vmul.f32 %v553, %v596
        %v598 = vadd.f32 %v595, %v597
        %v599 = vperm.slane %v590, 0
        %v600 = vmul.f32 %v560, %v599
        %v601 = vadd.f32 %v598, %v600
        %v602 = vadd.f32 %v601, %v568
        %v603 = vmax.f32 %v602, 0.0
        %s604 = scalar_lea.vmem [#allocation2], 8
        %605 = vst.msk [vmem:[%s604] sm:$0xf] %vm573, %v603
        %v607 = vrot.slane %v603, 1
        %v608 = vrot.slane %v603, 2
        %v609 = vrot.slane %v603, 3
        %613 = vst.msk [vmem:[%s524 + $0x1] sm:$0x1] %vm582, %v603
        %614 = vst.msk [vmem:[%s524 + $0x9] sm:$0x1] %vm582, %v607
        %615 = vst.msk [vmem:[%s524 + $0x11] sm:$0x1] %vm582, %v608
        %616 = vst.msk [vmem:[%s524 + $0x19] sm:$0x1] %vm582, %v609
        %v617 = vld [vmem:[%s473 + $0x2] sm:$0x1]
        %v618 = vld [vmem:[%s473 + $0xa] sm:$0x1]
        %v619 = vld [vmem:[%s473 + $0x12] sm:$0x1]
        %v620 = vld [vmem:[%s473 + $0x1a] sm:$0x1]
        %v621 = vperm.slane %v617, 0
        %v622 = vmul.f32 %v540, %v621
        %v623 = vperm.slane %v618, 0
        %v624 = vmul.f32 %v546, %v623
        %v625 = vadd.f32 %v622, %v624
        %v626 = vperm.slane %v619, 0
        %v627 = vmul.f32 %v553, %v626
        %v628 = vadd.f32 %v625, %v627
        %v629 = vperm.slane %v620, 0
        %v630 = vmul.f32 %v560, %v629
        %v631 = vadd.f32 %v628, %v630
        %v632 = vadd.f32 %v631, %v568
        %v633 = vmax.f32 %v632, 0.0
        %s634 = scalar_lea.vmem [#allocation2], 12
        %635 = vst.msk [vmem:[%s634] sm:$0xf] %vm573, %v633
        %v637 = vrot.slane %v633, 1
        %v638 = vrot.slane %v633, 2
        %v639 = vrot.slane %v633, 3
        %643 = vst.msk [vmem:[%s524 + $0x2] sm:$0x1] %vm582, %v633
        %644 = vst.msk [vmem:[%s524 + $0xa] sm:$0x1] %vm582, %v637
        %645 = vst.msk [vmem:[%s524 + $0x12] sm:$0x1] %vm582, %v638
        %646 = vst.msk [vmem:[%s524 + $0x1a] sm:$0x1] %vm582, %v639
        %v647 = vld [vmem:[%s473 + $0x3] sm:$0x1]
        %v648 = vld [vmem:[%s473 + $0xb] sm:$0x1]
        %v649 = vld [vmem:[%s473 + $0x13] sm:$0x1]
        %v650 = vld [vmem:[%s473 + $0x1b] sm:$0x1]
        %v651 = vperm.slane %v647, 0
        %v652 = vmul.f32 %v540, %v651
        %v653 = vperm.slane %v648, 0
        %v654 = vmul.f32 %v546, %v653
        %v655 = vadd.f32 %v652, %v654
        %v656 = vperm.slane %v649, 0
        %v657 = vmul.f32 %v553, %v656
        %v658 = vadd.f32 %v655, %v657
        %v659 = vperm.slane %v650, 0
        %v660 = vmul.f32 %v560, %v659
        %v661 = vadd.f32 %v658, %v660
        %v662 = vadd.f32 %v661, %v568
        %v663 = vmax.f32 %v662, 0.0
        %s664 = scalar_lea.vmem [#allocation2], 16
        %665 = vst.msk [vmem:[%s664] sm:$0xf] %vm573, %v663
        %v667 = vrot.slane %v663, 1
        %v668 = vrot.slane %v663, 2
        %v669 = vrot.slane %v663, 3
        %673 = vst.msk [vmem:[%s524 + $0x3] sm:$0x1] %vm582, %v663
        %674 = vst.msk [vmem:[%s524 + $0xb] sm:$0x1] %vm582, %v667
        %675 = vst.msk [vmem:[%s524 + $0x13] sm:$0x1] %vm582, %v668
        %676 = vst.msk [vmem:[%s524 + $0x1b] sm:$0x1] %vm582, %v669
        %v677 = vld [vmem:[%s473 + $0x4] sm:$0x1]
        %v678 = vld [vmem:[%s473 + $0xc] sm:$0x1]
        %v679 = vld [vmem:[%s473 + $0x14] sm:$0x1]
        %v680 = vld [vmem:[%s473 + $0x1c] sm:$0x1]
        %v681 = vperm.slane %v677, 0
        %v682 = vmul.f32 %v540, %v681
        %v683 = vperm.slane %v678, 0
        %v684 = vmul.f32 %v546, %v683
        %v685 = vadd.f32 %v682, %v684
        %v686 = vperm.slane %v679, 0
        %v687 = vmul.f32 %v553, %v686
        %v688 = vadd.f32 %v685, %v687
        %v689 = vperm.slane %v680, 0
        %v690 = vmul.f32 %v560, %v689
        %v691 = vadd.f32 %v688, %v690
        %v692 = vadd.f32 %v691, %v568
        %v693 = vmax.f32 %v692, 0.0
        %s694 = scalar_lea.vmem [#allocation2], 20
        %695 = vst.msk [vmem:[%s694] sm:$0xf] %vm573, %v693
        %v697 = vrot.slane %v693, 1
        %v698 = vrot.slane %v693, 2
        %v699 = vrot.slane %v693, 3
        %703 = vst.msk [vmem:[%s524 + $0x4] sm:$0x1] %vm582, %v693
        %704 = vst.msk [vmem:[%s524 + $0xc] sm:$0x1] %vm582, %v697
        %705 = vst.msk [vmem:[%s524 + $0x14] sm:$0x1] %vm582, %v698
        %706 = vst.msk [vmem:[%s524 + $0x1c] sm:$0x1] %vm582, %v699
        %v707 = vld [vmem:[%s473 + $0x5] sm:$0x1]
        %v708 = vld [vmem:[%s473 + $0xd] sm:$0x1]
        %v709 = vld [vmem:[%s473 + $0x15] sm:$0x1]
        %v710 = vld [vmem:[%s473 + $0x1d] sm:$0x1]
        %v711 = vperm.slane %v707, 0
        %v712 = vmul.f32 %v540, %v711
        %v713 = vperm.slane %v708, 0
        %v714 = vmul.f32 %v546, %v713
        %v715 = vadd.f32 %v712, %v714
        %v716 = vperm.slane %v709, 0
        %v717 = vmul.f32 %v553, %v716
        %v718 = vadd.f32 %v715, %v717
        %v719 = vperm.slane %v710, 0
        %v720 = vmul.f32 %v560, %v719
        %v721 = vadd.f32 %v718, %v720
        %v722 = vadd.f32 %v721, %v568
        %v723 = vmax.f32 %v722, 0.0
        %s724 = scalar_lea.vmem [#allocation2], 24
        %725 = vst.msk [vmem:[%s724] sm:$0xf] %vm573, %v723
        %v727 = vrot.slane %v723, 1
        %v728 = vrot.slane %v723, 2
        %v729 = vrot.slane %v723, 3
        %733 = vst.msk [vmem:[%s524 + $0x5] sm:$0x1] %vm582, %v723
        %734 = vst.msk [vmem:[%s524 + $0xd] sm:$0x1] %vm582, %v727
        %735 = vst.msk [vmem:[%s524 + $0x15] sm:$0x1] %vm582, %v728
        %736 = vst.msk [vmem:[%s524 + $0x1d] sm:$0x1] %vm582, %v729
        %v737 = vld [vmem:[%s473 + $0x6] sm:$0x1]
        %v738 = vld [vmem:[%s473 + $0xe] sm:$0x1]
        %v739 = vld [vmem:[%s473 + $0x16] sm:$0x1]
        %v740 = vld [vmem:[%s473 + $0x1e] sm:$0x1]
        %v741 = vperm.slane %v737, 0
        %v742 = vmul.f32 %v540, %v741
        %v743 = vperm.slane %v738, 0
        %v744 = vmul.f32 %v546, %v743
        %v745 = vadd.f32 %v742, %v744
        %v746 = vperm.slane %v739, 0
        %v747 = vmul.f32 %v553, %v746
        %v748 = vadd.f32 %v745, %v747
        %v749 = vperm.slane %v740, 0
        %v750 = vmul.f32 %v560, %v749
        %v751 = vadd.f32 %v748, %v750
        %v752 = vadd.f32 %v751, %v568
        %v753 = vmax.f32 %v752, 0.0
        %s754 = scalar_lea.vmem [#allocation2], 28
        %755 = vst.msk [vmem:[%s754] sm:$0xf] %vm573, %v753
        %v757 = vrot.slane %v753, 1
        %v758 = vrot.slane %v753, 2
        %v759 = vrot.slane %v753, 3
        %763 = vst.msk [vmem:[%s524 + $0x6] sm:$0x1] %vm582, %v753
        %764 = vst.msk [vmem:[%s524 + $0xe] sm:$0x1] %vm582, %v757
        %765 = vst.msk [vmem:[%s524 + $0x16] sm:$0x1] %vm582, %v758
        %766 = vst.msk [vmem:[%s524 + $0x1e] sm:$0x1] %vm582, %v759
        %v767 = vld [vmem:[%s473 + $0x7] sm:$0x1]
        %v768 = vld [vmem:[%s473 + $0xf] sm:$0x1]
        %v769 = vld [vmem:[%s473 + $0x17] sm:$0x1]
        %v770 = vld [vmem:[%s473 + $0x1f] sm:$0x1]
        %v771 = vperm.slane %v767, 0
        %v772 = vmul.f32 %v540, %v771
        %v773 = vperm.slane %v768, 0
        %v774 = vmul.f32 %v546, %v773
        %v775 = vadd.f32 %v772, %v774
        %v776 = vperm.slane %v769, 0
        %v777 = vmul.f32 %v553, %v776
        %v778 = vadd.f32 %v775, %v777
        %v779 = vperm.slane %v770, 0
        %v780 = vmul.f32 %v560, %v779
        %v781 = vadd.f32 %v778, %v780
        %v782 = vadd.f32 %v781, %v568
        %v783 = vmax.f32 %v782, 0.0
        %s784 = scalar_lea.vmem [#allocation2], 32
        %785 = vst.msk [vmem:[%s784] sm:$0xf] %vm573, %v783
        %v787 = vrot.slane %v783, 1
        %v788 = vrot.slane %v783, 2
        %v789 = vrot.slane %v783, 3
        %793 = vst.msk [vmem:[%s524 + $0x7] sm:$0x1] %vm582, %v783
        %794 = vst.msk [vmem:[%s524 + $0xf] sm:$0x1] %vm582, %v787
        %795 = vst.msk [vmem:[%s524 + $0x17] sm:$0x1] %vm582, %v788
        %796 = vst.msk [vmem:[%s524 + $0x1f] sm:$0x1] %vm582, %v789
        %v797 = vld [vmem:[%s480 + $0x7] sm:$0x1]
        %v798 = vld [vmem:[%s480 + $0xf] sm:$0x1]
        %v799 = vld [vmem:[%s480 + $0x17] sm:$0x1]
        %v800 = vld [vmem:[%s480 + $0x1f] sm:$0x1]
        %v801 = vperm.slane %v797, 0
        %v802 = vmul.f32 %v540, %v801
        %v803 = vperm.slane %v798, 0
        %v804 = vmul.f32 %v546, %v803
        %v805 = vadd.f32 %v802, %v804
        %v806 = vperm.slane %v799, 0
        %v807 = vmul.f32 %v553, %v806
        %v808 = vadd.f32 %v805, %v807
        %v809 = vperm.slane %v800, 0
        %v810 = vmul.f32 %v560, %v809
        %v811 = vadd.f32 %v808, %v810
        %v812 = vadd.f32 %v811, %v568
        %v813 = vmax.f32 %v812, 0.0
        %814 = vst.msk [vmem:[#allocation2] sm:$0xf] %vm573, %v813
        %v815 = vld [vmem:[%s487] sm:$0x1]
        %v816 = vld [vmem:[%s487 + $0x8] sm:$0x1]
        %v817 = vld [vmem:[%s487 + $0x10] sm:$0x1]
        %v818 = vld [vmem:[%s487 + $0x18] sm:$0x1]
        %v819 = vperm.slane %v815, 0
        %v820 = vmul.f32 %v540, %v819
        %v821 = vperm.slane %v816, 0
        %v822 = vmul.f32 %v546, %v821
        %v823 = vadd.f32 %v820, %v822
        %v824 = vperm.slane %v817, 0
        %v825 = vmul.f32 %v553, %v824
        %v826 = vadd.f32 %v823, %v825
        %v827 = vperm.slane %v818, 0
        %v828 = vmul.f32 %v560, %v827
        %v829 = vadd.f32 %v826, %v828
        %v830 = vadd.f32 %v829, %v568
        %v831 = vmax.f32 %v830, 0.0
        %s832 = scalar_lea.vmem [#allocation2], 36
        %833 = vst.msk [vmem:[%s832] sm:$0xf] %vm573, %v831
        %p834 = scmp.eq.s32.totalorder %s24, 0
        // Predicated region
        $region167: #{ghost_module_forward.1} parent=153 // pred_check
          %p835 = pneg %p834
        $region168: #{ghost_module_forward.1} parent=153 // pred_check_branch
          %837 = sbr.rel (%p835) target = $region170
        $region169: #{ghost_module_forward.1} parent=153 // pred_region
          %838 = vst.msk [vmem:[#allocation2] sm:$0xf] %vm573, 0.0
        $region170: #{ghost_module_forward.1} parent=153 // pred_fallthru
          _
        %p839 = scmp.eq.s32.totalorder %s24, 1
        // Predicated region
        $region171: #{ghost_module_forward.1} parent=153 // pred_check
          %p840 = pneg %p839
        $region172: #{ghost_module_forward.1} parent=153 // pred_check_branch
          %842 = sbr.rel (%p840) target = $region174
        $region173: #{ghost_module_forward.1} parent=153 // pred_region
          %843 = vst.msk [vmem:[%s832] sm:$0xf] %vm573, 0.0
        $region174: #{ghost_module_forward.1} parent=153 // pred_fallthru
          _
        %v844 = vld [vmem:[#allocation2] sm:$0xf]
        %v845 = vld [vmem:[#allocation2 + $0x4] sm:$0xf]
        %v846 = vld [vmem:[#allocation2 + $0x8] sm:$0xf]
        %v847 = vld [vmem:[#allocation2 + $0xc] sm:$0xf]
        %v848 = vld [vmem:[#allocation2 + $0x10] sm:$0xf]
        %v849 = vld [vmem:[#allocation2 + $0x14] sm:$0xf]
        %v850 = vld [vmem:[#allocation2 + $0x18] sm:$0xf]
        %v851 = vld [vmem:[#allocation2 + $0x1c] sm:$0xf]
        %v852 = vld [vmem:[#allocation2 + $0x20] sm:$0xf]
        %v853 = vld [vmem:[#allocation2 + $0x24] sm:$0xf]
        %vm854 = vcmask 1048064
        %855 = vrot.lane.b32.xlu0 %v844, 64
        %v856 = vpop.permute.xlu0 %855
        %v857 = vsel %vm854, %v856, %v844
        %858 = vrot.lane.b32.xlu0 %v845, 64
        %v859 = vpop.permute.xlu0 %858
        %v860 = vsel %vm854, %v859, %v845
        %861 = vrot.lane.b32.xlu0 %v846, 64
        %v862 = vpop.permute.xlu0 %861
        %v863 = vsel %vm854, %v862, %v846
        %864 = vrot.lane.b32.xlu0 %v847, 64
        %v865 = vpop.permute.xlu0 %864
        %v866 = vsel %vm854, %v865, %v847
        %867 = vrot.lane.b32.xlu0 %v848, 64
        %v868 = vpop.permute.xlu0 %867
        %v869 = vsel %vm854, %v868, %v848
        %870 = vrot.lane.b32.xlu0 %v849, 64
        %v871 = vpop.permute.xlu0 %870
        %v872 = vsel %vm854, %v871, %v849
        %873 = vrot.lane.b32.xlu0 %v850, 64
        %v874 = vpop.permute.xlu0 %873
        %v875 = vsel %vm854, %v874, %v850
        %876 = vrot.lane.b32.xlu0 %v851, 64
        %v877 = vpop.permute.xlu0 %876
        %v878 = vsel %vm854, %v877, %v851
        %879 = vrot.lane.b32.xlu0 %v852, 64
        %v880 = vpop.permute.xlu0 %879
        %v881 = vsel %vm854, %v880, %v852
        %882 = vrot.lane.b32.xlu0 %v853, 64
        %v883 = vpop.permute.xlu0 %882
        %v884 = vsel %vm854, %v883, %v853
        %885 = vrot.lane.b32.xlu0 %v857, 64
        %v886 = vpop.permute.xlu0 %885
        %887 = vrot.lane.b32.xlu0 %v860, 64
        %v888 = vpop.permute.xlu0 %887
        %889 = vrot.lane.b32.xlu0 %v863, 64
        %v890 = vpop.permute.xlu0 %889
        %891 = vrot.lane.b32.xlu0 %v866, 64
        %v892 = vpop.permute.xlu0 %891
        %893 = vrot.lane.b32.xlu0 %v869, 64
        %v894 = vpop.permute.xlu0 %893
        %895 = vrot.lane.b32.xlu0 %v872, 64
        %v896 = vpop.permute.xlu0 %895
        %897 = vrot.lane.b32.xlu0 %v875, 64
        %v898 = vpop.permute.xlu0 %897
        %899 = vrot.lane.b32.xlu0 %v878, 64
        %v900 = vpop.permute.xlu0 %899
        %901 = vrot.lane.b32.xlu0 %v881, 64
        %v902 = vpop.permute.xlu0 %901
        %903 = vrot.lane.b32.xlu0 %v884, 64
        %v904 = vpop.permute.xlu0 %903
        %v905 = vsel %vm854, %v886, %v844
        %v906 = vsel %vm854, %v888, %v845
        %v907 = vsel %vm854, %v890, %v846
        %v908 = vsel %vm854, %v892, %v847
        %v909 = vsel %vm854, %v894, %v848
        %v910 = vsel %vm854, %v896, %v849
        %v911 = vsel %vm854, %v898, %v850
        %v912 = vsel %vm854, %v900, %v851
        %v913 = vsel %vm854, %v902, %v852
        %v914 = vsel %vm854, %v904, %v853
        %v915 = vld [vmem:[%s7] sm:$0x1]
        %v917 = vperm.slane %v915, 0
        %918 = vrot.lane.b32.xlu0 %v917, 55
        %v919 = vpop.permute.xlu0 %918
        %v921 = vmul.f32 %v905, %v919
        %v922 = vmul.f32 %v906, %v919
        %v923 = vmul.f32 %v907, %v919
        %v924 = vmul.f32 %v908, %v919
        %v925 = vmul.f32 %v909, %v919
        %v926 = vmul.f32 %v910, %v919
        %v927 = vmul.f32 %v911, %v919
        %v928 = vmul.f32 %v912, %v919
        %v929 = vmul.f32 %v913, %v919
        %v930 = vmul.f32 %v914, %v919
        %v931 = vld [vmem:[%s5] sm:$0xf]
        %933 = vset.pattern.permute.xlu0 0
        %934 = vperm.xlu0 %933, %v931
        %v935 = vpop.permute.xlu0 %934
        %v937 = vmul.f32 %v921, %v935
        %v938 = vmul.f32 %v922, %v935
        %v939 = vmul.f32 %v923, %v935
        %v940 = vmul.f32 %v924, %v935
        %v941 = vmul.f32 %v925, %v935
        %v942 = vmul.f32 %v926, %v935
        %v943 = vmul.f32 %v927, %v935
        %v944 = vmul.f32 %v928, %v935
        %s945 = scalar_lea.vmem %s5, 36
        %v946 = vld [vmem:[%s945] sm:$0xf]
        %948 = vset.pattern.permute.xlu0 0
        %949 = vperm.xlu0 %948, %v946
        %v950 = vpop.permute.xlu0 %949
        %v952 = vmul.f32 %v922, %v950
        %v953 = vmul.f32 %v923, %v950
        %v954 = vmul.f32 %v924, %v950
        %v955 = vmul.f32 %v925, %v950
        %v956 = vmul.f32 %v926, %v950
        %v957 = vmul.f32 %v927, %v950
        %v958 = vmul.f32 %v928, %v950
        %v959 = vmul.f32 %v929, %v950
        %v960 = vadd.f32 %v937, %v952
        %v961 = vadd.f32 %v938, %v953
        %v962 = vadd.f32 %v939, %v954
        %v963 = vadd.f32 %v940, %v955
        %v964 = vadd.f32 %v941, %v956
        %v965 = vadd.f32 %v942, %v957
        %v966 = vadd.f32 %v943, %v958
        %v967 = vadd.f32 %v944, %v959
        %s968 = scalar_lea.vmem %s5, 72
        %v969 = vld [vmem:[%s968] sm:$0xf]
        %971 = vset.pattern.permute.xlu0 0
        %972 = vperm.xlu0 %971, %v969
        %v973 = vpop.permute.xlu0 %972
        %v975 = vmul.f32 %v923, %v973
        %v976 = vmul.f32 %v924, %v973
        %v977 = vmul.f32 %v925, %v973
        %v978 = vmul.f32 %v926, %v973
        %v979 = vmul.f32 %v927, %v973
        %v980 = vmul.f32 %v928, %v973
        %v981 = vmul.f32 %v929, %v973
        %v982 = vmul.f32 %v930, %v973
        %v983 = vadd.f32 %v960, %v975
        %v984 = vadd.f32 %v961, %v976
        %v985 = vadd.f32 %v962, %v977
        %v986 = vadd.f32 %v963, %v978
        %v987 = vadd.f32 %v964, %v979
        %v988 = vadd.f32 %v965, %v980
        %v989 = vadd.f32 %v966, %v981
        %v990 = vadd.f32 %v967, %v982
        %s991 = scalar_lea.vmem %s7, 1
        %v992 = vld [vmem:[%s991] sm:$0x1]
        %v994 = vperm.slane %v992, 0
        %995 = vrot.lane.b32.xlu0 %v994, 56
        %v996 = vpop.permute.xlu0 %995
        %v998 = vmul.f32 %v905, %v996
        %v999 = vmul.f32 %v906, %v996
        %v1000 = vmul.f32 %v907, %v996
        %v1001 = vmul.f32 %v908, %v996
        %v1002 = vmul.f32 %v909, %v996
        %v1003 = vmul.f32 %v910, %v996
        %v1004 = vmul.f32 %v911, %v996
        %v1005 = vmul.f32 %v912, %v996
        %v1006 = vmul.f32 %v913, %v996
        %v1007 = vmul.f32 %v914, %v996
        %s1008 = scalar_lea.vmem %s5, 4
        %v1009 = vld [vmem:[%s1008] sm:$0xf]
        %1011 = vset.pattern.permute.xlu0 0
        %1012 = vperm.xlu0 %1011, %v1009
        %v1013 = vpop.permute.xlu0 %1012
        %v1015 = vmul.f32 %v998, %v1013
        %v1016 = vmul.f32 %v999, %v1013
        %v1017 = vmul.f32 %v1000, %v1013
        %v1018 = vmul.f32 %v1001, %v1013
        %v1019 = vmul.f32 %v1002, %v1013
        %v1020 = vmul.f32 %v1003, %v1013
        %v1021 = vmul.f32 %v1004, %v1013
        %v1022 = vmul.f32 %v1005, %v1013
        %1031 = vrot.lane.b32.xlu0 %v1015, 127
        %v1032 = vpop.permute.xlu0 %1031
        %1033 = vrot.lane.b32.xlu0 %v1016, 127
        %v1034 = vpop.permute.xlu0 %1033
        %1035 = vrot.lane.b32.xlu0 %v1017, 127
        %v1036 = vpop.permute.xlu0 %1035
        %1037 = vrot.lane.b32.xlu0 %v1018, 127
        %v1038 = vpop.permute.xlu0 %1037
        %1039 = vrot.lane.b32.xlu0 %v1019, 127
        %v1040 = vpop.permute.xlu0 %1039
        %1041 = vrot.lane.b32.xlu0 %v1020, 127
        %v1042 = vpop.permute.xlu0 %1041
        %1043 = vrot.lane.b32.xlu0 %v1021, 127
        %v1044 = vpop.permute.xlu0 %1043
        %1045 = vrot.lane.b32.xlu0 %v1022, 127
        %v1046 = vpop.permute.xlu0 %1045
        %v1055 = vadd.f32 %v983, %v1032
        %v1056 = vadd.f32 %v984, %v1034
        %v1057 = vadd.f32 %v985, %v1036
        %v1058 = vadd.f32 %v986, %v1038
        %v1059 = vadd.f32 %v987, %v1040
        %v1060 = vadd.f32 %v988, %v1042
        %v1061 = vadd.f32 %v989, %v1044
        %v1062 = vadd.f32 %v990, %v1046
        %s1063 = scalar_lea.vmem %s5, 40
        %v1064 = vld [vmem:[%s1063] sm:$0xf]
        %1066 = vset.pattern.permute.xlu0 0
        %1067 = vperm.xlu0 %1066, %v1064
        %v1068 = vpop.permute.xlu0 %1067
        %v1070 = vmul.f32 %v999, %v1068
        %v1071 = vmul.f32 %v1000, %v1068
        %v1072 = vmul.f32 %v1001, %v1068
        %v1073 = vmul.f32 %v1002, %v1068
        %v1074 = vmul.f32 %v1003, %v1068
        %v1075 = vmul.f32 %v1004, %v1068
        %v1076 = vmul.f32 %v1005, %v1068
        %v1077 = vmul.f32 %v1006, %v1068
        %1086 = vrot.lane.b32.xlu0 %v1070, 127
        %v1087 = vpop.permute.xlu0 %1086
        %1088 = vrot.lane.b32.xlu0 %v1071, 127
        %v1089 = vpop.permute.xlu0 %1088
        %1090 = vrot.lane.b32.xlu0 %v1072, 127
        %v1091 = vpop.permute.xlu0 %1090
        %1092 = vrot.lane.b32.xlu0 %v1073, 127
        %v1093 = vpop.permute.xlu0 %1092
        %1094 = vrot.lane.b32.xlu0 %v1074, 127
        %v1095 = vpop.permute.xlu0 %1094
        %1096 = vrot.lane.b32.xlu0 %v1075, 127
        %v1097 = vpop.permute.xlu0 %1096
        %1098 = vrot.lane.b32.xlu0 %v1076, 127
        %v1099 = vpop.permute.xlu0 %1098
        %1100 = vrot.lane.b32.xlu0 %v1077, 127
        %v1101 = vpop.permute.xlu0 %1100
        %v1110 = vadd.f32 %v1055, %v1087
        %v1111 = vadd.f32 %v1056, %v1089
        %v1112 = vadd.f32 %v1057, %v1091
        %v1113 = vadd.f32 %v1058, %v1093
        %v1114 = vadd.f32 %v1059, %v1095
        %v1115 = vadd.f32 %v1060, %v1097
        %v1116 = vadd.f32 %v1061, %v1099
        %v1117 = vadd.f32 %v1062, %v1101
        %s1118 = scalar_lea.vmem %s5, 76
        %v1119 = vld [vmem:[%s1118] sm:$0xf]
        %1121 = vset.pattern.permute.xlu0 0
        %1122 = vperm.xlu0 %1121, %v1119
        %v1123 = vpop.permute.xlu0 %1122
        %v1125 = vmul.f32 %v1000, %v1123
        %v1126 = vmul.f32 %v1001, %v1123
        %v1127 = vmul.f32 %v1002, %v1123
        %v1128 = vmul.f32 %v1003, %v1123
        %v1129 = vmul.f32 %v1004, %v1123
        %v1130 = vmul.f32 %v1005, %v1123
        %v1131 = vmul.f32 %v1006, %v1123
        %v1132 = vmul.f32 %v1007, %v1123
        %1141 = vrot.lane.b32.xlu0 %v1125, 127
        %v1142 = vpop.permute.xlu0 %1141
        %1143 = vrot.lane.b32.xlu0 %v1126, 127
        %v1144 = vpop.permute.xlu0 %1143
        %1145 = vrot.lane.b32.xlu0 %v1127, 127
        %v1146 = vpop.permute.xlu0 %1145
        %1147 = vrot.lane.b32.xlu0 %v1128, 127
        %v1148 = vpop.permute.xlu0 %1147
        %1149 = vrot.lane.b32.xlu0 %v1129, 127
        %v1150 = vpop.permute.xlu0 %1149
        %1151 = vrot.lane.b32.xlu0 %v1130, 127
        %v1152 = vpop.permute.xlu0 %1151
        %1153 = vrot.lane.b32.xlu0 %v1131, 127
        %v1154 = vpop.permute.xlu0 %1153
        %1155 = vrot.lane.b32.xlu0 %v1132, 127
        %v1156 = vpop.permute.xlu0 %1155
        %v1165 = vadd.f32 %v1110, %v1142
        %v1166 = vadd.f32 %v1111, %v1144
        %v1167 = vadd.f32 %v1112, %v1146
        %v1168 = vadd.f32 %v1113, %v1148
        %v1169 = vadd.f32 %v1114, %v1150
        %v1170 = vadd.f32 %v1115, %v1152
        %v1171 = vadd.f32 %v1116, %v1154
        %v1172 = vadd.f32 %v1117, %v1156
        %s1173 = scalar_lea.vmem %s7, 2
        %v1174 = vld [vmem:[%s1173] sm:$0x1]
        %v1176 = vperm.slane %v1174, 0
        %1177 = vrot.lane.b32.xlu0 %v1176, 57
        %v1178 = vpop.permute.xlu0 %1177
        %v1180 = vmul.f32 %v905, %v1178
        %v1181 = vmul.f32 %v906, %v1178
        %v1182 = vmul.f32 %v907, %v1178
        %v1183 = vmul.f32 %v908, %v1178
        %v1184 = vmul.f32 %v909, %v1178
        %v1185 = vmul.f32 %v910, %v1178
        %v1186 = vmul.f32 %v911, %v1178
        %v1187 = vmul.f32 %v912, %v1178
        %v1188 = vmul.f32 %v913, %v1178
        %v1189 = vmul.f32 %v914, %v1178
        %s1190 = scalar_lea.vmem %s5, 8
        %v1191 = vld [vmem:[%s1190] sm:$0xf]
        %1193 = vset.pattern.permute.xlu0 0
        %1194 = vperm.xlu0 %1193, %v1191
        %v1195 = vpop.permute.xlu0 %1194
        %v1197 = vmul.f32 %v1180, %v1195
        %v1198 = vmul.f32 %v1181, %v1195
        %v1199 = vmul.f32 %v1182, %v1195
        %v1200 = vmul.f32 %v1183, %v1195
        %v1201 = vmul.f32 %v1184, %v1195
        %v1202 = vmul.f32 %v1185, %v1195
        %v1203 = vmul.f32 %v1186, %v1195
        %v1204 = vmul.f32 %v1187, %v1195
        %1213 = vrot.lane.b32.xlu0 %v1197, 126
        %v1214 = vpop.permute.xlu0 %1213
        %1215 = vrot.lane.b32.xlu0 %v1198, 126
        %v1216 = vpop.permute.xlu0 %1215
        %1217 = vrot.lane.b32.xlu0 %v1199, 126
        %v1218 = vpop.permute.xlu0 %1217
        %1219 = vrot.lane.b32.xlu0 %v1200, 126
        %v1220 = vpop.permute.xlu0 %1219
        %1221 = vrot.lane.b32.xlu0 %v1201, 126
        %v1222 = vpop.permute.xlu0 %1221
        %1223 = vrot.lane.b32.xlu0 %v1202, 126
        %v1224 = vpop.permute.xlu0 %1223
        %1225 = vrot.lane.b32.xlu0 %v1203, 126
        %v1226 = vpop.permute.xlu0 %1225
        %1227 = vrot.lane.b32.xlu0 %v1204, 126
        %v1228 = vpop.permute.xlu0 %1227
        %v1237 = vadd.f32 %v1165, %v1214
        %v1238 = vadd.f32 %v1166, %v1216
        %v1239 = vadd.f32 %v1167, %v1218
        %v1240 = vadd.f32 %v1168, %v1220
        %v1241 = vadd.f32 %v1169, %v1222
        %v1242 = vadd.f32 %v1170, %v1224
        %v1243 = vadd.f32 %v1171, %v1226
        %v1244 = vadd.f32 %v1172, %v1228
        %s1245 = scalar_lea.vmem %s5, 44
        %v1246 = vld [vmem:[%s1245] sm:$0xf]
        %1248 = vset.pattern.permute.xlu0 0
        %1249 = vperm.xlu0 %1248, %v1246
        %v1250 = vpop.permute.xlu0 %1249
        %v1252 = vmul.f32 %v1181, %v1250
        %v1253 = vmul.f32 %v1182, %v1250
        %v1254 = vmul.f32 %v1183, %v1250
        %v1255 = vmul.f32 %v1184, %v1250
        %v1256 = vmul.f32 %v1185, %v1250
        %v1257 = vmul.f32 %v1186, %v1250
        %v1258 = vmul.f32 %v1187, %v1250
        %v1259 = vmul.f32 %v1188, %v1250
        %1268 = vrot.lane.b32.xlu0 %v1252, 126
        %v1269 = vpop.permute.xlu0 %1268
        %1270 = vrot.lane.b32.xlu0 %v1253, 126
        %v1271 = vpop.permute.xlu0 %1270
        %1272 = vrot.lane.b32.xlu0 %v1254, 126
        %v1273 = vpop.permute.xlu0 %1272
        %1274 = vrot.lane.b32.xlu0 %v1255, 126
        %v1275 = vpop.permute.xlu0 %1274
        %1276 = vrot.lane.b32.xlu0 %v1256, 126
        %v1277 = vpop.permute.xlu0 %1276
        %1278 = vrot.lane.b32.xlu0 %v1257, 126
        %v1279 = vpop.permute.xlu0 %1278
        %1280 = vrot.lane.b32.xlu0 %v1258, 126
        %v1281 = vpop.permute.xlu0 %1280
        %1282 = vrot.lane.b32.xlu0 %v1259, 126
        %v1283 = vpop.permute.xlu0 %1282
        %v1292 = vadd.f32 %v1237, %v1269
        %v1293 = vadd.f32 %v1238, %v1271
        %v1294 = vadd.f32 %v1239, %v1273
        %v1295 = vadd.f32 %v1240, %v1275
        %v1296 = vadd.f32 %v1241, %v1277
        %v1297 = vadd.f32 %v1242, %v1279
        %v1298 = vadd.f32 %v1243, %v1281
        %v1299 = vadd.f32 %v1244, %v1283
        %s1300 = scalar_lea.vmem %s5, 80
        %v1301 = vld [vmem:[%s1300] sm:$0xf]
        %1303 = vset.pattern.permute.xlu0 0
        %1304 = vperm.xlu0 %1303, %v1301
        %v1305 = vpop.permute.xlu0 %1304
        %v1307 = vmul.f32 %v1182, %v1305
        %v1308 = vmul.f32 %v1183, %v1305
        %v1309 = vmul.f32 %v1184, %v1305
        %v1310 = vmul.f32 %v1185, %v1305
        %v1311 = vmul.f32 %v1186, %v1305
        %v1312 = vmul.f32 %v1187, %v1305
        %v1313 = vmul.f32 %v1188, %v1305
        %v1314 = vmul.f32 %v1189, %v1305
        %1323 = vrot.lane.b32.xlu0 %v1307, 126
        %v1324 = vpop.permute.xlu0 %1323
        %1325 = vrot.lane.b32.xlu0 %v1308, 126
        %v1326 = vpop.permute.xlu0 %1325
        %1327 = vrot.lane.b32.xlu0 %v1309, 126
        %v1328 = vpop.permute.xlu0 %1327
        %1329 = vrot.lane.b32.xlu0 %v1310, 126
        %v1330 = vpop.permute.xlu0 %1329
        %1331 = vrot.lane.b32.xlu0 %v1311, 126
        %v1332 = vpop.permute.xlu0 %1331
        %1333 = vrot.lane.b32.xlu0 %v1312, 126
        %v1334 = vpop.permute.xlu0 %1333
        %1335 = vrot.lane.b32.xlu0 %v1313, 126
        %v1336 = vpop.permute.xlu0 %1335
        %1337 = vrot.lane.b32.xlu0 %v1314, 126
        %v1338 = vpop.permute.xlu0 %1337
        %v1347 = vadd.f32 %v1292, %v1324
        %v1348 = vadd.f32 %v1293, %v1326
        %v1349 = vadd.f32 %v1294, %v1328
        %v1350 = vadd.f32 %v1295, %v1330
        %v1351 = vadd.f32 %v1296, %v1332
        %v1352 = vadd.f32 %v1297, %v1334
        %v1353 = vadd.f32 %v1298, %v1336
        %v1354 = vadd.f32 %v1299, %v1338
        %s1355 = scalar_lea.vmem %s7, 3
        %v1356 = vld [vmem:[%s1355] sm:$0x1]
        %v1358 = vperm.slane %v1356, 0
        %1359 = vrot.lane.b32.xlu0 %v1358, 63
        %v1360 = vpop.permute.xlu0 %1359
        %v1362 = vmul.f32 %v905, %v1360
        %v1363 = vmul.f32 %v906, %v1360
        %v1364 = vmul.f32 %v907, %v1360
        %v1365 = vmul.f32 %v908, %v1360
        %v1366 = vmul.f32 %v909, %v1360
        %v1367 = vmul.f32 %v910, %v1360
        %v1368 = vmul.f32 %v911, %v1360
        %v1369 = vmul.f32 %v912, %v1360
        %v1370 = vmul.f32 %v913, %v1360
        %v1371 = vmul.f32 %v914, %v1360
        %s1372 = scalar_lea.vmem %s5, 12
        %v1373 = vld [vmem:[%s1372] sm:$0xf]
        %1375 = vset.pattern.permute.xlu0 0
        %1376 = vperm.xlu0 %1375, %v1373
        %v1377 = vpop.permute.xlu0 %1376
        %v1379 = vmul.f32 %v1362, %v1377
        %v1380 = vmul.f32 %v1363, %v1377
        %v1381 = vmul.f32 %v1364, %v1377
        %v1382 = vmul.f32 %v1365, %v1377
        %v1383 = vmul.f32 %v1366, %v1377
        %v1384 = vmul.f32 %v1367, %v1377
        %v1385 = vmul.f32 %v1368, %v1377
        %v1386 = vmul.f32 %v1369, %v1377
        %1395 = vrot.lane.b32.xlu0 %v1379, 120
        %v1396 = vpop.permute.xlu0 %1395
        %1397 = vrot.lane.b32.xlu0 %v1380, 120
        %v1398 = vpop.permute.xlu0 %1397
        %1399 = vrot.lane.b32.xlu0 %v1381, 120
        %v1400 = vpop.permute.xlu0 %1399
        %1401 = vrot.lane.b32.xlu0 %v1382, 120
        %v1402 = vpop.permute.xlu0 %1401
        %1403 = vrot.lane.b32.xlu0 %v1383, 120
        %v1404 = vpop.permute.xlu0 %1403
        %1405 = vrot.lane.b32.xlu0 %v1384, 120
        %v1406 = vpop.permute.xlu0 %1405
        %1407 = vrot.lane.b32.xlu0 %v1385, 120
        %v1408 = vpop.permute.xlu0 %1407
        %1409 = vrot.lane.b32.xlu0 %v1386, 120
        %v1410 = vpop.permute.xlu0 %1409
        %v1419 = vadd.f32 %v1347, %v1396
        %v1420 = vadd.f32 %v1348, %v1398
        %v1421 = vadd.f32 %v1349, %v1400
        %v1422 = vadd.f32 %v1350, %v1402
        %v1423 = vadd.f32 %v1351, %v1404
        %v1424 = vadd.f32 %v1352, %v1406
        %v1425 = vadd.f32 %v1353, %v1408
        %v1426 = vadd.f32 %v1354, %v1410
        %s1427 = scalar_lea.vmem %s5, 48
        %v1428 = vld [vmem:[%s1427] sm:$0xf]
        %1430 = vset.pattern.permute.xlu0 0
        %1431 = vperm.xlu0 %1430, %v1428
        %v1432 = vpop.permute.xlu0 %1431
        %v1434 = vmul.f32 %v1363, %v1432
        %v1435 = vmul.f32 %v1364, %v1432
        %v1436 = vmul.f32 %v1365, %v1432
        %v1437 = vmul.f32 %v1366, %v1432
        %v1438 = vmul.f32 %v1367, %v1432
        %v1439 = vmul.f32 %v1368, %v1432
        %v1440 = vmul.f32 %v1369, %v1432
        %v1441 = vmul.f32 %v1370, %v1432
        %1450 = vrot.lane.b32.xlu0 %v1434, 120
        %v1451 = vpop.permute.xlu0 %1450
        %1452 = vrot.lane.b32.xlu0 %v1435, 120
        %v1453 = vpop.permute.xlu0 %1452
        %1454 = vrot.lane.b32.xlu0 %v1436, 120
        %v1455 = vpop.permute.xlu0 %1454
        %1456 = vrot.lane.b32.xlu0 %v1437, 120
        %v1457 = vpop.permute.xlu0 %1456
        %1458 = vrot.lane.b32.xlu0 %v1438, 120
        %v1459 = vpop.permute.xlu0 %1458
        %1460 = vrot.lane.b32.xlu0 %v1439, 120
        %v1461 = vpop.permute.xlu0 %1460
        %1462 = vrot.lane.b32.xlu0 %v1440, 120
        %v1463 = vpop.permute.xlu0 %1462
        %1464 = vrot.lane.b32.xlu0 %v1441, 120
        %v1465 = vpop.permute.xlu0 %1464
        %v1474 = vadd.f32 %v1419, %v1451
        %v1475 = vadd.f32 %v1420, %v1453
        %v1476 = vadd.f32 %v1421, %v1455
        %v1477 = vadd.f32 %v1422, %v1457
        %v1478 = vadd.f32 %v1423, %v1459
        %v1479 = vadd.f32 %v1424, %v1461
        %v1480 = vadd.f32 %v1425, %v1463
        %v1481 = vadd.f32 %v1426, %v1465
        %s1482 = scalar_lea.vmem %s5, 84
        %v1483 = vld [vmem:[%s1482] sm:$0xf]
        %1485 = vset.pattern.permute.xlu0 0
        %1486 = vperm.xlu0 %1485, %v1483
        %v1487 = vpop.permute.xlu0 %1486
        %v1489 = vmul.f32 %v1364, %v1487
        %v1490 = vmul.f32 %v1365, %v1487
        %v1491 = vmul.f32 %v1366, %v1487
        %v1492 = vmul.f32 %v1367, %v1487
        %v1493 = vmul.f32 %v1368, %v1487
        %v1494 = vmul.f32 %v1369, %v1487
        %v1495 = vmul.f32 %v1370, %v1487
        %v1496 = vmul.f32 %v1371, %v1487
        %1505 = vrot.lane.b32.xlu0 %v1489, 120
        %v1506 = vpop.permute.xlu0 %1505
        %1507 = vrot.lane.b32.xlu0 %v1490, 120
        %v1508 = vpop.permute.xlu0 %1507
        %1509 = vrot.lane.b32.xlu0 %v1491, 120
        %v1510 = vpop.permute.xlu0 %1509
        %1511 = vrot.lane.b32.xlu0 %v1492, 120
        %v1512 = vpop.permute.xlu0 %1511
        %1513 = vrot.lane.b32.xlu0 %v1493, 120
        %v1514 = vpop.permute.xlu0 %1513
        %1515 = vrot.lane.b32.xlu0 %v1494, 120
        %v1516 = vpop.permute.xlu0 %1515
        %1517 = vrot.lane.b32.xlu0 %v1495, 120
        %v1518 = vpop.permute.xlu0 %1517
        %1519 = vrot.lane.b32.xlu0 %v1496, 120
        %v1520 = vpop.permute.xlu0 %1519
        %v1529 = vadd.f32 %v1474, %v1506
        %v1530 = vadd.f32 %v1475, %v1508
        %v1531 = vadd.f32 %v1476, %v1510
        %v1532 = vadd.f32 %v1477, %v1512
        %v1533 = vadd.f32 %v1478, %v1514
        %v1534 = vadd.f32 %v1479, %v1516
        %v1535 = vadd.f32 %v1480, %v1518
        %v1536 = vadd.f32 %v1481, %v1520
        %s1537 = scalar_lea.vmem %s5, 16
        %v1538 = vld [vmem:[%s1537] sm:$0xf]
        %1540 = vset.pattern.permute.xlu0 0
        %1541 = vperm.xlu0 %1540, %v1538
        %v1542 = vpop.permute.xlu0 %1541
        %v1544 = vmul.f32 %v844, %v1542
        %v1545 = vmul.f32 %v845, %v1542
        %v1546 = vmul.f32 %v846, %v1542
        %v1547 = vmul.f32 %v847, %v1542
        %v1548 = vmul.f32 %v848, %v1542
        %v1549 = vmul.f32 %v849, %v1542
        %v1550 = vmul.f32 %v850, %v1542
        %v1551 = vmul.f32 %v851, %v1542
        %1560 = vrot.lane.b32.xlu0 %v1544, 55
        %v1561 = vpop.permute.xlu0 %1560
        %1562 = vrot.lane.b32.xlu0 %v1545, 55
        %v1563 = vpop.permute.xlu0 %1562
        %1564 = vrot.lane.b32.xlu0 %v1546, 55
        %v1565 = vpop.permute.xlu0 %1564
        %1566 = vrot.lane.b32.xlu0 %v1547, 55
        %v1567 = vpop.permute.xlu0 %1566
        %1568 = vrot.lane.b32.xlu0 %v1548, 55
        %v1569 = vpop.permute.xlu0 %1568
        %1570 = vrot.lane.b32.xlu0 %v1549, 55
        %v1571 = vpop.permute.xlu0 %1570
        %1572 = vrot.lane.b32.xlu0 %v1550, 55
        %v1573 = vpop.permute.xlu0 %1572
        %1574 = vrot.lane.b32.xlu0 %v1551, 55
        %v1575 = vpop.permute.xlu0 %1574
        %v1584 = vadd.f32 %v1529, %v1561
        %v1585 = vadd.f32 %v1530, %v1563
        %v1586 = vadd.f32 %v1531, %v1565
        %v1587 = vadd.f32 %v1532, %v1567
        %v1588 = vadd.f32 %v1533, %v1569
        %v1589 = vadd.f32 %v1534, %v1571
        %v1590 = vadd.f32 %v1535, %v1573
        %v1591 = vadd.f32 %v1536, %v1575
        %s1592 = scalar_lea.vmem %s5, 52
        %v1593 = vld [vmem:[%s1592] sm:$0xf]
        %1595 = vset.pattern.permute.xlu0 0
        %1596 = vperm.xlu0 %1595, %v1593
        %v1597 = vpop.permute.xlu0 %1596
        %v1599 = vmul.f32 %v845, %v1597
        %v1600 = vmul.f32 %v846, %v1597
        %v1601 = vmul.f32 %v847, %v1597
        %v1602 = vmul.f32 %v848, %v1597
        %v1603 = vmul.f32 %v849, %v1597
        %v1604 = vmul.f32 %v850, %v1597
        %v1605 = vmul.f32 %v851, %v1597
        %v1606 = vmul.f32 %v852, %v1597
        %1615 = vrot.lane.b32.xlu0 %v1599, 55
        %v1616 = vpop.permute.xlu0 %1615
        %1617 = vrot.lane.b32.xlu0 %v1600, 55
        %v1618 = vpop.permute.xlu0 %1617
        %1619 = vrot.lane.b32.xlu0 %v1601, 55
        %v1620 = vpop.permute.xlu0 %1619
        %1621 = vrot.lane.b32.xlu0 %v1602, 55
        %v1622 = vpop.permute.xlu0 %1621
        %1623 = vrot.lane.b32.xlu0 %v1603, 55
        %v1624 = vpop.permute.xlu0 %1623
        %1625 = vrot.lane.b32.xlu0 %v1604, 55
        %v1626 = vpop.permute.xlu0 %1625
        %1627 = vrot.lane.b32.xlu0 %v1605, 55
        %v1628 = vpop.permute.xlu0 %1627
        %1629 = vrot.lane.b32.xlu0 %v1606, 55
        %v1630 = vpop.permute.xlu0 %1629
        %v1639 = vadd.f32 %v1584, %v1616
        %v1640 = vadd.f32 %v1585, %v1618
        %v1641 = vadd.f32 %v1586, %v1620
        %v1642 = vadd.f32 %v1587, %v1622
        %v1643 = vadd.f32 %v1588, %v1624
        %v1644 = vadd.f32 %v1589, %v1626
        %v1645 = vadd.f32 %v1590, %v1628
        %v1646 = vadd.f32 %v1591, %v1630
        %s1647 = scalar_lea.vmem %s5, 88
        %v1648 = vld [vmem:[%s1647] sm:$0xf]
        %1650 = vset.pattern.permute.xlu0 0
        %1651 = vperm.xlu0 %1650, %v1648
        %v1652 = vpop.permute.xlu0 %1651
        %v1654 = vmul.f32 %v846, %v1652
        %v1655 = vmul.f32 %v847, %v1652
        %v1656 = vmul.f32 %v848, %v1652
        %v1657 = vmul.f32 %v849, %v1652
        %v1658 = vmul.f32 %v850, %v1652
        %v1659 = vmul.f32 %v851, %v1652
        %v1660 = vmul.f32 %v852, %v1652
        %v1661 = vmul.f32 %v853, %v1652
        %1670 = vrot.lane.b32.xlu0 %v1654, 55
        %v1671 = vpop.permute.xlu0 %1670
        %1672 = vrot.lane.b32.xlu0 %v1655, 55
        %v1673 = vpop.permute.xlu0 %1672
        %1674 = vrot.lane.b32.xlu0 %v1656, 55
        %v1675 = vpop.permute.xlu0 %1674
        %1676 = vrot.lane.b32.xlu0 %v1657, 55
        %v1677 = vpop.permute.xlu0 %1676
        %1678 = vrot.lane.b32.xlu0 %v1658, 55
        %v1679 = vpop.permute.xlu0 %1678
        %1680 = vrot.lane.b32.xlu0 %v1659, 55
        %v1681 = vpop.permute.xlu0 %1680
        %1682 = vrot.lane.b32.xlu0 %v1660, 55
        %v1683 = vpop.permute.xlu0 %1682
        %1684 = vrot.lane.b32.xlu0 %v1661, 55
        %v1685 = vpop.permute.xlu0 %1684
        %v1694 = vadd.f32 %v1639, %v1671
        %v1695 = vadd.f32 %v1640, %v1673
        %v1696 = vadd.f32 %v1641, %v1675
        %v1697 = vadd.f32 %v1642, %v1677
        %v1698 = vadd.f32 %v1643, %v1679
        %v1699 = vadd.f32 %v1644, %v1681
        %v1700 = vadd.f32 %v1645, %v1683
        %v1701 = vadd.f32 %v1646, %v1685
        %s1702 = scalar_lea.vmem %s7, 5
        %v1703 = vld [vmem:[%s1702] sm:$0x1]
        %v1705 = vperm.slane %v1703, 0
        %1706 = vrot.lane.b32.xlu0 %v1705, 1
        %v1707 = vpop.permute.xlu0 %1706
        %v1709 = vmul.f32 %v905, %v1707
        %v1710 = vmul.f32 %v906, %v1707
        %v1711 = vmul.f32 %v907, %v1707
        %v1712 = vmul.f32 %v908, %v1707
        %v1713 = vmul.f32 %v909, %v1707
        %v1714 = vmul.f32 %v910, %v1707
        %v1715 = vmul.f32 %v911, %v1707
        %v1716 = vmul.f32 %v912, %v1707
        %v1717 = vmul.f32 %v913, %v1707
        %v1718 = vmul.f32 %v914, %v1707
        %s1719 = scalar_lea.vmem %s5, 20
        %v1720 = vld [vmem:[%s1719] sm:$0xf]
        %1722 = vset.pattern.permute.xlu0 0
        %1723 = vperm.xlu0 %1722, %v1720
        %v1724 = vpop.permute.xlu0 %1723
        %v1726 = vmul.f32 %v1709, %v1724
        %v1727 = vmul.f32 %v1710, %v1724
        %v1728 = vmul.f32 %v1711, %v1724
        %v1729 = vmul.f32 %v1712, %v1724
        %v1730 = vmul.f32 %v1713, %v1724
        %v1731 = vmul.f32 %v1714, %v1724
        %v1732 = vmul.f32 %v1715, %v1724
        %v1733 = vmul.f32 %v1716, %v1724
        %1742 = vrot.lane.b32.xlu0 %v1726, 54
        %v1743 = vpop.permute.xlu0 %1742
        %1744 = vrot.lane.b32.xlu0 %v1727, 54
        %v1745 = vpop.permute.xlu0 %1744
        %1746 = vrot.lane.b32.xlu0 %v1728, 54
        %v1747 = vpop.permute.xlu0 %1746
        %1748 = vrot.lane.b32.xlu0 %v1729, 54
        %v1749 = vpop.permute.xlu0 %1748
        %1750 = vrot.lane.b32.xlu0 %v1730, 54
        %v1751 = vpop.permute.xlu0 %1750
        %1752 = vrot.lane.b32.xlu0 %v1731, 54
        %v1753 = vpop.permute.xlu0 %1752
        %1754 = vrot.lane.b32.xlu0 %v1732, 54
        %v1755 = vpop.permute.xlu0 %1754
        %1756 = vrot.lane.b32.xlu0 %v1733, 54
        %v1757 = vpop.permute.xlu0 %1756
        %v1766 = vadd.f32 %v1694, %v1743
        %v1767 = vadd.f32 %v1695, %v1745
        %v1768 = vadd.f32 %v1696, %v1747
        %v1769 = vadd.f32 %v1697, %v1749
        %v1770 = vadd.f32 %v1698, %v1751
        %v1771 = vadd.f32 %v1699, %v1753
        %v1772 = vadd.f32 %v1700, %v1755
        %v1773 = vadd.f32 %v1701, %v1757
        %s1774 = scalar_lea.vmem %s5, 56
        %v1775 = vld [vmem:[%s1774] sm:$0xf]
        %1777 = vset.pattern.permute.xlu0 0
        %1778 = vperm.xlu0 %1777, %v1775
        %v1779 = vpop.permute.xlu0 %1778
        %v1781 = vmul.f32 %v1710, %v1779
        %v1782 = vmul.f32 %v1711, %v1779
        %v1783 = vmul.f32 %v1712, %v1779
        %v1784 = vmul.f32 %v1713, %v1779
        %v1785 = vmul.f32 %v1714, %v1779
        %v1786 = vmul.f32 %v1715, %v1779
        %v1787 = vmul.f32 %v1716, %v1779
        %v1788 = vmul.f32 %v1717, %v1779
        %1797 = vrot.lane.b32.xlu0 %v1781, 54
        %v1798 = vpop.permute.xlu0 %1797
        %1799 = vrot.lane.b32.xlu0 %v1782, 54
        %v1800 = vpop.permute.xlu0 %1799
        %1801 = vrot.lane.b32.xlu0 %v1783, 54
        %v1802 = vpop.permute.xlu0 %1801
        %1803 = vrot.lane.b32.xlu0 %v1784, 54
        %v1804 = vpop.permute.xlu0 %1803
        %1805 = vrot.lane.b32.xlu0 %v1785, 54
        %v1806 = vpop.permute.xlu0 %1805
        %1807 = vrot.lane.b32.xlu0 %v1786, 54
        %v1808 = vpop.permute.xlu0 %1807
        %1809 = vrot.lane.b32.xlu0 %v1787, 54
        %v1810 = vpop.permute.xlu0 %1809
        %1811 = vrot.lane.b32.xlu0 %v1788, 54
        %v1812 = vpop.permute.xlu0 %1811
        %v1821 = vadd.f32 %v1766, %v1798
        %v1822 = vadd.f32 %v1767, %v1800
        %v1823 = vadd.f32 %v1768, %v1802
        %v1824 = vadd.f32 %v1769, %v1804
        %v1825 = vadd.f32 %v1770, %v1806
        %v1826 = vadd.f32 %v1771, %v1808
        %v1827 = vadd.f32 %v1772, %v1810
        %v1828 = vadd.f32 %v1773, %v1812
        %s1829 = scalar_lea.vmem %s5, 92
        %v1830 = vld [vmem:[%s1829] sm:$0xf]
        %1832 = vset.pattern.permute.xlu0 0
        %1833 = vperm.xlu0 %1832, %v1830
        %v1834 = vpop.permute.xlu0 %1833
        %v1836 = vmul.f32 %v1711, %v1834
        %v1837 = vmul.f32 %v1712, %v1834
        %v1838 = vmul.f32 %v1713, %v1834
        %v1839 = vmul.f32 %v1714, %v1834
        %v1840 = vmul.f32 %v1715, %v1834
        %v1841 = vmul.f32 %v1716, %v1834
        %v1842 = vmul.f32 %v1717, %v1834
        %v1843 = vmul.f32 %v1718, %v1834
        %1852 = vrot.lane.b32.xlu0 %v1836, 54
        %v1853 = vpop.permute.xlu0 %1852
        %1854 = vrot.lane.b32.xlu0 %v1837, 54
        %v1855 = vpop.permute.xlu0 %1854
        %1856 = vrot.lane.b32.xlu0 %v1838, 54
        %v1857 = vpop.permute.xlu0 %1856
        %1858 = vrot.lane.b32.xlu0 %v1839, 54
        %v1859 = vpop.permute.xlu0 %1858
        %1860 = vrot.lane.b32.xlu0 %v1840, 54
        %v1861 = vpop.permute.xlu0 %1860
        %1862 = vrot.lane.b32.xlu0 %v1841, 54
        %v1863 = vpop.permute.xlu0 %1862
        %1864 = vrot.lane.b32.xlu0 %v1842, 54
        %v1865 = vpop.permute.xlu0 %1864
        %1866 = vrot.lane.b32.xlu0 %v1843, 54
        %v1867 = vpop.permute.xlu0 %1866
        %v1876 = vadd.f32 %v1821, %v1853
        %v1877 = vadd.f32 %v1822, %v1855
        %v1878 = vadd.f32 %v1823, %v1857
        %v1879 = vadd.f32 %v1824, %v1859
        %v1880 = vadd.f32 %v1825, %v1861
        %v1881 = vadd.f32 %v1826, %v1863
        %v1882 = vadd.f32 %v1827, %v1865
        %v1883 = vadd.f32 %v1828, %v1867
        %s1884 = scalar_lea.vmem %s7, 6
        %v1885 = vld [vmem:[%s1884] sm:$0x1]
        %v1887 = vperm.slane %v1885, 0
        %1888 = vrot.lane.b32.xlu0 %v1887, 7
        %v1889 = vpop.permute.xlu0 %1888
        %v1891 = vmul.f32 %v905, %v1889
        %v1892 = vmul.f32 %v906, %v1889
        %v1893 = vmul.f32 %v907, %v1889
        %v1894 = vmul.f32 %v908, %v1889
        %v1895 = vmul.f32 %v909, %v1889
        %v1896 = vmul.f32 %v910, %v1889
        %v1897 = vmul.f32 %v911, %v1889
        %v1898 = vmul.f32 %v912, %v1889
        %v1899 = vmul.f32 %v913, %v1889
        %v1900 = vmul.f32 %v914, %v1889
        %s1901 = scalar_lea.vmem %s5, 24
        %v1902 = vld [vmem:[%s1901] sm:$0xf]
        %1904 = vset.pattern.permute.xlu0 0
        %1905 = vperm.xlu0 %1904, %v1902
        %v1906 = vpop.permute.xlu0 %1905
        %v1908 = vmul.f32 %v1891, %v1906
        %v1909 = vmul.f32 %v1892, %v1906
        %v1910 = vmul.f32 %v1893, %v1906
        %v1911 = vmul.f32 %v1894, %v1906
        %v1912 = vmul.f32 %v1895, %v1906
        %v1913 = vmul.f32 %v1896, %v1906
        %v1914 = vmul.f32 %v1897, %v1906
        %v1915 = vmul.f32 %v1898, %v1906
        %1924 = vrot.lane.b32.xlu0 %v1908, 48
        %v1925 = vpop.permute.xlu0 %1924
        %1926 = vrot.lane.b32.xlu0 %v1909, 48
        %v1927 = vpop.permute.xlu0 %1926
        %1928 = vrot.lane.b32.xlu0 %v1910, 48
        %v1929 = vpop.permute.xlu0 %1928
        %1930 = vrot.lane.b32.xlu0 %v1911, 48
        %v1931 = vpop.permute.xlu0 %1930
        %1932 = vrot.lane.b32.xlu0 %v1912, 48
        %v1933 = vpop.permute.xlu0 %1932
        %1934 = vrot.lane.b32.xlu0 %v1913, 48
        %v1935 = vpop.permute.xlu0 %1934
        %1936 = vrot.lane.b32.xlu0 %v1914, 48
        %v1937 = vpop.permute.xlu0 %1936
        %1938 = vrot.lane.b32.xlu0 %v1915, 48
        %v1939 = vpop.permute.xlu0 %1938
        %v1948 = vadd.f32 %v1876, %v1925
        %v1949 = vadd.f32 %v1877, %v1927
        %v1950 = vadd.f32 %v1878, %v1929
        %v1951 = vadd.f32 %v1879, %v1931
        %v1952 = vadd.f32 %v1880, %v1933
        %v1953 = vadd.f32 %v1881, %v1935
        %v1954 = vadd.f32 %v1882, %v1937
        %v1955 = vadd.f32 %v1883, %v1939
        %s1956 = scalar_lea.vmem %s5, 60
        %v1957 = vld [vmem:[%s1956] sm:$0xf]
        %1959 = vset.pattern.permute.xlu0 0
        %1960 = vperm.xlu0 %1959, %v1957
        %v1961 = vpop.permute.xlu0 %1960
        %v1963 = vmul.f32 %v1892, %v1961
        %v1964 = vmul.f32 %v1893, %v1961
        %v1965 = vmul.f32 %v1894, %v1961
        %v1966 = vmul.f32 %v1895, %v1961
        %v1967 = vmul.f32 %v1896, %v1961
        %v1968 = vmul.f32 %v1897, %v1961
        %v1969 = vmul.f32 %v1898, %v1961
        %v1970 = vmul.f32 %v1899, %v1961
        %1979 = vrot.lane.b32.xlu0 %v1963, 48
        %v1980 = vpop.permute.xlu0 %1979
        %1981 = vrot.lane.b32.xlu0 %v1964, 48
        %v1982 = vpop.permute.xlu0 %1981
        %1983 = vrot.lane.b32.xlu0 %v1965, 48
        %v1984 = vpop.permute.xlu0 %1983
        %1985 = vrot.lane.b32.xlu0 %v1966, 48
        %v1986 = vpop.permute.xlu0 %1985
        %1987 = vrot.lane.b32.xlu0 %v1967, 48
        %v1988 = vpop.permute.xlu0 %1987
        %1989 = vrot.lane.b32.xlu0 %v1968, 48
        %v1990 = vpop.permute.xlu0 %1989
        %1991 = vrot.lane.b32.xlu0 %v1969, 48
        %v1992 = vpop.permute.xlu0 %1991
        %1993 = vrot.lane.b32.xlu0 %v1970, 48
        %v1994 = vpop.permute.xlu0 %1993
        %v2003 = vadd.f32 %v1948, %v1980
        %v2004 = vadd.f32 %v1949, %v1982
        %v2005 = vadd.f32 %v1950, %v1984
        %v2006 = vadd.f32 %v1951, %v1986
        %v2007 = vadd.f32 %v1952, %v1988
        %v2008 = vadd.f32 %v1953, %v1990
        %v2009 = vadd.f32 %v1954, %v1992
        %v2010 = vadd.f32 %v1955, %v1994
        %s2011 = scalar_lea.vmem %s5, 96
        %v2012 = vld [vmem:[%s2011] sm:$0xf]
        %2014 = vset.pattern.permute.xlu0 0
        %2015 = vperm.xlu0 %2014, %v2012
        %v2016 = vpop.permute.xlu0 %2015
        %v2018 = vmul.f32 %v1893, %v2016
        %v2019 = vmul.f32 %v1894, %v2016
        %v2020 = vmul.f32 %v1895, %v2016
        %v2021 = vmul.f32 %v1896, %v2016
        %v2022 = vmul.f32 %v1897, %v2016
        %v2023 = vmul.f32 %v1898, %v2016
        %v2024 = vmul.f32 %v1899, %v2016
        %v2025 = vmul.f32 %v1900, %v2016
        %2034 = vrot.lane.b32.xlu0 %v2018, 48
        %v2035 = vpop.permute.xlu0 %2034
        %2036 = vrot.lane.b32.xlu0 %v2019, 48
        %v2037 = vpop.permute.xlu0 %2036
        %2038 = vrot.lane.b32.xlu0 %v2020, 48
        %v2039 = vpop.permute.xlu0 %2038
        %2040 = vrot.lane.b32.xlu0 %v2021, 48
        %v2041 = vpop.permute.xlu0 %2040
        %2042 = vrot.lane.b32.xlu0 %v2022, 48
        %v2043 = vpop.permute.xlu0 %2042
        %2044 = vrot.lane.b32.xlu0 %v2023, 48
        %v2045 = vpop.permute.xlu0 %2044
        %2046 = vrot.lane.b32.xlu0 %v2024, 48
        %v2047 = vpop.permute.xlu0 %2046
        %2048 = vrot.lane.b32.xlu0 %v2025, 48
        %v2049 = vpop.permute.xlu0 %2048
        %v2058 = vadd.f32 %v2003, %v2035
        %v2059 = vadd.f32 %v2004, %v2037
        %v2060 = vadd.f32 %v2005, %v2039
        %v2061 = vadd.f32 %v2006, %v2041
        %v2062 = vadd.f32 %v2007, %v2043
        %v2063 = vadd.f32 %v2008, %v2045
        %v2064 = vadd.f32 %v2009, %v2047
        %v2065 = vadd.f32 %v2010, %v2049
        %s2066 = scalar_lea.vmem %s7, 7
        %v2067 = vld [vmem:[%s2066] sm:$0x1]
        %v2069 = vperm.slane %v2067, 0
        %2070 = vrot.lane.b32.xlu0 %v2069, 8
        %v2071 = vpop.permute.xlu0 %2070
        %v2073 = vmul.f32 %v905, %v2071
        %v2074 = vmul.f32 %v906, %v2071
        %v2075 = vmul.f32 %v907, %v2071
        %v2076 = vmul.f32 %v908, %v2071
        %v2077 = vmul.f32 %v909, %v2071
        %v2078 = vmul.f32 %v910, %v2071
        %v2079 = vmul.f32 %v911, %v2071
        %v2080 = vmul.f32 %v912, %v2071
        %v2081 = vmul.f32 %v913, %v2071
        %v2082 = vmul.f32 %v914, %v2071
        %s2083 = scalar_lea.vmem %s5, 28
        %v2084 = vld [vmem:[%s2083] sm:$0xf]
        %2086 = vset.pattern.permute.xlu0 0
        %2087 = vperm.xlu0 %2086, %v2084
        %v2088 = vpop.permute.xlu0 %2087
        %v2090 = vmul.f32 %v2073, %v2088
        %v2091 = vmul.f32 %v2074, %v2088
        %v2092 = vmul.f32 %v2075, %v2088
        %v2093 = vmul.f32 %v2076, %v2088
        %v2094 = vmul.f32 %v2077, %v2088
        %v2095 = vmul.f32 %v2078, %v2088
        %v2096 = vmul.f32 %v2079, %v2088
        %v2097 = vmul.f32 %v2080, %v2088
        %2106 = vrot.lane.b32.xlu0 %v2090, 47
        %v2107 = vpop.permute.xlu0 %2106
        %2108 = vrot.lane.b32.xlu0 %v2091, 47
        %v2109 = vpop.permute.xlu0 %2108
        %2110 = vrot.lane.b32.xlu0 %v2092, 47
        %v2111 = vpop.permute.xlu0 %2110
        %2112 = vrot.lane.b32.xlu0 %v2093, 47
        %v2113 = vpop.permute.xlu0 %2112
        %2114 = vrot.lane.b32.xlu0 %v2094, 47
        %v2115 = vpop.permute.xlu0 %2114
        %2116 = vrot.lane.b32.xlu0 %v2095, 47
        %v2117 = vpop.permute.xlu0 %2116
        %2118 = vrot.lane.b32.xlu0 %v2096, 47
        %v2119 = vpop.permute.xlu0 %2118
        %2120 = vrot.lane.b32.xlu0 %v2097, 47
        %v2121 = vpop.permute.xlu0 %2120
        %v2130 = vadd.f32 %v2058, %v2107
        %v2131 = vadd.f32 %v2059, %v2109
        %v2132 = vadd.f32 %v2060, %v2111
        %v2133 = vadd.f32 %v2061, %v2113
        %v2134 = vadd.f32 %v2062, %v2115
        %v2135 = vadd.f32 %v2063, %v2117
        %v2136 = vadd.f32 %v2064, %v2119
        %v2137 = vadd.f32 %v2065, %v2121
        %s2138 = scalar_lea.vmem %s5, 64
        %v2139 = vld [vmem:[%s2138] sm:$0xf]
        %2141 = vset.pattern.permute.xlu0 0
        %2142 = vperm.xlu0 %2141, %v2139
        %v2143 = vpop.permute.xlu0 %2142
        %v2145 = vmul.f32 %v2074, %v2143
        %v2146 = vmul.f32 %v2075, %v2143
        %v2147 = vmul.f32 %v2076, %v2143
        %v2148 = vmul.f32 %v2077, %v2143
        %v2149 = vmul.f32 %v2078, %v2143
        %v2150 = vmul.f32 %v2079, %v2143
        %v2151 = vmul.f32 %v2080, %v2143
        %v2152 = vmul.f32 %v2081, %v2143
        %2161 = vrot.lane.b32.xlu0 %v2145, 47
        %v2162 = vpop.permute.xlu0 %2161
        %2163 = vrot.lane.b32.xlu0 %v2146, 47
        %v2164 = vpop.permute.xlu0 %2163
        %2165 = vrot.lane.b32.xlu0 %v2147, 47
        %v2166 = vpop.permute.xlu0 %2165
        %2167 = vrot.lane.b32.xlu0 %v2148, 47
        %v2168 = vpop.permute.xlu0 %2167
        %2169 = vrot.lane.b32.xlu0 %v2149, 47
        %v2170 = vpop.permute.xlu0 %2169
        %2171 = vrot.lane.b32.xlu0 %v2150, 47
        %v2172 = vpop.permute.xlu0 %2171
        %2173 = vrot.lane.b32.xlu0 %v2151, 47
        %v2174 = vpop.permute.xlu0 %2173
        %2175 = vrot.lane.b32.xlu0 %v2152, 47
        %v2176 = vpop.permute.xlu0 %2175
        %v2185 = vadd.f32 %v2130, %v2162
        %v2186 = vadd.f32 %v2131, %v2164
        %v2187 = vadd.f32 %v2132, %v2166
        %v2188 = vadd.f32 %v2133, %v2168
        %v2189 = vadd.f32 %v2134, %v2170
        %v2190 = vadd.f32 %v2135, %v2172
        %v2191 = vadd.f32 %v2136, %v2174
        %v2192 = vadd.f32 %v2137, %v2176
        %s2193 = scalar_lea.vmem %s5, 100
        %v2194 = vld [vmem:[%s2193] sm:$0xf]
        %2196 = vset.pattern.permute.xlu0 0
        %2197 = vperm.xlu0 %2196, %v2194
        %v2198 = vpop.permute.xlu0 %2197
        %v2200 = vmul.f32 %v2075, %v2198
        %v2201 = vmul.f32 %v2076, %v2198
        %v2202 = vmul.f32 %v2077, %v2198
        %v2203 = vmul.f32 %v2078, %v2198
        %v2204 = vmul.f32 %v2079, %v2198
        %v2205 = vmul.f32 %v2080, %v2198
        %v2206 = vmul.f32 %v2081, %v2198
        %v2207 = vmul.f32 %v2082, %v2198
        %2216 = vrot.lane.b32.xlu0 %v2200, 47
        %v2217 = vpop.permute.xlu0 %2216
        %2218 = vrot.lane.b32.xlu0 %v2201, 47
        %v2219 = vpop.permute.xlu0 %2218
        %2220 = vrot.lane.b32.xlu0 %v2202, 47
        %v2221 = vpop.permute.xlu0 %2220
        %2222 = vrot.lane.b32.xlu0 %v2203, 47
        %v2223 = vpop.permute.xlu0 %2222
        %2224 = vrot.lane.b32.xlu0 %v2204, 47
        %v2225 = vpop.permute.xlu0 %2224
        %2226 = vrot.lane.b32.xlu0 %v2205, 47
        %v2227 = vpop.permute.xlu0 %2226
        %2228 = vrot.lane.b32.xlu0 %v2206, 47
        %v2229 = vpop.permute.xlu0 %2228
        %2230 = vrot.lane.b32.xlu0 %v2207, 47
        %v2231 = vpop.permute.xlu0 %2230
        %v2240 = vadd.f32 %v2185, %v2217
        %v2241 = vadd.f32 %v2186, %v2219
        %v2242 = vadd.f32 %v2187, %v2221
        %v2243 = vadd.f32 %v2188, %v2223
        %v2244 = vadd.f32 %v2189, %v2225
        %v2245 = vadd.f32 %v2190, %v2227
        %v2246 = vadd.f32 %v2191, %v2229
        %v2247 = vadd.f32 %v2192, %v2231
        %s2248 = scalar_lea.vmem %s7, 8
        %v2249 = vld [vmem:[%s2248] sm:$0x1]
        %v2251 = vperm.slane %v2249, 0
        %2252 = vrot.lane.b32.xlu0 %v2251, 9
        %v2253 = vpop.permute.xlu0 %2252
        %v2255 = vmul.f32 %v905, %v2253
        %v2256 = vmul.f32 %v906, %v2253
        %v2257 = vmul.f32 %v907, %v2253
        %v2258 = vmul.f32 %v908, %v2253
        %v2259 = vmul.f32 %v909, %v2253
        %v2260 = vmul.f32 %v910, %v2253
        %v2261 = vmul.f32 %v911, %v2253
        %v2262 = vmul.f32 %v912, %v2253
        %v2263 = vmul.f32 %v913, %v2253
        %v2264 = vmul.f32 %v914, %v2253
        %s2265 = scalar_lea.vmem %s5, 32
        %v2266 = vld [vmem:[%s2265] sm:$0xf]
        %2268 = vset.pattern.permute.xlu0 0
        %2269 = vperm.xlu0 %2268, %v2266
        %v2270 = vpop.permute.xlu0 %2269
        %v2272 = vmul.f32 %v2255, %v2270
        %v2273 = vmul.f32 %v2256, %v2270
        %v2274 = vmul.f32 %v2257, %v2270
        %v2275 = vmul.f32 %v2258, %v2270
        %v2276 = vmul.f32 %v2259, %v2270
        %v2277 = vmul.f32 %v2260, %v2270
        %v2278 = vmul.f32 %v2261, %v2270
        %v2279 = vmul.f32 %v2262, %v2270
        %2288 = vrot.lane.b32.xlu0 %v2272, 46
        %v2289 = vpop.permute.xlu0 %2288
        %2290 = vrot.lane.b32.xlu0 %v2273, 46
        %v2291 = vpop.permute.xlu0 %2290
        %2292 = vrot.lane.b32.xlu0 %v2274, 46
        %v2293 = vpop.permute.xlu0 %2292
        %2294 = vrot.lane.b32.xlu0 %v2275, 46
        %v2295 = vpop.permute.xlu0 %2294
        %2296 = vrot.lane.b32.xlu0 %v2276, 46
        %v2297 = vpop.permute.xlu0 %2296
        %2298 = vrot.lane.b32.xlu0 %v2277, 46
        %v2299 = vpop.permute.xlu0 %2298
        %2300 = vrot.lane.b32.xlu0 %v2278, 46
        %v2301 = vpop.permute.xlu0 %2300
        %2302 = vrot.lane.b32.xlu0 %v2279, 46
        %v2303 = vpop.permute.xlu0 %2302
        %v2312 = vadd.f32 %v2240, %v2289
        %v2313 = vadd.f32 %v2241, %v2291
        %v2314 = vadd.f32 %v2242, %v2293
        %v2315 = vadd.f32 %v2243, %v2295
        %v2316 = vadd.f32 %v2244, %v2297
        %v2317 = vadd.f32 %v2245, %v2299
        %v2318 = vadd.f32 %v2246, %v2301
        %v2319 = vadd.f32 %v2247, %v2303
        %s2320 = scalar_lea.vmem %s5, 68
        %v2321 = vld [vmem:[%s2320] sm:$0xf]
        %2323 = vset.pattern.permute.xlu0 0
        %2324 = vperm.xlu0 %2323, %v2321
        %v2325 = vpop.permute.xlu0 %2324
        %v2327 = vmul.f32 %v2256, %v2325
        %v2328 = vmul.f32 %v2257, %v2325
        %v2329 = vmul.f32 %v2258, %v2325
        %v2330 = vmul.f32 %v2259, %v2325
        %v2331 = vmul.f32 %v2260, %v2325
        %v2332 = vmul.f32 %v2261, %v2325
        %v2333 = vmul.f32 %v2262, %v2325
        %v2334 = vmul.f32 %v2263, %v2325
        %2343 = vrot.lane.b32.xlu0 %v2327, 46
        %v2344 = vpop.permute.xlu0 %2343
        %2345 = vrot.lane.b32.xlu0 %v2328, 46
        %v2346 = vpop.permute.xlu0 %2345
        %2347 = vrot.lane.b32.xlu0 %v2329, 46
        %v2348 = vpop.permute.xlu0 %2347
        %2349 = vrot.lane.b32.xlu0 %v2330, 46
        %v2350 = vpop.permute.xlu0 %2349
        %2351 = vrot.lane.b32.xlu0 %v2331, 46
        %v2352 = vpop.permute.xlu0 %2351
        %2353 = vrot.lane.b32.xlu0 %v2332, 46
        %v2354 = vpop.permute.xlu0 %2353
        %2355 = vrot.lane.b32.xlu0 %v2333, 46
        %v2356 = vpop.permute.xlu0 %2355
        %2357 = vrot.lane.b32.xlu0 %v2334, 46
        %v2358 = vpop.permute.xlu0 %2357
        %v2367 = vadd.f32 %v2312, %v2344
        %v2368 = vadd.f32 %v2313, %v2346
        %v2369 = vadd.f32 %v2314, %v2348
        %v2370 = vadd.f32 %v2315, %v2350
        %v2371 = vadd.f32 %v2316, %v2352
        %v2372 = vadd.f32 %v2317, %v2354
        %v2373 = vadd.f32 %v2318, %v2356
        %v2374 = vadd.f32 %v2319, %v2358
        %s2375 = scalar_lea.vmem %s5, 104
        %v2376 = vld [vmem:[%s2375] sm:$0xf]
        %2378 = vset.pattern.permute.xlu0 0
        %2379 = vperm.xlu0 %2378, %v2376
        %v2380 = vpop.permute.xlu0 %2379
        %v2382 = vmul.f32 %v2257, %v2380
        %v2383 = vmul.f32 %v2258, %v2380
        %v2384 = vmul.f32 %v2259, %v2380
        %v2385 = vmul.f32 %v2260, %v2380
        %v2386 = vmul.f32 %v2261, %v2380
        %v2387 = vmul.f32 %v2262, %v2380
        %v2388 = vmul.f32 %v2263, %v2380
        %v2389 = vmul.f32 %v2264, %v2380
        %2398 = vrot.lane.b32.xlu0 %v2382, 46
        %v2399 = vpop.permute.xlu0 %2398
        %2400 = vrot.lane.b32.xlu0 %v2383, 46
        %v2401 = vpop.permute.xlu0 %2400
        %2402 = vrot.lane.b32.xlu0 %v2384, 46
        %v2403 = vpop.permute.xlu0 %2402
        %2404 = vrot.lane.b32.xlu0 %v2385, 46
        %v2405 = vpop.permute.xlu0 %2404
        %2406 = vrot.lane.b32.xlu0 %v2386, 46
        %v2407 = vpop.permute.xlu0 %2406
        %2408 = vrot.lane.b32.xlu0 %v2387, 46
        %v2409 = vpop.permute.xlu0 %2408
        %2410 = vrot.lane.b32.xlu0 %v2388, 46
        %v2411 = vpop.permute.xlu0 %2410
        %2412 = vrot.lane.b32.xlu0 %v2389, 46
        %v2413 = vpop.permute.xlu0 %2412
        %v2422 = vadd.f32 %v2367, %v2399
        %v2423 = vadd.f32 %v2368, %v2401
        %v2424 = vadd.f32 %v2369, %v2403
        %v2425 = vadd.f32 %v2370, %v2405
        %v2426 = vadd.f32 %v2371, %v2407
        %v2427 = vadd.f32 %v2372, %v2409
        %v2428 = vadd.f32 %v2373, %v2411
        %v2429 = vadd.f32 %v2374, %v2413
        %v2430 = vld [vmem:[%s6] sm:$0xf]
        %2432 = vset.pattern.permute.xlu0 0
        %2433 = vperm.xlu0 %2432, %v2430
        %v2434 = vpop.permute.xlu0 %2433
        %v2436 = vadd.f32 %v2422, %v2434
        %v2437 = vmax.f32 %v2436, 0.0
        %v2439 = vrot.slane %v2437, 1
        %v2440 = vrot.slane %v2437, 2
        %v2441 = vrot.slane %v2437, 3
        %v2442 = vperm.slane %v2437, 0
        %v2443 = vperm.slane %v2439, 0
        %v2444 = vperm.slane %v2440, 0
        %v2445 = vperm.slane %v2441, 0
        %2446 = vrot.lane.b32.xlu0 %v2442, 73
        %v2447 = vpop.permute.xlu0 %2446
        %2448 = vrot.lane.b32.xlu0 %v2443, 73
        %v2449 = vpop.permute.xlu0 %2448
        %2450 = vrot.lane.b32.xlu0 %v2444, 73
        %v2451 = vpop.permute.xlu0 %2450
        %2452 = vrot.lane.b32.xlu0 %v2445, 73
        %v2453 = vpop.permute.xlu0 %2452
        %s2458 = scalar_lea.vmem %s524, 32 [#allocation6]
        %2459 = vst.msk [vmem:[%s2458] sm:$0x1] %vm582, %v2447
        %2460 = vst.msk [vmem:[%s2458 + $0x8] sm:$0x1] %vm582, %v2449
        %2461 = vst.msk [vmem:[%s2458 + $0x10] sm:$0x1] %vm582, %v2451
        %2462 = vst.msk [vmem:[%s2458 + $0x18] sm:$0x1] %vm582, %v2453
        %v2463 = vadd.f32 %v2423, %v2434
        %v2464 = vmax.f32 %v2463, 0.0
        %v2466 = vrot.slane %v2464, 1
        %v2467 = vrot.slane %v2464, 2
        %v2468 = vrot.slane %v2464, 3
        %v2469 = vperm.slane %v2464, 0
        %v2470 = vperm.slane %v2466, 0
        %v2471 = vperm.slane %v2467, 0
        %v2472 = vperm.slane %v2468, 0
        %2473 = vrot.lane.b32.xlu0 %v2469, 73
        %v2474 = vpop.permute.xlu0 %2473
        %2475 = vrot.lane.b32.xlu0 %v2470, 73
        %v2476 = vpop.permute.xlu0 %2475
        %2477 = vrot.lane.b32.xlu0 %v2471, 73
        %v2478 = vpop.permute.xlu0 %2477
        %2479 = vrot.lane.b32.xlu0 %v2472, 73
        %v2480 = vpop.permute.xlu0 %2479
        %2485 = vst.msk [vmem:[%s2458 + $0x1] sm:$0x1] %vm582, %v2474
        %2486 = vst.msk [vmem:[%s2458 + $0x9] sm:$0x1] %vm582, %v2476
        %2487 = vst.msk [vmem:[%s2458 + $0x11] sm:$0x1] %vm582, %v2478
        %2488 = vst.msk [vmem:[%s2458 + $0x19] sm:$0x1] %vm582, %v2480
        %v2489 = vadd.f32 %v2424, %v2434
        %v2490 = vmax.f32 %v2489, 0.0
        %v2492 = vrot.slane %v2490, 1
        %v2493 = vrot.slane %v2490, 2
        %v2494 = vrot.slane %v2490, 3
        %v2495 = vperm.slane %v2490, 0
        %v2496 = vperm.slane %v2492, 0
        %v2497 = vperm.slane %v2493, 0
        %v2498 = vperm.slane %v2494, 0
        %2499 = vrot.lane.b32.xlu0 %v2495, 73
        %v2500 = vpop.permute.xlu0 %2499
        %2501 = vrot.lane.b32.xlu0 %v2496, 73
        %v2502 = vpop.permute.xlu0 %2501
        %2503 = vrot.lane.b32.xlu0 %v2497, 73
        %v2504 = vpop.permute.xlu0 %2503
        %2505 = vrot.lane.b32.xlu0 %v2498, 73
        %v2506 = vpop.permute.xlu0 %2505
        %2511 = vst.msk [vmem:[%s2458 + $0x2] sm:$0x1] %vm582, %v2500
        %2512 = vst.msk [vmem:[%s2458 + $0xa] sm:$0x1] %vm582, %v2502
        %2513 = vst.msk [vmem:[%s2458 + $0x12] sm:$0x1] %vm582, %v2504
        %2514 = vst.msk [vmem:[%s2458 + $0x1a] sm:$0x1] %vm582, %v2506
        %v2515 = vadd.f32 %v2425, %v2434
        %v2516 = vmax.f32 %v2515, 0.0
        %v2518 = vrot.slane %v2516, 1
        %v2519 = vrot.slane %v2516, 2
        %v2520 = vrot.slane %v2516, 3
        %v2521 = vperm.slane %v2516, 0
        %v2522 = vperm.slane %v2518, 0
        %v2523 = vperm.slane %v2519, 0
        %v2524 = vperm.slane %v2520, 0
        %2525 = vrot.lane.b32.xlu0 %v2521, 73
        %v2526 = vpop.permute.xlu0 %2525
        %2527 = vrot.lane.b32.xlu0 %v2522, 73
        %v2528 = vpop.permute.xlu0 %2527
        %2529 = vrot.lane.b32.xlu0 %v2523, 73
        %v2530 = vpop.permute.xlu0 %2529
        %2531 = vrot.lane.b32.xlu0 %v2524, 73
        %v2532 = vpop.permute.xlu0 %2531
        %2537 = vst.msk [vmem:[%s2458 + $0x3] sm:$0x1] %vm582, %v2526
        %2538 = vst.msk [vmem:[%s2458 + $0xb] sm:$0x1] %vm582, %v2528
        %2539 = vst.msk [vmem:[%s2458 + $0x13] sm:$0x1] %vm582, %v2530
        %2540 = vst.msk [vmem:[%s2458 + $0x1b] sm:$0x1] %vm582, %v2532
        %v2541 = vadd.f32 %v2426, %v2434
        %v2542 = vmax.f32 %v2541, 0.0
        %v2544 = vrot.slane %v2542, 1
        %v2545 = vrot.slane %v2542, 2
        %v2546 = vrot.slane %v2542, 3
        %v2547 = vperm.slane %v2542, 0
        %v2548 = vperm.slane %v2544, 0
        %v2549 = vperm.slane %v2545, 0
        %v2550 = vperm.slane %v2546, 0
        %2551 = vrot.lane.b32.xlu0 %v2547, 73
        %v2552 = vpop.permute.xlu0 %2551
        %2553 = vrot.lane.b32.xlu0 %v2548, 73
        %v2554 = vpop.permute.xlu0 %2553
        %2555 = vrot.lane.b32.xlu0 %v2549, 73
        %v2556 = vpop.permute.xlu0 %2555
        %2557 = vrot.lane.b32.xlu0 %v2550, 73
        %v2558 = vpop.permute.xlu0 %2557
        %2563 = vst.msk [vmem:[%s2458 + $0x4] sm:$0x1] %vm582, %v2552
        %2564 = vst.msk [vmem:[%s2458 + $0xc] sm:$0x1] %vm582, %v2554
        %2565 = vst.msk [vmem:[%s2458 + $0x14] sm:$0x1] %vm582, %v2556
        %2566 = vst.msk [vmem:[%s2458 + $0x1c] sm:$0x1] %vm582, %v2558
        %v2567 = vadd.f32 %v2427, %v2434
        %v2568 = vmax.f32 %v2567, 0.0
        %v2570 = vrot.slane %v2568, 1
        %v2571 = vrot.slane %v2568, 2
        %v2572 = vrot.slane %v2568, 3
        %v2573 = vperm.slane %v2568, 0
        %v2574 = vperm.slane %v2570, 0
        %v2575 = vperm.slane %v2571, 0
        %v2576 = vperm.slane %v2572, 0
        %2577 = vrot.lane.b32.xlu0 %v2573, 73
        %v2578 = vpop.permute.xlu0 %2577
        %2579 = vrot.lane.b32.xlu0 %v2574, 73
        %v2580 = vpop.permute.xlu0 %2579
        %2581 = vrot.lane.b32.xlu0 %v2575, 73
        %v2582 = vpop.permute.xlu0 %2581
        %2583 = vrot.lane.b32.xlu0 %v2576, 73
        %v2584 = vpop.permute.xlu0 %2583
        %2589 = vst.msk [vmem:[%s2458 + $0x5] sm:$0x1] %vm582, %v2578
        %2590 = vst.msk [vmem:[%s2458 + $0xd] sm:$0x1] %vm582, %v2580
        %2591 = vst.msk [vmem:[%s2458 + $0x15] sm:$0x1] %vm582, %v2582
        %2592 = vst.msk [vmem:[%s2458 + $0x1d] sm:$0x1] %vm582, %v2584
        %v2593 = vadd.f32 %v2428, %v2434
        %v2594 = vmax.f32 %v2593, 0.0
        %v2596 = vrot.slane %v2594, 1
        %v2597 = vrot.slane %v2594, 2
        %v2598 = vrot.slane %v2594, 3
        %v2599 = vperm.slane %v2594, 0
        %v2600 = vperm.slane %v2596, 0
        %v2601 = vperm.slane %v2597, 0
        %v2602 = vperm.slane %v2598, 0
        %2603 = vrot.lane.b32.xlu0 %v2599, 73
        %v2604 = vpop.permute.xlu0 %2603
        %2605 = vrot.lane.b32.xlu0 %v2600, 73
        %v2606 = vpop.permute.xlu0 %2605
        %2607 = vrot.lane.b32.xlu0 %v2601, 73
        %v2608 = vpop.permute.xlu0 %2607
        %2609 = vrot.lane.b32.xlu0 %v2602, 73
        %v2610 = vpop.permute.xlu0 %2609
        %2615 = vst.msk [vmem:[%s2458 + $0x6] sm:$0x1] %vm582, %v2604
        %2616 = vst.msk [vmem:[%s2458 + $0xe] sm:$0x1] %vm582, %v2606
        %2617 = vst.msk [vmem:[%s2458 + $0x16] sm:$0x1] %vm582, %v2608
        %2618 = vst.msk [vmem:[%s2458 + $0x1e] sm:$0x1] %vm582, %v2610
        %v2619 = vadd.f32 %v2429, %v2434
        %v2620 = vmax.f32 %v2619, 0.0
        %v2622 = vrot.slane %v2620, 1
        %v2623 = vrot.slane %v2620, 2
        %v2624 = vrot.slane %v2620, 3
        %v2625 = vperm.slane %v2620, 0
        %v2626 = vperm.slane %v2622, 0
        %v2627 = vperm.slane %v2623, 0
        %v2628 = vperm.slane %v2624, 0
        %2629 = vrot.lane.b32.xlu0 %v2625, 73
        %v2630 = vpop.permute.xlu0 %2629
        %2631 = vrot.lane.b32.xlu0 %v2626, 73
        %v2632 = vpop.permute.xlu0 %2631
        %2633 = vrot.lane.b32.xlu0 %v2627, 73
        %v2634 = vpop.permute.xlu0 %2633
        %2635 = vrot.lane.b32.xlu0 %v2628, 73
        %v2636 = vpop.permute.xlu0 %2635
        %2641 = vst.msk [vmem:[%s2458 + $0x7] sm:$0x1] %vm582, %v2630
        %2642 = vst.msk [vmem:[%s2458 + $0xf] sm:$0x1] %vm582, %v2632
        %2643 = vst.msk [vmem:[%s2458 + $0x17] sm:$0x1] %vm582, %v2634
        %2644 = vst.msk [vmem:[%s2458 + $0x1f] sm:$0x1] %vm582, %v2636
        %s2645 = sand.u32 %s242, 1
        %s2646 = sand.u32 %s242, 1
        %s2647 = smul.addr %s2646, 64
        %s2648 = scalar_lea.vmem [#allocation6], %s2647
        // Predicated region
        $region175: #{ghost_module_forward.1} parent=153 // pred_check
          %p2649 = pneg %p252
        $region176: #{ghost_module_forward.1} parent=153 // pred_check_branch
          %2651 = sbr.rel (%p2649) target = $region178
        $region177: #{ghost_module_forward.1} parent=153 // pred_region
          %s2652 = smul.addr %s23, 16
          %s2653 = sadd.s32 %s24, %s2652
          %s2654 = smul.addr %s2653, 8
          %s2655 = scalar_lea.vmem %s8, %s2654
          // Predicated region
          $region179: #{ghost_module_forward.1} parent=177 // pred_check
            _
          $region180: #{ghost_module_forward.1} parent=177 // pred_check_branch
            %2657 = sbr.rel (0) target = $region182
          $region181: #{ghost_module_forward.1} parent=177 // pred_region
            // Predicated region
            $region183: #{ghost_module_forward.1} parent=181 // pred_check
              _
            $region184: #{ghost_module_forward.1} parent=181 // pred_check_branch
              %2659 = sbr.rel (0) target = $region186
            $region185: #{ghost_module_forward.1} parent=181 // pred_region
              // Predicated region
              $region198: #{ghost_module_forward.1} parent=185 // pred_check
                _
              $region199: #{ghost_module_forward.1} parent=185 // pred_check_branch
                %2689 = sbr.rel (0) target = $region201
              $region200: #{ghost_module_forward.1} parent=185 // pred_region
                loop: start=0, step=1, limit=1
                $region202: #{ghost_module_forward.1} parent=200 // loop_pre_header
                  _
                $region203: #{ghost_module_forward.1} parent=200 // loop_header
                  %s2691 = sphi 0, %s2695
                  %p2692 = scmp.ge.s32.totalorder %s2691, 1
                  %s2696 = sphi %s2648, %s2648
                  %s2697 = sphi %s2655, %s2655
                $region204: #{ghost_module_forward.1} parent=200 // loop_header_branch
                  %2694 = sbr.rel (%p2692) target = $region208
                $region205: #{ghost_module_forward.1} parent=200 // loop_body
                  %v2698 = vld [vmem:[%s2696] sm:$0xff]
                  %2699 = vst [vmem:[%s2697] sm:$0xff] %v2698
                  %v2700 = vld [vmem:[%s2696 + $0x8] sm:$0xff]
                  %2701 = vst [vmem:[%s2697 + $0x10] sm:$0xff] %v2700
                  %v2702 = vld [vmem:[%s2696 + $0x10] sm:$0xff]
                  %2703 = vst [vmem:[%s2697 + $0x20] sm:$0xff] %v2702
                  %v2704 = vld [vmem:[%s2696 + $0x18] sm:$0xff]
                  %2705 = vst [vmem:[%s2697 + $0x30] sm:$0xff] %v2704
                  %v2706 = vld [vmem:[%s2696 + $0x20] sm:$0xff]
                  %2707 = vst [vmem:[%s2697 + $0x40] sm:$0xff] %v2706
                  %v2708 = vld [vmem:[%s2696 + $0x28] sm:$0xff]
                  %2709 = vst [vmem:[%s2697 + $0x50] sm:$0xff] %v2708
                  %v2710 = vld [vmem:[%s2696 + $0x30] sm:$0xff]
                  %2711 = vst [vmem:[%s2697 + $0x60] sm:$0xff] %v2710
                  %v2712 = vld [vmem:[%s2696 + $0x38] sm:$0xff]
                  %2713 = vst [vmem:[%s2697 + $0x70] sm:$0xff] %v2712
                $region206: #{ghost_module_forward.1} parent=200 // loop_footer
                  %s2695 = sadd.s32 1, %s2691
                $region207: #{ghost_module_forward.1} parent=200 // loop_footer_branch
                  %2690 = sbr.rel target = $region203
                $region208: #{ghost_module_forward.1} parent=200 // loop_exit
                  _
              $region201: #{ghost_module_forward.1} parent=185 // pred_fallthru
                _
              // Predicated region
              $region209: #{ghost_module_forward.1} parent=185 // pred_check
                _
              $region210: #{ghost_module_forward.1} parent=185 // pred_check_branch
                %2715 = sbr.rel target = $region212
              $region211: #{ghost_module_forward.1} parent=185 // pred_region
                _
              $region212: #{ghost_module_forward.1} parent=185 // pred_fallthru
                _
            $region186: #{ghost_module_forward.1} parent=181 // pred_fallthru
              _
            // Predicated region
            $region187: #{ghost_module_forward.1} parent=181 // pred_check
              _
            $region188: #{ghost_module_forward.1} parent=181 // pred_check_branch
              %2661 = sbr.rel target = $region190
            $region189: #{ghost_module_forward.1} parent=181 // pred_region
              %s2663 = ssub.s32 256, 1
              loop: start=0, step=1, limit=1
              $region191: #{ghost_module_forward.1} parent=189 // loop_pre_header
                _
              $region192: #{ghost_module_forward.1} parent=189 // loop_header
                %s2665 = sphi 0, %s2669
                %p2666 = scmp.ge.s32.totalorder %s2665, 1
                %s2670 = sphi %s2648, %s2648
                %s2671 = sphi %s2655, %s2655
              $region193: #{ghost_module_forward.1} parent=189 // loop_header_branch
                %2668 = sbr.rel (%p2666) target = $region197
              $region194: #{ghost_module_forward.1} parent=189 // loop_body
                %v2672 = vld [vmem:[%s2670] sm:%s2663]
                %2673 = vst [vmem:[%s2671] sm:%s2663] %v2672
                %v2674 = vld [vmem:[%s2670 + $0x8] sm:%s2663]
                %2675 = vst [vmem:[%s2671 + $0x10] sm:%s2663] %v2674
                %v2676 = vld [vmem:[%s2670 + $0x10] sm:%s2663]
                %2677 = vst [vmem:[%s2671 + $0x20] sm:%s2663] %v2676
                %v2678 = vld [vmem:[%s2670 + $0x18] sm:%s2663]
                %2679 = vst [vmem:[%s2671 + $0x30] sm:%s2663] %v2678
                %v2680 = vld [vmem:[%s2670 + $0x20] sm:%s2663]
                %2681 = vst [vmem:[%s2671 + $0x40] sm:%s2663] %v2680
                %v2682 = vld [vmem:[%s2670 + $0x28] sm:%s2663]
                %2683 = vst [vmem:[%s2671 + $0x50] sm:%s2663] %v2682
                %v2684 = vld [vmem:[%s2670 + $0x30] sm:%s2663]
                %2685 = vst [vmem:[%s2671 + $0x60] sm:%s2663] %v2684
                %v2686 = vld [vmem:[%s2670 + $0x38] sm:%s2663]
                %2687 = vst [vmem:[%s2671 + $0x70] sm:%s2663] %v2686
              $region195: #{ghost_module_forward.1} parent=189 // loop_footer
                %s2669 = sadd.s32 1, %s2665
              $region196: #{ghost_module_forward.1} parent=189 // loop_footer_branch
                %2664 = sbr.rel target = $region192
              $region197: #{ghost_module_forward.1} parent=189 // loop_exit
                _
            $region190: #{ghost_module_forward.1} parent=181 // pred_fallthru
              _
          $region182: #{ghost_module_forward.1} parent=177 // pred_fallthru
            _
          %2716 = vnop
        $region178: #{ghost_module_forward.1} parent=153 // pred_fallthru
          _
      $region154: #{ghost_module_forward.1} parent=5 // pred_fallthru
        _
      %p2717 = scmp.le.s32.totalorder 2, %s14
      // Predicated region
      $region213: #{ghost_module_forward.1} parent=5 // pred_check
        %p2718 = pneg %p2717
      $region214: #{ghost_module_forward.1} parent=5 // pred_check_branch
        %2720 = sbr.rel (%p2718) target = $region216
      $region215: #{ghost_module_forward.1} parent=5 // pred_region
        %s2721 = ssub.s32 %s14, 2
        // Predicated region
        $region217: #{ghost_module_forward.1} parent=215 // pred_check
          %p2722 = pneg %p258
        $region218: #{ghost_module_forward.1} parent=215 // pred_check_branch
          %2724 = sbr.rel (%p2722) target = $region220
        $region219: #{ghost_module_forward.1} parent=215 // pred_region
          %s2725 = sand.u32 %s243, 1
          %s2726 = sand.u32 %s243, 1
          %s2727 = smul.addr %s2726, 64
          %s2728 = scalar_lea.vmem [#allocation6], %s2727
        $region220: #{ghost_module_forward.1} parent=215 // pred_fallthru
          _
      $region216: #{ghost_module_forward.1} parent=5 // pred_fallthru
        _
    $region6: #{ghost_module_forward.1} parent=1 // loop_footer
      %s18 = sadd.s32 1, %s14
    $region7: #{ghost_module_forward.1} parent=1 // loop_footer_branch
      %13 = sbr.rel target = $region3
    $region8: #{ghost_module_forward.1} parent=1 // loop_exit
      _

</llo_original>
